<compile_context>
chip_gen: v5e
topology: v5e:2x2
jax: 0.10.0
libtpu: 0.0.40
codegen_flags: <defaults>
</compile_context>

<pallas_src>
import jax
import jax.numpy as jnp
from jax.experimental import pallas as pl
from jax.experimental.pallas import tpu as pltpu


H1 = 128          # padded layer-1 width: 64 real channels + indicator column + zeros
MASK_COL = 64     # column of the layer-1 output carrying the penalty indicator
NEG_BIG = 1.0e7   # masking constant, matches maskMax in the PyTorch reference


def _round_up(x, m):
    return (x + m - 1) // m * m


# ----------------------------------------------------------------------------
# Pallas kernel: tiled fused MLP (3 x 1x1-conv as matmuls) + running masked max.
# ----------------------------------------------------------------------------
def _make_kernel(fold_penalty):
    def kernel(x_ref, w1_ref, b1_ref, w2_ref, b2_ref, w3_ref, b3_ref, o_ref):
        j = pl.program_id(1)

        @pl.when(j == 0)
        def _init():
            o_ref[0] = jnp.full(o_ref.shape[1:], -jnp.inf, dtype=jnp.float32)

        x = x_ref[0]                                        # (TN, Cpad) bf16, channels-last

        # Layer 1: relu(bn1(conv1(x))) — bf16 operands, f32 accumulation.
        # Column MASK_COL = relu(len(mc) - sum(mask channels)) = penalty indicator.
        h = jnp.dot(x, w1_ref[...], preferred_element_type=jnp.float32)
        h = jnp.maximum(h + b1_ref[...], 0.0)               # (TN, 128) f32

        if not fold_penalty:
            # v5e path: keep the penalty as a (TN, 1) column, broadcast-added
            # after layer 3 (folding it would double layer-3 K on a 128-deep MXU).
            penalty = h[:, MASK_COL:MASK_COL + 1] * (-NEG_BIG)

        # Layer 2: relu(bn2(conv2(.))).  In fold mode the output is 256 wide and
        # column 128 carries the indicator through the ReLU (it is >= 0).
        h = jnp.dot(h.astype(jnp.bfloat16), w2_ref[...],
                    preferred_element_type=jnp.float32)
        h = jnp.maximum(h + b2_ref[...], 0.0)               # (TN, 128 | 256) f32

        # Layer 3: conv3 matmul only — b3 is hoisted to the accumulator, and in
        # fold mode the -1e7 penalty row of w3 applies maskMax inside the MXU.
        h = jnp.dot(h.astype(jnp.bfloat16), w3_ref[...],
                    preferred_element_type=jnp.float32)     # (TN, D) f32

        if not fold_penalty:
            h = h + penalty

        tile_max = jnp.max(h, axis=0, keepdims=True)        # (1, D)
        o_ref[0] = jnp.maximum(o_ref[0], tile_max)

        @pl.when(j == pl.num_programs(1) - 1)
        def _finalize():
            # max over rows is invariant to the per-column constant b3.
            o_ref[0] = o_ref[0] + b3_ref[...]

    return kernel


# ----------------------------------------------------------------------------
# Glue: BN folding + augmented weights + pallas_call wrapper.
# ----------------------------------------------------------------------------
def fold_bn(w, b, gamma, beta, mean, var, eps=1e-5):
    """Fold inference-mode BatchNorm1d into a (Cin, Cout) weight + (1, Cout) bias."""
    s = gamma / jnp.sqrt(var + eps)
    return w * s[None, :], ((b - mean) * s + beta).reshape(1, -1)


def _default_fold_penalty():
    """Fold the maskMax penalty into the layer-3 matmul on 256-deep-MXU chips."""
    try:
        dk = jax.devices()[0].device_kind.lower()
    except Exception:
        return True
    return not any(t in dk for t in ("v2", "v3", "v4", "v5"))


def pointnetfeat_forward(x, params, mask_channel=(3,), tn=2048, fold_penalty=None):
    """x: (B, C, N) channels-first, like the PyTorch module.  Returns (feat, None, None)."""
    B, C, N = x.shape
    mc = list(mask_channel)
    keep = [c for c in range(C) if c not in mc]
    if fold_penalty is None:
        fold_penalty = _default_fold_penalty()

    # Fold inference BatchNorm into the 1x1 conv weights/biases.
    w1, b1 = fold_bn(params["w1"], params["b1"], *params["bn1"])     # (cin, 64)
    w2, b2 = fold_bn(params["w2"], params["b2"], *params["bn2"])     # (64, 128)
    w3, b3 = fold_bn(params["w3"], params["b3"], *params["bn3"])     # (128, D)
    d = w3.shape[-1]
    c1 = w1.shape[-1]        # 64
    c2 = w2.shape[-1]        # 128
    assert c1 <= MASK_COL < H1

    # Layer-1 augmented weight consuming channels-last (TN, Cpad) input directly:
    #   cols [0, 64)  : BN-folded conv1 weights on the unmasked channels
    #   col  MASK_COL : affine route  relu(len(mc) - sum(mask channels))
    #                   == (1 - mask) penalty indicator for binary mask values.
    cpad = _round_up(C, 8)
    w1_aug = jnp.zeros((cpad, H1), jnp.float32)
    w1_aug = w1_aug.at[jnp.asarray(keep), :c1].set(w1)
    w1_aug = w1_aug.at[jnp.asarray(mc), MASK_COL].set(-1.0)
    b1_aug = jnp.zeros((1, H1), jnp.float32)
    b1_aug = b1_aug.at[:, :c1].set(b1).at[:, MASK_COL].set(float(len(mc)))

    # Layer 2 / 3.  Fold mode widens layer-2's output to 256 so the indicator can
    # ride to layer 3, whose extra -1e7 row applies maskMax inside the matmul.
    n2 = 256 if fold_penalty else H1
    w2_ext = jnp.zeros((H1, n2), jnp.float32).at[:c1, :c2].set(w2)
    b2_ext = jnp.zeros((1, n2), jnp.float32).at[:, :c2].set(b2)
    w3_ext = jnp.zeros((n2, d), jnp.float32).at[:c2, :].set(w3)
    if fold_penalty:
        w2_ext = w2_ext.at[MASK_COL, c2].set(1.0)
        w3_ext = w3_ext.at[c2, :].set(-NEG_BIG)

    w1_bf = w1_aug.astype(jnp.bfloat16)
    w2_bf = w2_ext.astype(jnp.bfloat16)
    w3_bf = w3_ext.astype(jnp.bfloat16)

    # Channels-last, channel-padded, bf16 input: layer 1 becomes a plain
    # (TN, 8) @ (8, 128) bf16 matmul (no in-kernel transpose / dim-0 contraction).
    x_cl = jnp.transpose(x, (0, 2, 1)).astype(jnp.bfloat16)
    if cpad != C:
        x_cl = jnp.pad(x_cl, ((0, 0), (0, 0), (0, cpad - C)))

    # Tile the point axis.  Padded points have zero mask channels -> indicator 1
    # -> -1e7 penalty, so the running max is unaffected.
    tn = max(256, min(_round_up(tn, 256), _round_up(N, 256)))
    n_pad = _round_up(N, tn)
    if n_pad != N:
        x_cl = jnp.pad(x_cl, ((0, 0), (0, n_pad - N), (0, 0)))
    num_tiles = n_pad // tn

    kernel = _make_kernel(fold_penalty)

    # Rough VMEM budget; cap the request at 48 MiB so it also fits v7x (64 MiB).
    est_vmem = (
        2 * tn * cpad * 2                          # x tile (bf16), double-buffered
        + tn * H1 * 4                              # layer-1 f32 activations
        + tn * n2 * (4 + 2)                        # layer-2 f32 + bf16 copy
        + tn * d * 4                               # layer-3 f32 result
        + 2 * (w1_bf.size * 2 + w2_bf.size * 2 + w3_bf.size * 2
               + (b1_aug.size + b2_ext.size + b3.size) * 4)
        + 2 * d * 4                                # resident output block
    )
    vmem_limit = int(min(48 * 2**20, max(32 * 2**20, 2 * est_vmem)))

    cost = pl.CostEstimate(
        flops=2 * B * n_pad * (cpad * H1 + H1 * n2 + n2 * d),
        transcendentals=0,
        bytes_accessed=int(x_cl.size * 2
                           + w1_bf.size * 2 + w2_bf.size * 2 + w3_bf.size * 2
                           + (b1_aug.size + b2_ext.size + b3.size) * 4
                           + B * d * 4),
    )

    out = pl.pallas_call(
        kernel,
        out_shape=jax.ShapeDtypeStruct((B, 1, d), jnp.float32),
        grid_spec=pltpu.PrefetchScalarGridSpec(
            num_scalar_prefetch=0,
            grid=(B, num_tiles),
            in_specs=[
                # x tile: (1, TN, Cpad) channels-last.
                pl.BlockSpec((1, tn, cpad), lambda b, j: (b, j, 0)),
                # Weights/biases: constant index maps -> VMEM-resident, no re-DMA.
                pl.BlockSpec(w1_bf.shape, lambda b, j: (0, 0)),
                pl.BlockSpec(b1_aug.shape, lambda b, j: (0, 0)),
                pl.BlockSpec(w2_bf.shape, lambda b, j: (0, 0)),
                pl.BlockSpec(b2_ext.shape, lambda b, j: (0, 0)),
                pl.BlockSpec(w3_bf.shape, lambda b, j: (0, 0)),
                pl.BlockSpec(b3.shape, lambda b, j: (0, 0)),
            ],
            # Same output block across the N axis -> running max stays resident.
            out_specs=pl.BlockSpec((1, 1, d), lambda b, j: (b, 0, 0)),
        ),
        compiler_params=pltpu.CompilerParams(
            dimension_semantics=("parallel", "arbitrary"),
            vmem_limit_bytes=vmem_limit,
        ),
        cost_estimate=cost,
    )(x_cl, w1_bf, b1_aug, w2_bf, b2_ext, w3_bf, b3)

    feat = out.reshape(B, d)   # note: torch's x.squeeze() would give (1024,) for B==1
    return feat, None, None    # (x, trans, trans_feat)


def reference_forward(x, params, mask_channel=(3,)):
    """Pure-JAX reference of the same math (same bf16 casts), for correctness checks."""
    B, C, N = x.shape
    mc = list(mask_channel)
    keep = [c for c in range(C) if c not in mc]
    mask = (jnp.sum(x[:, mc, :], axis=1) >= len(mc)).astype(jnp.float32)   # (B, N)
    xp = jnp.transpose(x[:, keep, :], (0, 2, 1)).astype(jnp.bfloat16)      # (B, N, cin)

    w1, b1 = fold_bn(params["w1"], params["b1"], *params["bn1"])
    w2, b2 = fold_bn(params["w2"], params["b2"], *params["bn2"])
    w3, b3 = fold_bn(params["w3"], params["b3"], *params["bn3"])

    h = jnp.maximum(jnp.einsum("bnc,cd->bnd", xp, w1.astype(jnp.bfloat16),
                               preferred_element_type=jnp.float32) + b1, 0.0)
    h = jnp.maximum(jnp.einsum("bnc,cd->bnd", h.astype(jnp.bfloat16),
                               w2.astype(jnp.bfloat16),
                               preferred_element_type=jnp.float32) + b2, 0.0)
    h = jnp.einsum("bnc,cd->bnd", h.astype(jnp.bfloat16), w3.astype(jnp.bfloat16),
                   preferred_element_type=jnp.float32) + b3
    h = h - (1.0 - mask)[:, :, None] * NEG_BIG
    return jnp.max(h, axis=1)


# ----------------------------------------------------------------------------
# Deterministic parameter construction (shapes from PointNetfeat.__init__).
# ----------------------------------------------------------------------------
def make_params(key, cin=3, bottleneck=1024):
    ks = jax.random.split(key, 16)

    def conv_params(kw, kb, c_in, c_out):
        w = jax.random.normal(kw, (c_in, c_out), jnp.float32) * (1.0 / jnp.sqrt(c_in))
        b = jax.random.normal(kb, (c_out,), jnp.float32) * 0.05
        return w, b

    def bn_params(k, c):
        k1, k2, k3, k4 = jax.random.split(k, 4)
        gamma = jax.random.uniform(k1, (c,), jnp.float32, 0.5, 1.5)
        beta = jax.random.normal(k2, (c,), jnp.float32) * 0.1
        mean = jax.random.normal(k3, (c,), jnp.float32) * 0.1
        var = jax.random.uniform(k4, (c,), jnp.float32, 0.5, 1.5)
        return gamma, beta, mean, var

    w1, b1 = conv_params(ks[0], ks[1], cin, 64)            # Conv1d(input_dim, 64, 1)
    w2, b2 = conv_params(ks[2], ks[3], 64, 128)            # Conv1d(64, 128, 1)
    w3, b3 = conv_params(ks[4], ks[5], 128, bottleneck)    # Conv1d(128, bottleneck, 1)
    return {
        "w1": w1, "b1": b1, "bn1": bn_params(ks[6], 64),
        "w2": w2, "b2": b2, "bn2": bn_params(ks[7], 128),
        "w3": w3, "b3": b3, "bn3": bn_params(ks[8], bottleneck),
    }


if __name__ == "__main__":
    key = jax.random.PRNGKey(0)
    k_x, k_m, k_p = jax.random.split(key, 3)

    B, C, N = 2, 4, 16   # (batch, channels [3 coords + 1 mask channel], points)
    coords = jax.random.normal(k_x, (B, 3, N), jnp.float32)
    mask_ch = (jax.random.uniform(k_m, (B, 1, N), jnp.float32) > 0.5).astype(jnp.float32)
    mask_ch = mask_ch.at[:, :, 0].set(1.0)   # guarantee >=1 valid point per batch
    x = jnp.concatenate([coords, mask_ch], axis=1)   # (B, 4, N), channel 3 is the mask

    params = make_params(k_p, cin=3, bottleneck=1024)

    feat, trans, trans_feat = pointnetfeat_forward(x, params, mask_channel=(3,))
    feat = jax.block_until_ready(feat)

    ref = reference_forward(x, params, mask_channel=(3,))
    assert feat.shape == (B, 1024), feat.shape
    assert trans is None and trans_feat is None
    assert jnp.allclose(feat, ref, rtol=1e-2, atol=1e-2), "mismatch vs. JAX reference"

    print("KERNEL_OK")
</pallas_src>

<mosaic_0001>
module attributes {stable_mosaic.version = 11 : i64} {
  func.func @kernel(%arg0: i32, %arg1: i32, %arg2: memref<1x256x8xbf16, #tpu.memory_space<vmem>>, %arg3: memref<8x128xbf16, #tpu.memory_space<vmem>>, %arg4: memref<1x128xf32, #tpu.memory_space<vmem>>, %arg5: memref<128x256xbf16, #tpu.memory_space<vmem>>, %arg6: memref<1x256xf32, #tpu.memory_space<vmem>>, %arg7: memref<256x1024xbf16, #tpu.memory_space<vmem>>, %arg8: memref<1x1024xf32, #tpu.memory_space<vmem>>, %arg9: memref<1x1x1024xf32, #tpu.memory_space<vmem>>) attributes {dimension_semantics = [#tpu.dimension_semantics<parallel>, #tpu.dimension_semantics<arbitrary>], iteration_bounds = array<i64: 2, 1>, scalar_prefetch = 0 : i64, scratch_operands = 0 : i64, tpu.core_type = #tpu.core_type<tc>, window_params = [{transform_indices = @transform_0, window_bounds = array<i64: 1, 256, 8>}, {pipeline_mode = #tpu.pipeline_mode<synchronous>, transform_indices = @transform_1, window_bounds = array<i64: 8, 128>}, {pipeline_mode = #tpu.pipeline_mode<synchronous>, transform_indices = @transform_2, window_bounds = array<i64: 1, 128>}, {pipeline_mode = #tpu.pipeline_mode<synchronous>, transform_indices = @transform_3, window_bounds = array<i64: 128, 256>}, {pipeline_mode = #tpu.pipeline_mode<synchronous>, transform_indices = @transform_4, window_bounds = array<i64: 1, 256>}, {pipeline_mode = #tpu.pipeline_mode<synchronous>, transform_indices = @transform_5, window_bounds = array<i64: 256, 1024>}, {pipeline_mode = #tpu.pipeline_mode<synchronous>, transform_indices = @transform_6, window_bounds = array<i64: 1, 1024>}, {transform_indices = @transform_7, window_bounds = array<i64: 1, 1, 1024>}]} {
    %c0_i32 = arith.constant 0 : i32
    %0 = arith.cmpi eq, %arg1, %c0_i32 : i32
    %1 = arith.extui %0 : i1 to i32
    %c0_i32_0 = arith.constant 0 : i32
    %2 = arith.cmpi ne, %1, %c0_i32_0 : i32
    scf.if %2 {
      %cst_26 = arith.constant 0xFF800000 : f32
      %34 = vector.broadcast %cst_26 : f32 to vector<1x1024xf32>
      %c0_27 = arith.constant 0 : index
      %c0_28 = arith.constant 0 : index
      %c0_29 = arith.constant 0 : index
      %35 = vector.load %arg9[%c0_27, %c0_28, %c0_29] : memref<1x1x1024xf32, #tpu.memory_space<vmem>>, vector<1x1x1024xf32>
      %36 = vector.shape_cast %35 : vector<1x1x1024xf32> to vector<1x1024xf32>
      %37 = vector.shape_cast %34 : vector<1x1024xf32> to vector<1x1x1024xf32>
      tpu.vector_store %arg9[%c0_27, %c0_28, %c0_29], %37 {strides = array<i32>} : memref<1x1x1024xf32, #tpu.memory_space<vmem>>, vector<1x1x1024xf32>,
    } else {
    }
    %c0 = arith.constant 0 : index
    %c0_1 = arith.constant 0 : index
    %c0_2 = arith.constant 0 : index
    %3 = vector.load %arg2[%c0, %c0_1, %c0_2] : memref<1x256x8xbf16, #tpu.memory_space<vmem>>, vector<1x256x8xbf16>
    %4 = vector.shape_cast %3 : vector<1x256x8xbf16> to vector<256x8xbf16>
    %c0_3 = arith.constant 0 : index
    %c0_4 = arith.constant 0 : index
    %5 = vector.load %arg3[%c0_3, %c0_4] : memref<8x128xbf16, #tpu.memory_space<vmem>>, vector<8x128xbf16>
    %cst = arith.constant dense<0.000000e+00> : vector<256x128xf32>
    %6 = tpu.matmul %4, %5, %cst {dimension_numbers = #tpu.dot_dimension_numbers<[1], [0], [0], [1], [0, 0, 1, 1], [], []>} : vector<256x8xbf16>, vector<8x128xbf16>, vector<256x128xf32> -> vector<256x128xf32>
    %c0_5 = arith.constant 0 : index
    %c0_6 = arith.constant 0 : index
    %7 = vector.load %arg4[%c0_5, %c0_6] : memref<1x128xf32, #tpu.memory_space<vmem>>, vector<1x128xf32>
    %8 = vector.broadcast %7 : vector<1x128xf32> to vector<256x128xf32>
    %9 = arith.addf %6, %8 : vector<256x128xf32>
    %cst_7 = arith.constant 0.000000e+00 : f32
    %10 = vector.broadcast %cst_7 : f32 to vector<256x128xf32>
    %11 = arith.maximumf %9, %10 : vector<256x128xf32>
    %12 = arith.truncf %11 : vector<256x128xf32> to vector<256x128xbf16>
    %c0_8 = arith.constant 0 : index
    %c0_9 = arith.constant 0 : index
    %13 = vector.load %arg5[%c0_8, %c0_9] : memref<128x256xbf16, #tpu.memory_space<vmem>>, vector<128x256xbf16>
    %cst_10 = arith.constant dense<0.000000e+00> : vector<256x256xf32>
    %14 = tpu.matmul %12, %13, %cst_10 {dimension_numbers = #tpu.dot_dimension_numbers<[1], [0], [0], [1], [0, 0, 1, 1], [], []>} : vector<256x128xbf16>, vector<128x256xbf16>, vector<256x256xf32> -> vector<256x256xf32>
    %c0_11 = arith.constant 0 : index
    %c0_12 = arith.constant 0 : index
    %15 = vector.load %arg6[%c0_11, %c0_12] : memref<1x256xf32, #tpu.memory_space<vmem>>, vector<1x256xf32>
    %16 = vector.broadcast %15 : vector<1x256xf32> to vector<256x256xf32>
    %17 = arith.addf %14, %16 : vector<256x256xf32>
    %cst_13 = arith.constant 0.000000e+00 : f32
    %18 = vector.broadcast %cst_13 : f32 to vector<256x256xf32>
    %19 = arith.maximumf %17, %18 : vector<256x256xf32>
    %20 = arith.truncf %19 : vector<256x256xf32> to vector<256x256xbf16>
    %c0_14 = arith.constant 0 : index
    %c0_15 = arith.constant 0 : index
    %21 = vector.load %arg7[%c0_14, %c0_15] : memref<256x1024xbf16, #tpu.memory_space<vmem>>, vector<256x1024xbf16>
    %cst_16 = arith.constant dense<0.000000e+00> : vector<256x1024xf32>
    %22 = tpu.matmul %20, %21, %cst_16 {dimension_numbers = #tpu.dot_dimension_numbers<[1], [0], [0], [1], [0, 0, 1, 1], [], []>} : vector<256x256xbf16>, vector<256x1024xbf16>, vector<256x1024xf32> -> vector<256x1024xf32>
    %cst_17 = arith.constant dense<0xFF800000> : vector<1024xf32>
    %23 = vector.multi_reduction <maximumf>, %22, %cst_17 [0] : vector<256x1024xf32> to vector<1024xf32>
    %24 = vector.shape_cast %23 : vector<1024xf32> to vector<1x1024xf32>
    %c0_18 = arith.constant 0 : index
    %c0_19 = arith.constant 0 : index
    %c0_20 = arith.constant 0 : index
    %25 = vector.load %arg9[%c0_18, %c0_19, %c0_20] : memref<1x1x1024xf32, #tpu.memory_space<vmem>>, vector<1x1x1024xf32>
    %26 = vector.shape_cast %25 : vector<1x1x1024xf32> to vector<1x1024xf32>
    %27 = arith.maximumf %26, %24 : vector<1x1024xf32>
    %c0_21 = arith.constant 0 : index
    %c0_22 = arith.constant 0 : index
    %c0_23 = arith.constant 0 : index
    %28 = vector.load %arg9[%c0_21, %c0_22, %c0_23] : memref<1x1x1024xf32, #tpu.memory_space<vmem>>, vector<1x1x1024xf32>
    %29 = vector.shape_cast %28 : vector<1x1x1024xf32> to vector<1x1024xf32>
    %30 = vector.shape_cast %27 : vector<1x1024xf32> to vector<1x1x1024xf32>
    tpu.vector_store %arg9[%c0_21, %c0_22, %c0_23], %30 {strides = array<i32>} : memref<1x1x1024xf32, #tpu.memory_space<vmem>>, vector<1x1x1024xf32>,
    %c0_i32_24 = arith.constant 0 : i32
    %31 = arith.cmpi eq, %arg1, %c0_i32_24 : i32
    %32 = arith.extui %31 : i1 to i32
    %c0_i32_25 = arith.constant 0 : i32
    %33 = arith.cmpi ne, %32, %c0_i32_25 : i32
    scf.if %33 {
      %c0_26 = arith.constant 0 : index
      %c0_27 = arith.constant 0 : index
      %c0_28 = arith.constant 0 : index
      %34 = vector.load %arg9[%c0_26, %c0_27, %c0_28] : memref<1x1x1024xf32, #tpu.memory_space<vmem>>, vector<1x1x1024xf32>
      %35 = vector.shape_cast %34 : vector<1x1x1024xf32> to vector<1x1024xf32>
      %c0_29 = arith.constant 0 : index
      %c0_30 = arith.constant 0 : index
      %36 = vector.load %arg8[%c0_29, %c0_30] : memref<1x1024xf32, #tpu.memory_space<vmem>>, vector<1x1024xf32>
      %37 = arith.addf %35, %36 : vector<1x1024xf32>
      %c0_31 = arith.constant 0 : index
      %c0_32 = arith.constant 0 : index
      %c0_33 = arith.constant 0 : index
      %38 = vector.load %arg9[%c0_31, %c0_32, %c0_33] : memref<1x1x1024xf32, #tpu.memory_space<vmem>>, vector<1x1x1024xf32>
      %39 = vector.shape_cast %38 : vector<1x1x1024xf32> to vector<1x1024xf32>
      %40 = vector.shape_cast %37 : vector<1x1024xf32> to vector<1x1x1024xf32>
      tpu.vector_store %arg9[%c0_31, %c0_32, %c0_33], %40 {strides = array<i32>} : memref<1x1x1024xf32, #tpu.memory_space<vmem>>, vector<1x1x1024xf32>,
    } else {
    }
    return
  }
  func.func @transform_0(%arg0: i32, %arg1: i32) -> (i32, i32, i32) {
    %c0_i32 = arith.constant 0 : i32
    %c0_i32_0 = arith.constant 0 : i32
    return %arg0, %arg1, %c0_i32 : i32, i32, i32
  }
  func.func @transform_1(%arg0: i32, %arg1: i32) -> (i32, i32) {
    %c0_i32 = arith.constant 0 : i32
    %c0_i32_0 = arith.constant 0 : i32
    %c0_i32_1 = arith.constant 0 : i32
    return %c0_i32, %c0_i32_0 : i32, i32
  }
  func.func @transform_2(%arg0: i32, %arg1: i32) -> (i32, i32) {
    %c0_i32 = arith.constant 0 : i32
    %c0_i32_0 = arith.constant 0 : i32
    %c0_i32_1 = arith.constant 0 : i32
    return %c0_i32, %c0_i32_0 : i32, i32
  }
  func.func @transform_3(%arg0: i32, %arg1: i32) -> (i32, i32) {
    %c0_i32 = arith.constant 0 : i32
    %c0_i32_0 = arith.constant 0 : i32
    %c0_i32_1 = arith.constant 0 : i32
    return %c0_i32, %c0_i32_0 : i32, i32
  }
  func.func @transform_4(%arg0: i32, %arg1: i32) -> (i32, i32) {
    %c0_i32 = arith.constant 0 : i32
    %c0_i32_0 = arith.constant 0 : i32
    %c0_i32_1 = arith.constant 0 : i32
    return %c0_i32, %c0_i32_0 : i32, i32
  }
  func.func @transform_5(%arg0: i32, %arg1: i32) -> (i32, i32) {
    %c0_i32 = arith.constant 0 : i32
    %c0_i32_0 = arith.constant 0 : i32
    %c0_i32_1 = arith.constant 0 : i32
    return %c0_i32, %c0_i32_0 : i32, i32
  }
  func.func @transform_6(%arg0: i32, %arg1: i32) -> (i32, i32) {
    %c0_i32 = arith.constant 0 : i32
    %c0_i32_0 = arith.constant 0 : i32
    %c0_i32_1 = arith.constant 0 : i32
    return %c0_i32, %c0_i32_0 : i32, i32
  }
  func.func @transform_7(%arg0: i32, %arg1: i32) -> (i32, i32, i32) {
    %c0_i32 = arith.constant 0 : i32
    %c0_i32_0 = arith.constant 0 : i32
    %c0_i32_1 = arith.constant 0 : i32
    return %arg0, %c0_i32, %c0_i32_0 : i32, i32, i32
  }
}

</mosaic_0001>

<llo_original>
// kernel: tpu_custom_call.1
$region0: #{tpu_custom_call.1}
  #allocation0 [shape = 'u32[]', space=smem, size = 0x4, offset = 0x4, fixed_abs, tag = 'smem constant byte address 0x4 - core index']
  #allocation1 [shape = 'u32[72,128]{1,0:T(1,128)}', space=vmem, size = 0x9000, scoped, tag = 'internal scratch']
  %s0 = inlined_call_operand.vmem [shape: bf16[2,256,8], index: 0, kind: input, shape index: {}]
  %s1 = inlined_call_operand.vmem [shape: bf16[8,128], index: 1, kind: input, shape index: {}]
  %s2 = inlined_call_operand.vmem [shape: f32[1,128], index: 2, kind: input, shape index: {}]
  %s3 = inlined_call_operand.vmem [shape: bf16[128,256], index: 3, kind: input, shape index: {}]
  %s4 = inlined_call_operand.vmem [shape: f32[1,256], index: 4, kind: input, shape index: {}]
  %s5 = inlined_call_operand.hbm [shape: bf16[256,1024], index: 5, kind: input, shape index: {}]
  %s6 = inlined_call_operand.vmem [shape: f32[1,1024], index: 6, kind: input, shape index: {}]
  %s7 = inlined_call_operand.hbm [shape: f32[2,1,1024], index: 7, kind: output, shape index: {}]
  %s8 = sld [smem:[#allocation0]]
  $region73: #{tpu_custom_call.1} parent=0
    _
  %s10 = ssub.s32 1, %s8
  %s11 = scalar_select 0, %s10, %s8
  $region1: #{tpu_custom_call.1} parent=0
    #allocation2 [shape = 'u8[524288]{0}', space=vmem, size = 0x80000, scoped, tag = 'input window, operand 5, single buffered']
    #allocation3 [shape = 's32[2]{0}', space=sflag, size = 0x8, scoped, tag = 'scoped memory for tpu_custom_call.1']
    #allocation4 [shape = 's32[2]{0}', space=sflag, size = 0x8, scoped, tag = 'scoped memory for tpu_custom_call.1']
    #allocation5 [shape = 'u8[8192]{0}', space=vmem, size = 0x2000, scoped, tag = 'output window, operand 0']
    %12 = vsyncpa [#allocation3], 0
    %13 = vsyncpa [#allocation4], 0
    %s14 = scalar_lea.sflag [#allocation4], 1
    %15 = vsyncpa %s14, 0
    loop: start=0, step=1, limit=4
    $region2: #{tpu_custom_call.1} parent=1 // loop_pre_header
      _
    $region3: #{tpu_custom_call.1} parent=1 // loop_header
      %s17 = sphi 0, %s21
      %p18 = scmp.ge.s32.totalorder %s17, 4
      %s24 = sphi 0, %s36
      %s25 = sphi 0, %s32
      %s26 = sphi 0, %s24
      %s27 = sphi 0, %s25
      %s28 = sphi 0, %s26
      %s29 = sphi 0, %s27
      %s41 = sphi 0, %s43
      %s44 = sphi 0, %s41
      %s45 = sphi 0, %s44
      %s61 = sphi 0, %s45
      %s65 = sphi 0, %s65
      %s67 = sphi 0, %s65
      %s68 = sphi 0, %s67
      %s82 = sphi 0, %s68
      %s86 = sphi 0, %s86
      %s88 = sphi 0, %s86
      %s89 = sphi 0, %s88
      %s103 = sphi 0, %s89
      %s107 = sphi 0, %s107
      %s109 = sphi 0, %s107
      %s110 = sphi 0, %s109
      %s124 = sphi 0, %s110
      %s128 = sphi 0, %s128
      %s130 = sphi 0, %s128
      %s131 = sphi 0, %s130
      %s145 = sphi 0, %s131
      %s149 = sphi 0, %s149
      %s151 = sphi 0, %s149
      %s152 = sphi 0, %s151
      %s166 = sphi 0, %s152
      %s170 = sphi 0, %s170
      %s172 = sphi 0, %s170
      %s173 = sphi 0, %s172
      %s187 = sphi 0, %s173
      %s193 = sphi 0, %s195
      %s196 = sphi 0, %s193
      %s197 = sphi 0, %s196
      %s213 = sphi 0, %s197
    $region4: #{tpu_custom_call.1} parent=1 // loop_header_branch
      %20 = sbr.rel (%p18) target = $region8
    $region5: #{tpu_custom_call.1} parent=1 // loop_body
      %s22 = ssub.s32 %s17, 1
      %s23 = ssub.s32 %s17, 2
      %s30 = sadd.s32 1, %s25
      %p31 = scmp.ge.s32.totalorder %s30, 1
      %s32 = scalar_select %p31, 0, %s30
      %s33 = sadd.s32 1, %s24
      %s34 = scalar_select %p31, %s33, %s24
      %p35 = scmp.ge.s32.totalorder %s34, 2
      %s36 = scalar_select %p35, 0, %s34
      %s37 = ssub.s32 %s24, %s36
      %s38 = ssub.s32 %s25, %s32
      %s39 = sor.u32 %s37, %s38
      %p40 = scmp.eq.s32.totalorder %s39, 0
      %s42 = sadd.s32 %s41, 1
      %s43 = scalar_select %p40, %s41, %s42
      %p46 = pneg %p40
      %p47 = scmp.eq.s32.totalorder %s17, 1
      %p48 = por %p46, %p47
      %p49 = scmp.ne.s32.totalorder %s41, %s44
      %p50 = scmp.eq.s32.totalorder %s17, 0
      %p51 = por %p49, %p50
      %p52 = scmp.ne.s32.totalorder %s41, %s44
      %p53 = scmp.eq.s32.totalorder %s22, 1
      %p54 = por %p52, %p53
      %p55 = scmp.ne.s32.totalorder %s44, %s45
      %p56 = scmp.eq.s32.totalorder %s22, 0
      %p57 = por %p55, %p56
      %p58 = scmp.ne.s32.totalorder %s44, %s45
      %p59 = scmp.eq.s32.totalorder %s23, 1
      %p60 = por %p58, %p59
      %p62 = scmp.ne.s32.totalorder %s45, %s61
      %p63 = scmp.eq.s32.totalorder %s23, 0
      %p64 = por %p62, %p63
      %s66 = sadd.s32 %s65, 1
      %p69 = scmp.eq.s32.totalorder %s17, 1
      %p70 = scmp.ne.s32.totalorder %s65, %s67
      %p71 = scmp.eq.s32.totalorder %s17, 0
      %p72 = por %p70, %p71
      %p73 = scmp.ne.s32.totalorder %s65, %s67
      %p74 = scmp.eq.s32.totalorder %s22, 1
      %p75 = por %p73, %p74
      %p76 = scmp.ne.s32.totalorder %s67, %s68
      %p77 = scmp.eq.s32.totalorder %s22, 0
      %p78 = por %p76, %p77
      %p79 = scmp.ne.s32.totalorder %s67, %s68
      %p80 = scmp.eq.s32.totalorder %s23, 1
      %p81 = por %p79, %p80
      %p83 = scmp.ne.s32.totalorder %s68, %s82
      %p84 = scmp.eq.s32.totalorder %s23, 0
      %p85 = por %p83, %p84
      %s87 = sadd.s32 %s86, 1
      %p90 = scmp.eq.s32.totalorder %s17, 1
      %p91 = scmp.ne.s32.totalorder %s86, %s88
      %p92 = scmp.eq.s32.totalorder %s17, 0
      %p93 = por %p91, %p92
      %p94 = scmp.ne.s32.totalorder %s86, %s88
      %p95 = scmp.eq.s32.totalorder %s22, 1
      %p96 = por %p94, %p95
      %p97 = scmp.ne.s32.totalorder %s88, %s89
      %p98 = scmp.eq.s32.totalorder %s22, 0
      %p99 = por %p97, %p98
      %p100 = scmp.ne.s32.totalorder %s88, %s89
      %p101 = scmp.eq.s32.totalorder %s23, 1
      %p102 = por %p100, %p101
      %p104 = scmp.ne.s32.totalorder %s89, %s103
      %p105 = scmp.eq.s32.totalorder %s23, 0
      %p106 = por %p104, %p105
      %s108 = sadd.s32 %s107, 1
      %p111 = scmp.eq.s32.totalorder %s17, 1
      %p112 = scmp.ne.s32.totalorder %s107, %s109
      %p113 = scmp.eq.s32.totalorder %s17, 0
      %p114 = por %p112, %p113
      %p115 = scmp.ne.s32.totalorder %s107, %s109
      %p116 = scmp.eq.s32.totalorder %s22, 1
      %p117 = por %p115, %p116
      %p118 = scmp.ne.s32.totalorder %s109, %s110
      %p119 = scmp.eq.s32.totalorder %s22, 0
      %p120 = por %p118, %p119
      %p121 = scmp.ne.s32.totalorder %s109, %s110
      %p122 = scmp.eq.s32.totalorder %s23, 1
      %p123 = por %p121, %p122
      %p125 = scmp.ne.s32.totalorder %s110, %s124
      %p126 = scmp.eq.s32.totalorder %s23, 0
      %p127 = por %p125, %p126
      %s129 = sadd.s32 %s128, 1
      %p132 = scmp.eq.s32.totalorder %s17, 1
      %p133 = scmp.ne.s32.totalorder %s128, %s130
      %p134 = scmp.eq.s32.totalorder %s17, 0
      %p135 = por %p133, %p134
      %p136 = scmp.ne.s32.totalorder %s128, %s130
      %p137 = scmp.eq.s32.totalorder %s22, 1
      %p138 = por %p136, %p137
      %p139 = scmp.ne.s32.totalorder %s130, %s131
      %p140 = scmp.eq.s32.totalorder %s22, 0
      %p141 = por %p139, %p140
      %p142 = scmp.ne.s32.totalorder %s130, %s131
      %p143 = scmp.eq.s32.totalorder %s23, 1
      %p144 = por %p142, %p143
      %p146 = scmp.ne.s32.totalorder %s131, %s145
      %p147 = scmp.eq.s32.totalorder %s23, 0
      %p148 = por %p146, %p147
      %s150 = sadd.s32 %s149, 1
      %p153 = scmp.eq.s32.totalorder %s17, 1
      %p154 = scmp.ne.s32.totalorder %s149, %s151
      %p155 = scmp.eq.s32.totalorder %s17, 0
      %p156 = por %p154, %p155
      %p157 = scmp.ne.s32.totalorder %s149, %s151
      %p158 = scmp.eq.s32.totalorder %s22, 1
      %p159 = por %p157, %p158
      %p160 = scmp.ne.s32.totalorder %s151, %s152
      %p161 = scmp.eq.s32.totalorder %s22, 0
      %p162 = por %p160, %p161
      %p163 = scmp.ne.s32.totalorder %s151, %s152
      %p164 = scmp.eq.s32.totalorder %s23, 1
      %p165 = por %p163, %p164
      %p167 = scmp.ne.s32.totalorder %s152, %s166
      %p168 = scmp.eq.s32.totalorder %s23, 0
      %p169 = por %p167, %p168
      %s171 = sadd.s32 %s170, 1
      %p174 = scmp.eq.s32.totalorder %s17, 1
      %p175 = scmp.ne.s32.totalorder %s170, %s172
      %p176 = scmp.eq.s32.totalorder %s17, 0
      %p177 = por %p175, %p176
      %p178 = scmp.ne.s32.totalorder %s170, %s172
      %p179 = scmp.eq.s32.totalorder %s22, 1
      %p180 = por %p178, %p179
      %p181 = scmp.ne.s32.totalorder %s172, %s173
      %p182 = scmp.eq.s32.totalorder %s22, 0
      %p183 = por %p181, %p182
      %p184 = scmp.ne.s32.totalorder %s172, %s173
      %p185 = scmp.eq.s32.totalorder %s23, 1
      %p186 = por %p184, %p185
      %p188 = scmp.ne.s32.totalorder %s173, %s187
      %p189 = scmp.eq.s32.totalorder %s23, 0
      %p190 = por %p188, %p189
      %s191 = ssub.s32 %s24, %s36
      %p192 = scmp.eq.s32.totalorder %s191, 0
      %s194 = sadd.s32 %s193, 1
      %s195 = scalar_select %p192, %s193, %s194
      %p198 = pneg %p192
      %p199 = scmp.eq.s32.totalorder %s17, 1
      %p200 = por %p198, %p199
      %p201 = scmp.ne.s32.totalorder %s193, %s196
      %p202 = scmp.eq.s32.totalorder %s17, 0
      %p203 = por %p201, %p202
      %p204 = scmp.ne.s32.totalorder %s193, %s196
      %p205 = scmp.eq.s32.totalorder %s22, 1
      %p206 = por %p204, %p205
      %p207 = scmp.ne.s32.totalorder %s196, %s197
      %p208 = scmp.eq.s32.totalorder %s22, 0
      %p209 = por %p207, %p208
      %p210 = scmp.ne.s32.totalorder %s196, %s197
      %p211 = scmp.eq.s32.totalorder %s23, 1
      %p212 = por %p210, %p211
      %p214 = scmp.ne.s32.totalorder %s197, %s213
      %p215 = scmp.eq.s32.totalorder %s23, 0
      %p216 = por %p214, %p215
      %p217 = scmp.le.s32.totalorder 1, %s17
      %p218 = scmp.lt.s32.totalorder %s17, 3
      %p219 = pnand %p217, %p218
      %p220 = pneg %p219
      // Predicated region
      $region9: #{tpu_custom_call.1} parent=5 // pred_check
        _
      $region10: #{tpu_custom_call.1} parent=5 // pred_check_branch
        %222 = sbr.rel (%p219) target = $region12
      $region11: #{tpu_custom_call.1} parent=5 // pred_region
        %s223 = ssub.s32 %s17, 1
        // Predicated region
        $region13: #{tpu_custom_call.1} parent=11 // pred_check
          %p224 = pneg %p78
        $region14: #{tpu_custom_call.1} parent=11 // pred_check_branch
          %226 = sbr.rel (%p224) target = $region16
        $region15: #{tpu_custom_call.1} parent=11 // pred_region
          _
        $region16: #{tpu_custom_call.1} parent=11 // pred_fallthru
          _
        // Predicated region
        $region17: #{tpu_custom_call.1} parent=11 // pred_check
          %p227 = pneg %p99
        $region18: #{tpu_custom_call.1} parent=11 // pred_check_branch
          %229 = sbr.rel (%p227) target = $region20
        $region19: #{tpu_custom_call.1} parent=11 // pred_region
          _
        $region20: #{tpu_custom_call.1} parent=11 // pred_fallthru
          _
        // Predicated region
        $region21: #{tpu_custom_call.1} parent=11 // pred_check
          %p230 = pneg %p120
        $region22: #{tpu_custom_call.1} parent=11 // pred_check_branch
          %232 = sbr.rel (%p230) target = $region24
        $region23: #{tpu_custom_call.1} parent=11 // pred_region
          _
        $region24: #{tpu_custom_call.1} parent=11 // pred_fallthru
          _
        // Predicated region
        $region25: #{tpu_custom_call.1} parent=11 // pred_check
          %p233 = pneg %p141
        $region26: #{tpu_custom_call.1} parent=11 // pred_check_branch
          %235 = sbr.rel (%p233) target = $region28
        $region27: #{tpu_custom_call.1} parent=11 // pred_region
          _
        $region28: #{tpu_custom_call.1} parent=11 // pred_fallthru
          _
        // Predicated region
        $region29: #{tpu_custom_call.1} parent=11 // pred_check
          %p236 = pneg %p162
        $region30: #{tpu_custom_call.1} parent=11 // pred_check_branch
          %238 = sbr.rel (%p236) target = $region32
        $region31: #{tpu_custom_call.1} parent=11 // pred_region
          %240 = vsyncadd [#allocation3], 0
          %s241 = sshll.u32 %s5, 4
          %s242 = int_to_ptr.hbm [resolvable:$true] %s241
          %s243 = sshll.u32 [#allocation2], 4
          %s244 = int_to_ptr.vmem [resolvable:$true] %s243
          %249 = dma.hbm_to_vmem [thread:$0]  %s242, 16384, %s244, [#allocation3], 512, 512, 32
        $region32: #{tpu_custom_call.1} parent=11 // pred_fallthru
          _
        // Predicated region
        $region33: #{tpu_custom_call.1} parent=11 // pred_check
          %p250 = pneg %p183
        $region34: #{tpu_custom_call.1} parent=11 // pred_check_branch
          %252 = sbr.rel (%p250) target = $region36
        $region35: #{tpu_custom_call.1} parent=11 // pred_region
          _
        $region36: #{tpu_custom_call.1} parent=11 // pred_fallthru
          _
      $region12: #{tpu_custom_call.1} parent=5 // pred_fallthru
        _
      %p253 = scmp.lt.s32.totalorder %s17, 2
      // Predicated region
      $region37: #{tpu_custom_call.1} parent=5 // pred_check
        %p254 = pneg %p253
      $region38: #{tpu_custom_call.1} parent=5 // pred_check_branch
        %256 = sbr.rel (%p254) target = $region40
      $region39: #{tpu_custom_call.1} parent=5 // pred_region
        // Predicated region
        $region41: #{tpu_custom_call.1} parent=39 // pred_check
          %p257 = pneg %p51
        $region42: #{tpu_custom_call.1} parent=39 // pred_check_branch
          %259 = sbr.rel (%p257) target = $region44
        $region43: #{tpu_custom_call.1} parent=39 // pred_region
          %s260 = smul.u32 32, %s25
          %p261 = scmp.lt.s32.totalorder %s24, 1
          %s262 = scalar_select %p261, %s24, 1
          %p263 = scmp.lt.s32.totalorder %s260, 31
          %s264 = scalar_select %p263, %s260, 31
          %s265 = smul.addr %s262, 32
          %s266 = sadd.s32 %s264, %s265
          %s267 = smul.addr %s266, 4
          %s268 = scalar_lea.vmem %s0, %s267
          %s269 = smul.u32 32, %s25
        $region44: #{tpu_custom_call.1} parent=39 // pred_fallthru
          _
      $region40: #{tpu_custom_call.1} parent=5 // pred_fallthru
        _
      %p270 = scmp.le.s32.totalorder 1, %s17
      %p271 = scmp.lt.s32.totalorder %s17, 3
      %p272 = pnand %p270, %p271
      %p273 = pneg %p272
      // Predicated region
      $region45: #{tpu_custom_call.1} parent=5 // pred_check
        _
      $region46: #{tpu_custom_call.1} parent=5 // pred_check_branch
        %275 = sbr.rel (%p272) target = $region48
      $region47: #{tpu_custom_call.1} parent=5 // pred_region
        %s276 = ssub.s32 %s17, 1
        // Predicated region
        $region49: #{tpu_custom_call.1} parent=47 // pred_check
          %p277 = pneg %p162
        $region50: #{tpu_custom_call.1} parent=47 // pred_check_branch
          %279 = sbr.rel (%p277) target = $region52
        $region51: #{tpu_custom_call.1} parent=47 // pred_region
          %281 = dma.done [#allocation3], 16384
        $region52: #{tpu_custom_call.1} parent=47 // pred_fallthru
          _
        %s282 = smul.u32 32, %s27
        %p283 = scmp.lt.s32.totalorder %s26, 1
        %s284 = scalar_select %p283, %s26, 1
        %p285 = scmp.lt.s32.totalorder %s282, 31
        %s286 = scalar_select %p285, %s282, 31
        %s287 = smul.addr %s284, 32
        %s288 = sadd.s32 %s286, %s287
        %s289 = smul.addr %s288, 4
        %s290 = scalar_lea.vmem %s0, %s289
        %p291 = pneg %p57
        %p292 = pneg %p54
        %p293 = pneg %p78
        %p294 = pneg %p75
        %p295 = pneg %p99
        %p296 = pneg %p96
        %p297 = pneg %p120
        %p298 = pneg %p117
        %p299 = pneg %p141
        %p300 = pneg %p138
        %p301 = pneg %p162
        %p302 = pneg %p159
        %p303 = pneg %p183
        %p304 = pneg %p180
        %p305 = pneg %p209
        %p306 = pneg %p206
        %s307 = sand.u32 %s196, 1
        %s308 = scalar_lea.sflag [#allocation4], %s307
        %s309 = sand.u32 %s196, 1
        %s310 = smul.addr %s309, 8
        %s311 = scalar_lea.vmem [#allocation5], %s310
        %s312 = smul.u32 32, %s27
        %p313 = scmp.lt.s32.totalorder %s26, 1
        %s314 = scalar_select %p313, %s26, 1
        %p315 = scmp.lt.s32.totalorder %s312, 31
        %s316 = scalar_select %p315, %s312, 31
        %s317 = smul.addr %s314, 32
        %s318 = sadd.s32 %s316, %s317
        %s319 = smul.addr %s318, 4
        %s320 = scalar_lea.vmem %s0, %s319
        %s321 = smul.u32 32, %s27
        %p323 = scmp.eq.s32.totalorder %s27, 0
        // Predicated region
        $region53: #{tpu_custom_call.1} parent=47 // pred_check
          %p324 = pneg %p323
        $region54: #{tpu_custom_call.1} parent=47 // pred_check_branch
          %326 = sbr.rel (%p324) target = $region56
        $region55: #{tpu_custom_call.1} parent=47 // pred_region
          %327 = vst [vmem:[%s311] sm:$0xff] -inf
        $region56: #{tpu_custom_call.1} parent=47 // pred_fallthru
          _
        %v328 = vld [vmem:[%s320] sm:$0xf]
        %v329 = vld [vmem:[%s320 + $0x4] sm:$0xf]
        %v330 = vld [vmem:[%s320 + $0x8] sm:$0xf]
        %v331 = vld [vmem:[%s320 + $0xc] sm:$0xf]
        %v332 = vld [vmem:[%s320 + $0x10] sm:$0xf]
        %v333 = vld [vmem:[%s320 + $0x14] sm:$0xf]
        %v334 = vld [vmem:[%s320 + $0x18] sm:$0xf]
        %v335 = vld [vmem:[%s320 + $0x1c] sm:$0xf]
        %v336 = vld [vmem:[%s320 + $0x20] sm:$0xf]
        %v337 = vld [vmem:[%s320 + $0x24] sm:$0xf]
        %v338 = vld [vmem:[%s320 + $0x28] sm:$0xf]
        %v339 = vld [vmem:[%s320 + $0x2c] sm:$0xf]
        %v340 = vld [vmem:[%s320 + $0x30] sm:$0xf]
        %v341 = vld [vmem:[%s320 + $0x34] sm:$0xf]
        %v342 = vld [vmem:[%s320 + $0x38] sm:$0xf]
        %v343 = vld [vmem:[%s320 + $0x3c] sm:$0xf]
        %v344 = vld [vmem:[%s320 + $0x40] sm:$0xf]
        %v345 = vld [vmem:[%s320 + $0x44] sm:$0xf]
        %v346 = vld [vmem:[%s320 + $0x48] sm:$0xf]
        %v347 = vld [vmem:[%s320 + $0x4c] sm:$0xf]
        %v348 = vld [vmem:[%s320 + $0x50] sm:$0xf]
        %v349 = vld [vmem:[%s320 + $0x54] sm:$0xf]
        %v350 = vld [vmem:[%s320 + $0x58] sm:$0xf]
        %v351 = vld [vmem:[%s320 + $0x5c] sm:$0xf]
        %v352 = vld [vmem:[%s320 + $0x60] sm:$0xf]
        %v353 = vld [vmem:[%s320 + $0x64] sm:$0xf]
        %v354 = vld [vmem:[%s320 + $0x68] sm:$0xf]
        %v355 = vld [vmem:[%s320 + $0x6c] sm:$0xf]
        %v356 = vld [vmem:[%s320 + $0x70] sm:$0xf]
        %v357 = vld [vmem:[%s320 + $0x74] sm:$0xf]
        %v358 = vld [vmem:[%s320 + $0x78] sm:$0xf]
        %v359 = vld [vmem:[%s320 + $0x7c] sm:$0xf]
        %v360 = vld [vmem:[%s1] sm:$0xf]
        %v361 = vld [vmem:[%s2] sm:$0x1]
        %v363 = vperm.slane %v361, 0
        %v397 = vunpack.c.l.b16 %v328
        %v398 = vunpack.c.l.b16 %v329
        %v399 = vunpack.c.l.b16 %v330
        %v400 = vunpack.c.l.b16 %v331
        %v401 = vunpack.c.l.b16 %v332
        %v402 = vunpack.c.l.b16 %v333
        %v403 = vunpack.c.l.b16 %v334
        %v404 = vunpack.c.l.b16 %v335
        %v405 = vunpack.c.l.b16 %v336
        %v406 = vunpack.c.l.b16 %v337
        %v407 = vunpack.c.l.b16 %v338
        %v408 = vunpack.c.l.b16 %v339
        %v409 = vunpack.c.l.b16 %v340
        %v410 = vunpack.c.l.b16 %v341
        %v411 = vunpack.c.l.b16 %v342
        %v412 = vunpack.c.l.b16 %v343
        %v413 = vunpack.c.l.b16 %v344
        %v414 = vunpack.c.l.b16 %v345
        %v415 = vunpack.c.l.b16 %v346
        %v416 = vunpack.c.l.b16 %v347
        %v417 = vunpack.c.l.b16 %v348
        %v418 = vunpack.c.l.b16 %v349
        %v419 = vunpack.c.l.b16 %v350
        %v420 = vunpack.c.l.b16 %v351
        %v421 = vunpack.c.l.b16 %v352
        %v422 = vunpack.c.l.b16 %v353
        %v423 = vunpack.c.l.b16 %v354
        %v424 = vunpack.c.l.b16 %v355
        %v425 = vunpack.c.l.b16 %v356
        %v426 = vunpack.c.l.b16 %v357
        %v427 = vunpack.c.l.b16 %v358
        %v428 = vunpack.c.l.b16 %v359
        %v429 = vpack.c.b16 %v398, %v397
        %v430 = vpack.c.b16 %v400, %v399
        %v431 = vpack.c.b16 %v402, %v401
        %v432 = vpack.c.b16 %v404, %v403
        %v433 = vpack.c.b16 %v406, %v405
        %v434 = vpack.c.b16 %v408, %v407
        %v435 = vpack.c.b16 %v410, %v409
        %v436 = vpack.c.b16 %v412, %v411
        %v437 = vpack.c.b16 %v414, %v413
        %v438 = vpack.c.b16 %v416, %v415
        %v439 = vpack.c.b16 %v418, %v417
        %v440 = vpack.c.b16 %v420, %v419
        %v441 = vpack.c.b16 %v422, %v421
        %v442 = vpack.c.b16 %v424, %v423
        %v443 = vpack.c.b16 %v426, %v425
        %v444 = vpack.c.b16 %v428, %v427
        %vm445 = vcmask 64512
        %v447 = vsel %vm445, %v429, 0
        %v450 = vsel %vm445, %v430, 0
        %v453 = vsel %vm445, %v431, 0
        %v456 = vsel %vm445, %v432, 0
        %v459 = vsel %vm445, %v433, 0
        %v462 = vsel %vm445, %v434, 0
        %v465 = vsel %vm445, %v435, 0
        %v468 = vsel %vm445, %v436, 0
        %v471 = vsel %vm445, %v437, 0
        %v474 = vsel %vm445, %v438, 0
        %v477 = vsel %vm445, %v439, 0
        %v480 = vsel %vm445, %v440, 0
        %v483 = vsel %vm445, %v441, 0
        %v486 = vsel %vm445, %v442, 0
        %v489 = vsel %vm445, %v443, 0
        %v492 = vsel %vm445, %v444, 0
        %vm494 = vcmask 1043456
        %v496 = vsel %vm494, %v360, 0
        %498 = vmatpush.bf16.msra.mxu0 0
        %499 = vmatpush.bf16.msra.mxu0 0
        %500 = vmatpush.bf16.msra.mxu0 0
        %501 = vmatpush.bf16.msra.mxu0 0
        %502 = vmatpush.bf16.msra.mxu0 0
        %503 = vmatpush.bf16.msra.mxu0 0
        %504 = vmatpush.bf16.msra.mxu0 0
        %505 = vmatpush.bf16.msra.mxu0 %v496
        %506 = vmatmul.bf16.gmra.mxu0 %v447
        %v507 = vpop.f32.mrf.mxu0
        %v508 = vadd.f32 %v363, %v507
        %v509 = vpop.f32.mrf.mxu0
        %v510 = vadd.f32 %v363, %v509
        %511 = vmatmul.bf16.gmra.mxu0 %v450
        %v512 = vpop.f32.mrf.mxu0
        %v513 = vadd.f32 %v363, %v512
        %v514 = vpop.f32.mrf.mxu0
        %v515 = vadd.f32 %v363, %v514
        %516 = vmatmul.bf16.gmra.mxu0 %v453
        %v517 = vpop.f32.mrf.mxu0
        %v518 = vadd.f32 %v363, %v517
        %v519 = vpop.f32.mrf.mxu0
        %v520 = vadd.f32 %v363, %v519
        %521 = vmatmul.bf16.gmra.mxu0 %v456
        %v522 = vpop.f32.mrf.mxu0
        %v523 = vadd.f32 %v363, %v522
        %v524 = vpop.f32.mrf.mxu0
        %v525 = vadd.f32 %v363, %v524
        %526 = vmatmul.bf16.gmra.mxu0 %v459
        %v527 = vpop.f32.mrf.mxu0
        %v528 = vadd.f32 %v363, %v527
        %v529 = vpop.f32.mrf.mxu0
        %v530 = vadd.f32 %v363, %v529
        %531 = vmatmul.bf16.gmra.mxu0 %v462
        %v532 = vpop.f32.mrf.mxu0
        %v533 = vadd.f32 %v363, %v532
        %v534 = vpop.f32.mrf.mxu0
        %v535 = vadd.f32 %v363, %v534
        %536 = vmatmul.bf16.gmra.mxu0 %v465
        %v537 = vpop.f32.mrf.mxu0
        %v538 = vadd.f32 %v363, %v537
        %v539 = vpop.f32.mrf.mxu0
        %v540 = vadd.f32 %v363, %v539
        %541 = vmatmul.bf16.gmra.mxu0 %v468
        %v542 = vpop.f32.mrf.mxu0
        %v543 = vadd.f32 %v363, %v542
        %v544 = vpop.f32.mrf.mxu0
        %v545 = vadd.f32 %v363, %v544
        %546 = vmatmul.bf16.gmra.mxu0 %v471
        %v547 = vpop.f32.mrf.mxu0
        %v548 = vadd.f32 %v363, %v547
        %v549 = vpop.f32.mrf.mxu0
        %v550 = vadd.f32 %v363, %v549
        %551 = vmatmul.bf16.gmra.mxu0 %v474
        %v552 = vpop.f32.mrf.mxu0
        %v553 = vadd.f32 %v363, %v552
        %v554 = vpop.f32.mrf.mxu0
        %v555 = vadd.f32 %v363, %v554
        %556 = vmatmul.bf16.gmra.mxu0 %v477
        %v557 = vpop.f32.mrf.mxu0
        %v558 = vadd.f32 %v363, %v557
        %v559 = vpop.f32.mrf.mxu0
        %v560 = vadd.f32 %v363, %v559
        %561 = vmatmul.bf16.gmra.mxu0 %v480
        %v562 = vpop.f32.mrf.mxu0
        %v563 = vadd.f32 %v363, %v562
        %v564 = vpop.f32.mrf.mxu0
        %v565 = vadd.f32 %v363, %v564
        %566 = vmatmul.bf16.gmra.mxu0 %v483
        %v567 = vpop.f32.mrf.mxu0
        %v568 = vadd.f32 %v363, %v567
        %v569 = vpop.f32.mrf.mxu0
        %v570 = vadd.f32 %v363, %v569
        %571 = vmatmul.bf16.gmra.mxu0 %v486
        %v572 = vpop.f32.mrf.mxu0
        %v573 = vadd.f32 %v363, %v572
        %v574 = vpop.f32.mrf.mxu0
        %v575 = vadd.f32 %v363, %v574
        %576 = vmatmul.bf16.gmra.mxu0 %v489
        %v577 = vpop.f32.mrf.mxu0
        %v578 = vadd.f32 %v363, %v577
        %v579 = vpop.f32.mrf.mxu0
        %v580 = vadd.f32 %v363, %v579
        %581 = vmatmul.bf16.gmra.mxu0 %v492
        %v582 = vpop.f32.mrf.mxu0
        %v583 = vadd.f32 %v363, %v582
        %v584 = vpop.f32.mrf.mxu0
        %v585 = vadd.f32 %v363, %v584
        %586 = vdwg.mxu0
        %v587 = vmax.f32 %v508, 0.0
        %v588 = vmax.f32 %v510, 0.0
        %v589 = vmax.f32 %v513, 0.0
        %v590 = vmax.f32 %v515, 0.0
        %v591 = vmax.f32 %v518, 0.0
        %v592 = vmax.f32 %v520, 0.0
        %v593 = vmax.f32 %v523, 0.0
        %v594 = vmax.f32 %v525, 0.0
        %v595 = vmax.f32 %v528, 0.0
        %v596 = vmax.f32 %v530, 0.0
        %v597 = vmax.f32 %v533, 0.0
        %v598 = vmax.f32 %v535, 0.0
        %v599 = vmax.f32 %v538, 0.0
        %v600 = vmax.f32 %v540, 0.0
        %v601 = vmax.f32 %v543, 0.0
        %v602 = vmax.f32 %v545, 0.0
        %v603 = vmax.f32 %v548, 0.0
        %v604 = vmax.f32 %v550, 0.0
        %v605 = vmax.f32 %v553, 0.0
        %v606 = vmax.f32 %v555, 0.0
        %v607 = vmax.f32 %v558, 0.0
        %v608 = vmax.f32 %v560, 0.0
        %v609 = vmax.f32 %v563, 0.0
        %v610 = vmax.f32 %v565, 0.0
        %v611 = vmax.f32 %v568, 0.0
        %v612 = vmax.f32 %v570, 0.0
        %v613 = vmax.f32 %v573, 0.0
        %v614 = vmax.f32 %v575, 0.0
        %v615 = vmax.f32 %v578, 0.0
        %v616 = vmax.f32 %v580, 0.0
        %v617 = vmax.f32 %v583, 0.0
        %v618 = vmax.f32 %v585, 0.0
        %v619 = vpack.c.bf16 %v588, %v587
        %v620 = vpack.c.bf16 %v590, %v589
        %v621 = vpack.c.bf16 %v592, %v591
        %v622 = vpack.c.bf16 %v594, %v593
        %v623 = vpack.c.bf16 %v596, %v595
        %v624 = vpack.c.bf16 %v598, %v597
        %v625 = vpack.c.bf16 %v600, %v599
        %v626 = vpack.c.bf16 %v602, %v601
        %v627 = vpack.c.bf16 %v604, %v603
        %v628 = vpack.c.bf16 %v606, %v605
        %v629 = vpack.c.bf16 %v608, %v607
        %v630 = vpack.c.bf16 %v610, %v609
        %v631 = vpack.c.bf16 %v612, %v611
        %v632 = vpack.c.bf16 %v614, %v613
        %v633 = vpack.c.bf16 %v616, %v615
        %v634 = vpack.c.bf16 %v618, %v617
        %v635 = vld [vmem:[%s3] sm:$0xff]
        %v636 = vld [vmem:[%s3 + $0x8] sm:$0xff]
        %v637 = vld [vmem:[%s3 + $0x10] sm:$0xff]
        %v638 = vld [vmem:[%s3 + $0x18] sm:$0xff]
        %v639 = vld [vmem:[%s3 + $0x20] sm:$0xff]
        %v640 = vld [vmem:[%s3 + $0x28] sm:$0xff]
        %v641 = vld [vmem:[%s3 + $0x30] sm:$0xff]
        %v642 = vld [vmem:[%s3 + $0x38] sm:$0xff]
        %v643 = vld [vmem:[%s3 + $0x40] sm:$0xff]
        %v644 = vld [vmem:[%s3 + $0x48] sm:$0xff]
        %v645 = vld [vmem:[%s3 + $0x50] sm:$0xff]
        %v646 = vld [vmem:[%s3 + $0x58] sm:$0xff]
        %v647 = vld [vmem:[%s3 + $0x60] sm:$0xff]
        %v648 = vld [vmem:[%s3 + $0x68] sm:$0xff]
        %v649 = vld [vmem:[%s3 + $0x70] sm:$0xff]
        %v650 = vld [vmem:[%s3 + $0x78] sm:$0xff]
        %v651 = vld [vmem:[%s4] sm:$0x3]
        %v653 = vperm.slane %v651, 0
        %v654 = vperm.slane %v651, 1
        %v673 = vunpack.c.l.b16 %v635
        %v674 = vunpack.c.h.b16 %v635
        %v675 = vunpack.c.l.b16 %v636
        %v676 = vunpack.c.h.b16 %v636
        %v677 = vunpack.c.l.b16 %v637
        %v678 = vunpack.c.h.b16 %v637
        %v679 = vunpack.c.l.b16 %v638
        %v680 = vunpack.c.h.b16 %v638
        %v681 = vunpack.c.l.b16 %v639
        %v682 = vunpack.c.h.b16 %v639
        %v683 = vunpack.c.l.b16 %v640
        %v684 = vunpack.c.h.b16 %v640
        %v685 = vunpack.c.l.b16 %v641
        %v686 = vunpack.c.h.b16 %v641
        %v687 = vunpack.c.l.b16 %v642
        %v688 = vunpack.c.h.b16 %v642
        %v689 = vunpack.c.l.b16 %v643
        %v690 = vunpack.c.h.b16 %v643
        %v691 = vunpack.c.l.b16 %v644
        %v692 = vunpack.c.h.b16 %v644
        %v693 = vunpack.c.l.b16 %v645
        %v694 = vunpack.c.h.b16 %v645
        %v695 = vunpack.c.l.b16 %v646
        %v696 = vunpack.c.h.b16 %v646
        %v697 = vunpack.c.l.b16 %v647
        %v698 = vunpack.c.h.b16 %v647
        %v699 = vunpack.c.l.b16 %v648
        %v700 = vunpack.c.h.b16 %v648
        %v701 = vunpack.c.l.b16 %v649
        %v702 = vunpack.c.h.b16 %v649
        %v703 = vunpack.c.l.b16 %v650
        %v704 = vunpack.c.h.b16 %v650
        %v705 = vpack.c.b16 %v675, %v673
        %v706 = vpack.c.b16 %v676, %v674
        %v707 = vpack.c.b16 %v679, %v677
        %v708 = vpack.c.b16 %v680, %v678
        %v709 = vpack.c.b16 %v683, %v681
        %v710 = vpack.c.b16 %v684, %v682
        %v711 = vpack.c.b16 %v687, %v685
        %v712 = vpack.c.b16 %v688, %v686
        %v713 = vpack.c.b16 %v691, %v689
        %v714 = vpack.c.b16 %v692, %v690
        %v715 = vpack.c.b16 %v695, %v693
        %v716 = vpack.c.b16 %v696, %v694
        %v717 = vpack.c.b16 %v699, %v697
        %v718 = vpack.c.b16 %v700, %v698
        %v719 = vpack.c.b16 %v703, %v701
        %v720 = vpack.c.b16 %v704, %v702
        %737 = vmatpush.bf16.msra.mxu0 %v719
        %738 = vmatpush.bf16.msra.mxu0 %v717
        %739 = vmatpush.bf16.msra.mxu0 %v715
        %740 = vmatpush.bf16.msra.mxu0 %v713
        %741 = vmatpush.bf16.msra.mxu0 %v711
        %742 = vmatpush.bf16.msra.mxu0 %v709
        %743 = vmatpush.bf16.msra.mxu0 %v707
        %744 = vmatpush.bf16.msra.mxu0 %v705
        %745 = vmatmul.bf16.gmra.mxu0 %v619
        %v746 = vpop.f32.mrf.mxu0
        %v747 = vadd.f32 %v653, %v746
        %v748 = vpop.f32.mrf.mxu0
        %v749 = vadd.f32 %v653, %v748
        %750 = vmatmul.bf16.gmra.mxu0 %v620
        %v751 = vpop.f32.mrf.mxu0
        %v752 = vadd.f32 %v653, %v751
        %v753 = vpop.f32.mrf.mxu0
        %v754 = vadd.f32 %v653, %v753
        %755 = vmatmul.bf16.gmra.mxu0 %v621
        %v756 = vpop.f32.mrf.mxu0
        %v757 = vadd.f32 %v653, %v756
        %v758 = vpop.f32.mrf.mxu0
        %v759 = vadd.f32 %v653, %v758
        %760 = vmatmul.bf16.gmra.mxu0 %v622
        %v761 = vpop.f32.mrf.mxu0
        %v762 = vadd.f32 %v653, %v761
        %v763 = vpop.f32.mrf.mxu0
        %v764 = vadd.f32 %v653, %v763
        %765 = vmatmul.bf16.gmra.mxu0 %v623
        %v766 = vpop.f32.mrf.mxu0
        %v767 = vadd.f32 %v653, %v766
        %v768 = vpop.f32.mrf.mxu0
        %v769 = vadd.f32 %v653, %v768
        %770 = vmatmul.bf16.gmra.mxu0 %v624
        %v771 = vpop.f32.mrf.mxu0
        %v772 = vadd.f32 %v653, %v771
        %v773 = vpop.f32.mrf.mxu0
        %v774 = vadd.f32 %v653, %v773
        %775 = vmatmul.bf16.gmra.mxu0 %v625
        %v776 = vpop.f32.mrf.mxu0
        %v777 = vadd.f32 %v653, %v776
        %v778 = vpop.f32.mrf.mxu0
        %v779 = vadd.f32 %v653, %v778
        %780 = vmatmul.bf16.gmra.mxu0 %v626
        %v781 = vpop.f32.mrf.mxu0
        %v782 = vadd.f32 %v653, %v781
        %v783 = vpop.f32.mrf.mxu0
        %v784 = vadd.f32 %v653, %v783
        %785 = vmatmul.bf16.gmra.mxu0 %v627
        %v786 = vpop.f32.mrf.mxu0
        %v787 = vadd.f32 %v653, %v786
        %v788 = vpop.f32.mrf.mxu0
        %v789 = vadd.f32 %v653, %v788
        %790 = vmatmul.bf16.gmra.mxu0 %v628
        %v791 = vpop.f32.mrf.mxu0
        %v792 = vadd.f32 %v653, %v791
        %v793 = vpop.f32.mrf.mxu0
        %v794 = vadd.f32 %v653, %v793
        %795 = vmatmul.bf16.gmra.mxu0 %v629
        %v796 = vpop.f32.mrf.mxu0
        %v797 = vadd.f32 %v653, %v796
        %v798 = vpop.f32.mrf.mxu0
        %v799 = vadd.f32 %v653, %v798
        %800 = vmatmul.bf16.gmra.mxu0 %v630
        %v801 = vpop.f32.mrf.mxu0
        %v802 = vadd.f32 %v653, %v801
        %v803 = vpop.f32.mrf.mxu0
        %v804 = vadd.f32 %v653, %v803
        %805 = vmatmul.bf16.gmra.mxu0 %v631
        %v806 = vpop.f32.mrf.mxu0
        %v807 = vadd.f32 %v653, %v806
        %v808 = vpop.f32.mrf.mxu0
        %v809 = vadd.f32 %v653, %v808
        %810 = vmatmul.bf16.gmra.mxu0 %v632
        %v811 = vpop.f32.mrf.mxu0
        %v812 = vadd.f32 %v653, %v811
        %v813 = vpop.f32.mrf.mxu0
        %v814 = vadd.f32 %v653, %v813
        %815 = vmatmul.bf16.gmra.mxu0 %v633
        %v816 = vpop.f32.mrf.mxu0
        %v817 = vadd.f32 %v653, %v816
        %v818 = vpop.f32.mrf.mxu0
        %v819 = vadd.f32 %v653, %v818
        %820 = vmatmul.bf16.gmra.mxu0 %v634
        %v821 = vpop.f32.mrf.mxu0
        %v822 = vadd.f32 %v653, %v821
        %v823 = vpop.f32.mrf.mxu0
        %v824 = vadd.f32 %v653, %v823
        %825 = vdwg.mxu0
        %826 = vmatpush.bf16.msra.mxu0 %v720
        %827 = vmatpush.bf16.msra.mxu0 %v718
        %828 = vmatpush.bf16.msra.mxu0 %v716
        %829 = vmatpush.bf16.msra.mxu0 %v714
        %830 = vmatpush.bf16.msra.mxu0 %v712
        %831 = vmatpush.bf16.msra.mxu0 %v710
        %832 = vmatpush.bf16.msra.mxu0 %v708
        %833 = vmatpush.bf16.msra.mxu0 %v706
        %834 = vmatmul.bf16.gmra.mxu0 %v619
        %v835 = vpop.f32.mrf.mxu0
        %v836 = vadd.f32 %v654, %v835
        %v837 = vpop.f32.mrf.mxu0
        %v838 = vadd.f32 %v654, %v837
        %839 = vmatmul.bf16.gmra.mxu0 %v620
        %v840 = vpop.f32.mrf.mxu0
        %v841 = vadd.f32 %v654, %v840
        %v842 = vpop.f32.mrf.mxu0
        %v843 = vadd.f32 %v654, %v842
        %844 = vmatmul.bf16.gmra.mxu0 %v621
        %v845 = vpop.f32.mrf.mxu0
        %v846 = vadd.f32 %v654, %v845
        %v847 = vpop.f32.mrf.mxu0
        %v848 = vadd.f32 %v654, %v847
        %849 = vmatmul.bf16.gmra.mxu0 %v622
        %v850 = vpop.f32.mrf.mxu0
        %v851 = vadd.f32 %v654, %v850
        %v852 = vpop.f32.mrf.mxu0
        %v853 = vadd.f32 %v654, %v852
        %854 = vmatmul.bf16.gmra.mxu0 %v623
        %v855 = vpop.f32.mrf.mxu0
        %v856 = vadd.f32 %v654, %v855
        %v857 = vpop.f32.mrf.mxu0
        %v858 = vadd.f32 %v654, %v857
        %859 = vmatmul.bf16.gmra.mxu0 %v624
        %v860 = vpop.f32.mrf.mxu0
        %v861 = vadd.f32 %v654, %v860
        %v862 = vpop.f32.mrf.mxu0
        %v863 = vadd.f32 %v654, %v862
        %864 = vmatmul.bf16.gmra.mxu0 %v625
        %v865 = vpop.f32.mrf.mxu0
        %v866 = vadd.f32 %v654, %v865
        %v867 = vpop.f32.mrf.mxu0
        %v868 = vadd.f32 %v654, %v867
        %869 = vmatmul.bf16.gmra.mxu0 %v626
        %v870 = vpop.f32.mrf.mxu0
        %v871 = vadd.f32 %v654, %v870
        %v872 = vpop.f32.mrf.mxu0
        %v873 = vadd.f32 %v654, %v872
        %874 = vmatmul.bf16.gmra.mxu0 %v627
        %v875 = vpop.f32.mrf.mxu0
        %v876 = vadd.f32 %v654, %v875
        %v877 = vpop.f32.mrf.mxu0
        %v878 = vadd.f32 %v654, %v877
        %879 = vmatmul.bf16.gmra.mxu0 %v628
        %v880 = vpop.f32.mrf.mxu0
        %v881 = vadd.f32 %v654, %v880
        %v882 = vpop.f32.mrf.mxu0
        %v883 = vadd.f32 %v654, %v882
        %884 = vmatmul.bf16.gmra.mxu0 %v629
        %v885 = vpop.f32.mrf.mxu0
        %v886 = vadd.f32 %v654, %v885
        %v887 = vpop.f32.mrf.mxu0
        %v888 = vadd.f32 %v654, %v887
        %889 = vmatmul.bf16.gmra.mxu0 %v630
        %v890 = vpop.f32.mrf.mxu0
        %v891 = vadd.f32 %v654, %v890
        %v892 = vpop.f32.mrf.mxu0
        %v893 = vadd.f32 %v654, %v892
        %894 = vmatmul.bf16.gmra.mxu0 %v631
        %v895 = vpop.f32.mrf.mxu0
        %v896 = vadd.f32 %v654, %v895
        %v897 = vpop.f32.mrf.mxu0
        %v898 = vadd.f32 %v654, %v897
        %899 = vmatmul.bf16.gmra.mxu0 %v632
        %v900 = vpop.f32.mrf.mxu0
        %v901 = vadd.f32 %v654, %v900
        %v902 = vpop.f32.mrf.mxu0
        %v903 = vadd.f32 %v654, %v902
        %904 = vmatmul.bf16.gmra.mxu0 %v633
        %v905 = vpop.f32.mrf.mxu0
        %v906 = vadd.f32 %v654, %v905
        %v907 = vpop.f32.mrf.mxu0
        %v908 = vadd.f32 %v654, %v907
        %909 = vmatmul.bf16.gmra.mxu0 %v634
        %v910 = vpop.f32.mrf.mxu0
        %v911 = vadd.f32 %v654, %v910
        %v912 = vpop.f32.mrf.mxu0
        %v913 = vadd.f32 %v654, %v912
        %914 = vdwg.mxu0
        %v915 = vmax.f32 %v747, 0.0
        %v916 = vmax.f32 %v836, 0.0
        %v917 = vmax.f32 %v749, 0.0
        %v918 = vmax.f32 %v838, 0.0
        %v919 = vmax.f32 %v752, 0.0
        %v920 = vmax.f32 %v841, 0.0
        %v921 = vmax.f32 %v754, 0.0
        %v922 = vmax.f32 %v843, 0.0
        %v923 = vmax.f32 %v757, 0.0
        %v924 = vmax.f32 %v846, 0.0
        %v925 = vmax.f32 %v759, 0.0
        %v926 = vmax.f32 %v848, 0.0
        %v927 = vmax.f32 %v762, 0.0
        %v928 = vmax.f32 %v851, 0.0
        %v929 = vmax.f32 %v764, 0.0
        %v930 = vmax.f32 %v853, 0.0
        %v931 = vmax.f32 %v767, 0.0
        %v932 = vmax.f32 %v856, 0.0
        %v933 = vmax.f32 %v769, 0.0
        %v934 = vmax.f32 %v858, 0.0
        %v935 = vmax.f32 %v772, 0.0
        %v936 = vmax.f32 %v861, 0.0
        %v937 = vmax.f32 %v774, 0.0
        %v938 = vmax.f32 %v863, 0.0
        %v939 = vmax.f32 %v777, 0.0
        %v940 = vmax.f32 %v866, 0.0
        %v941 = vmax.f32 %v779, 0.0
        %v942 = vmax.f32 %v868, 0.0
        %v943 = vmax.f32 %v782, 0.0
        %v944 = vmax.f32 %v871, 0.0
        %v945 = vmax.f32 %v784, 0.0
        %v946 = vmax.f32 %v873, 0.0
        %v947 = vmax.f32 %v787, 0.0
        %v948 = vmax.f32 %v876, 0.0
        %v949 = vmax.f32 %v789, 0.0
        %v950 = vmax.f32 %v878, 0.0
        %v951 = vmax.f32 %v792, 0.0
        %v952 = vmax.f32 %v881, 0.0
        %v953 = vmax.f32 %v794, 0.0
        %v954 = vmax.f32 %v883, 0.0
        %v955 = vmax.f32 %v797, 0.0
        %v956 = vmax.f32 %v886, 0.0
        %v957 = vmax.f32 %v799, 0.0
        %v958 = vmax.f32 %v888, 0.0
        %v959 = vmax.f32 %v802, 0.0
        %v960 = vmax.f32 %v891, 0.0
        %v961 = vmax.f32 %v804, 0.0
        %v962 = vmax.f32 %v893, 0.0
        %v963 = vmax.f32 %v807, 0.0
        %v964 = vmax.f32 %v896, 0.0
        %v965 = vmax.f32 %v809, 0.0
        %v966 = vmax.f32 %v898, 0.0
        %v967 = vmax.f32 %v812, 0.0
        %v968 = vmax.f32 %v901, 0.0
        %v969 = vmax.f32 %v814, 0.0
        %v970 = vmax.f32 %v903, 0.0
        %v971 = vmax.f32 %v817, 0.0
        %v972 = vmax.f32 %v906, 0.0
        %v973 = vmax.f32 %v819, 0.0
        %v974 = vmax.f32 %v908, 0.0
        %v975 = vmax.f32 %v822, 0.0
        %v976 = vmax.f32 %v911, 0.0
        %v977 = vmax.f32 %v824, 0.0
        %v978 = vmax.f32 %v913, 0.0
        %v979 = vpack.c.bf16 %v917, %v915
        %v980 = vpack.c.bf16 %v918, %v916
        %v981 = vpack.c.bf16 %v921, %v919
        %v982 = vpack.c.bf16 %v922, %v920
        %v983 = vpack.c.bf16 %v925, %v923
        %v984 = vpack.c.bf16 %v926, %v924
        %v985 = vpack.c.bf16 %v929, %v927
        %v986 = vpack.c.bf16 %v930, %v928
        %v987 = vpack.c.bf16 %v933, %v931
        %v988 = vpack.c.bf16 %v934, %v932
        %v989 = vpack.c.bf16 %v937, %v935
        %v990 = vpack.c.bf16 %v938, %v936
        %v991 = vpack.c.bf16 %v941, %v939
        %v992 = vpack.c.bf16 %v942, %v940
        %v993 = vpack.c.bf16 %v945, %v943
        %v994 = vpack.c.bf16 %v946, %v944
        %v995 = vpack.c.bf16 %v949, %v947
        %v996 = vpack.c.bf16 %v950, %v948
        %v997 = vpack.c.bf16 %v953, %v951
        %v998 = vpack.c.bf16 %v954, %v952
        %v999 = vpack.c.bf16 %v957, %v955
        %v1000 = vpack.c.bf16 %v958, %v956
        %v1001 = vpack.c.bf16 %v961, %v959
        %v1002 = vpack.c.bf16 %v962, %v960
        %v1003 = vpack.c.bf16 %v965, %v963
        %v1004 = vpack.c.bf16 %v966, %v964
        %v1005 = vpack.c.bf16 %v969, %v967
        %v1006 = vpack.c.bf16 %v970, %v968
        %v1007 = vpack.c.bf16 %v973, %v971
        %v1008 = vpack.c.bf16 %v974, %v972
        %v1009 = vpack.c.bf16 %v977, %v975
        %v1010 = vpack.c.bf16 %v978, %v976
        %v1011 = vld [vmem:[#allocation2] sm:$0xff]
        %v1012 = vld [vmem:[#allocation2 + $0x8] sm:$0xff]
        %v1013 = vld [vmem:[#allocation2 + $0x10] sm:$0xff]
        %v1014 = vld [vmem:[#allocation2 + $0x18] sm:$0xff]
        %v1015 = vld [vmem:[#allocation2 + $0x20] sm:$0xff]
        %v1016 = vld [vmem:[#allocation2 + $0x28] sm:$0xff]
        %v1017 = vld [vmem:[#allocation2 + $0x30] sm:$0xff]
        %v1018 = vld [vmem:[#allocation2 + $0x38] sm:$0xff]
        %v1019 = vld [vmem:[#allocation2 + $0x40] sm:$0xff]
        %v1020 = vld [vmem:[#allocation2 + $0x48] sm:$0xff]
        %v1021 = vld [vmem:[#allocation2 + $0x50] sm:$0xff]
        %v1022 = vld [vmem:[#allocation2 + $0x58] sm:$0xff]
        %v1023 = vld [vmem:[#allocation2 + $0x60] sm:$0xff]
        %v1024 = vld [vmem:[#allocation2 + $0x68] sm:$0xff]
        %v1025 = vld [vmem:[#allocation2 + $0x70] sm:$0xff]
        %v1026 = vld [vmem:[#allocation2 + $0x78] sm:$0xff]
        %v1027 = vld [vmem:[#allocation2 + $0x80] sm:$0xff]
        %v1028 = vld [vmem:[#allocation2 + $0x88] sm:$0xff]
        %v1029 = vld [vmem:[#allocation2 + $0x90] sm:$0xff]
        %v1030 = vld [vmem:[#allocation2 + $0x98] sm:$0xff]
        %v1031 = vld [vmem:[#allocation2 + $0xa0] sm:$0xff]
        %v1032 = vld [vmem:[#allocation2 + $0xa8] sm:$0xff]
        %v1033 = vld [vmem:[#allocation2 + $0xb0] sm:$0xff]
        %v1034 = vld [vmem:[#allocation2 + $0xb8] sm:$0xff]
        %v1035 = vld [vmem:[#allocation2 + $0xc0] sm:$0xff]
        %v1036 = vld [vmem:[#allocation2 + $0xc8] sm:$0xff]
        %v1037 = vld [vmem:[#allocation2 + $0xd0] sm:$0xff]
        %v1038 = vld [vmem:[#allocation2 + $0xd8] sm:$0xff]
        %v1039 = vld [vmem:[#allocation2 + $0xe0] sm:$0xff]
        %v1040 = vld [vmem:[#allocation2 + $0xe8] sm:$0xff]
        %v1041 = vld [vmem:[#allocation2 + $0xf0] sm:$0xff]
        %v1042 = vld [vmem:[#allocation2 + $0xf8] sm:$0xff]
        %v1043 = vld [vmem:[#allocation2 + $0x100] sm:$0xff]
        %v1044 = vld [vmem:[#allocation2 + $0x108] sm:$0xff]
        %v1045 = vld [vmem:[#allocation2 + $0x110] sm:$0xff]
        %v1046 = vld [vmem:[#allocation2 + $0x118] sm:$0xff]
        %v1047 = vld [vmem:[#allocation2 + $0x120] sm:$0xff]
        %v1048 = vld [vmem:[#allocation2 + $0x128] sm:$0xff]
        %v1049 = vld [vmem:[#allocation2 + $0x130] sm:$0xff]
        %v1050 = vld [vmem:[#allocation2 + $0x138] sm:$0xff]
        %v1051 = vld [vmem:[#allocation2 + $0x140] sm:$0xff]
        %v1052 = vld [vmem:[#allocation2 + $0x148] sm:$0xff]
        %v1053 = vld [vmem:[#allocation2 + $0x150] sm:$0xff]
        %v1054 = vld [vmem:[#allocation2 + $0x158] sm:$0xff]
        %v1055 = vld [vmem:[#allocation2 + $0x160] sm:$0xff]
        %v1056 = vld [vmem:[#allocation2 + $0x168] sm:$0xff]
        %v1057 = vld [vmem:[#allocation2 + $0x170] sm:$0xff]
        %v1058 = vld [vmem:[#allocation2 + $0x178] sm:$0xff]
        %v1059 = vld [vmem:[#allocation2 + $0x180] sm:$0xff]
        %v1060 = vld [vmem:[#allocation2 + $0x188] sm:$0xff]
        %v1061 = vld [vmem:[#allocation2 + $0x190] sm:$0xff]
        %v1062 = vld [vmem:[#allocation2 + $0x198] sm:$0xff]
        %v1063 = vld [vmem:[#allocation2 + $0x1a0] sm:$0xff]
        %v1064 = vld [vmem:[#allocation2 + $0x1a8] sm:$0xff]
        %v1065 = vld [vmem:[#allocation2 + $0x1b0] sm:$0xff]
        %v1066 = vld [vmem:[#allocation2 + $0x1b8] sm:$0xff]
        %v1067 = vld [vmem:[#allocation2 + $0x1c0] sm:$0xff]
        %v1068 = vld [vmem:[#allocation2 + $0x1c8] sm:$0xff]
        %v1069 = vld [vmem:[#allocation2 + $0x1d0] sm:$0xff]
        %v1070 = vld [vmem:[#allocation2 + $0x1d8] sm:$0xff]
        %v1071 = vld [vmem:[#allocation2 + $0x1e0] sm:$0xff]
        %v1072 = vld [vmem:[#allocation2 + $0x1e8] sm:$0xff]
        %v1073 = vld [vmem:[#allocation2 + $0x1f0] sm:$0xff]
        %v1074 = vld [vmem:[#allocation2 + $0x1f8] sm:$0xff]
        %v1075 = vld [vmem:[#allocation2 + $0x200] sm:$0xff]
        %v1076 = vld [vmem:[#allocation2 + $0x208] sm:$0xff]
        %v1077 = vld [vmem:[#allocation2 + $0x210] sm:$0xff]
        %v1078 = vld [vmem:[#allocation2 + $0x218] sm:$0xff]
        %v1079 = vld [vmem:[#allocation2 + $0x220] sm:$0xff]
        %v1080 = vld [vmem:[#allocation2 + $0x228] sm:$0xff]
        %v1081 = vld [vmem:[#allocation2 + $0x230] sm:$0xff]
        %v1082 = vld [vmem:[#allocation2 + $0x238] sm:$0xff]
        %v1083 = vld [vmem:[#allocation2 + $0x240] sm:$0xff]
        %v1084 = vld [vmem:[#allocation2 + $0x248] sm:$0xff]
        %v1085 = vld [vmem:[#allocation2 + $0x250] sm:$0xff]
        %v1086 = vld [vmem:[#allocation2 + $0x258] sm:$0xff]
        %v1087 = vld [vmem:[#allocation2 + $0x260] sm:$0xff]
        %v1088 = vld [vmem:[#allocation2 + $0x268] sm:$0xff]
        %v1089 = vld [vmem:[#allocation2 + $0x270] sm:$0xff]
        %v1090 = vld [vmem:[#allocation2 + $0x278] sm:$0xff]
        %v1091 = vld [vmem:[#allocation2 + $0x280] sm:$0xff]
        %v1092 = vld [vmem:[#allocation2 + $0x288] sm:$0xff]
        %v1093 = vld [vmem:[#allocation2 + $0x290] sm:$0xff]
        %v1094 = vld [vmem:[#allocation2 + $0x298] sm:$0xff]
        %v1095 = vld [vmem:[#allocation2 + $0x2a0] sm:$0xff]
        %v1096 = vld [vmem:[#allocation2 + $0x2a8] sm:$0xff]
        %v1097 = vld [vmem:[#allocation2 + $0x2b0] sm:$0xff]
        %v1098 = vld [vmem:[#allocation2 + $0x2b8] sm:$0xff]
        %v1099 = vld [vmem:[#allocation2 + $0x2c0] sm:$0xff]
        %v1100 = vld [vmem:[#allocation2 + $0x2c8] sm:$0xff]
        %v1101 = vld [vmem:[#allocation2 + $0x2d0] sm:$0xff]
        %v1102 = vld [vmem:[#allocation2 + $0x2d8] sm:$0xff]
        %v1103 = vld [vmem:[#allocation2 + $0x2e0] sm:$0xff]
        %v1104 = vld [vmem:[#allocation2 + $0x2e8] sm:$0xff]
        %v1105 = vld [vmem:[#allocation2 + $0x2f0] sm:$0xff]
        %v1106 = vld [vmem:[#allocation2 + $0x2f8] sm:$0xff]
        %v1107 = vld [vmem:[#allocation2 + $0x300] sm:$0xff]
        %v1108 = vld [vmem:[#allocation2 + $0x308] sm:$0xff]
        %v1109 = vld [vmem:[#allocation2 + $0x310] sm:$0xff]
        %v1110 = vld [vmem:[#allocation2 + $0x318] sm:$0xff]
        %v1111 = vld [vmem:[#allocation2 + $0x320] sm:$0xff]
        %v1112 = vld [vmem:[#allocation2 + $0x328] sm:$0xff]
        %v1113 = vld [vmem:[#allocation2 + $0x330] sm:$0xff]
        %v1114 = vld [vmem:[#allocation2 + $0x338] sm:$0xff]
        %v1115 = vld [vmem:[#allocation2 + $0x340] sm:$0xff]
        %v1116 = vld [vmem:[#allocation2 + $0x348] sm:$0xff]
        %v1117 = vld [vmem:[#allocation2 + $0x350] sm:$0xff]
        %v1118 = vld [vmem:[#allocation2 + $0x358] sm:$0xff]
        %v1119 = vld [vmem:[#allocation2 + $0x360] sm:$0xff]
        %v1120 = vld [vmem:[#allocation2 + $0x368] sm:$0xff]
        %v1121 = vld [vmem:[#allocation2 + $0x370] sm:$0xff]
        %v1122 = vld [vmem:[#allocation2 + $0x378] sm:$0xff]
        %v1123 = vld [vmem:[#allocation2 + $0x380] sm:$0xff]
        %v1124 = vld [vmem:[#allocation2 + $0x388] sm:$0xff]
        %v1125 = vld [vmem:[#allocation2 + $0x390] sm:$0xff]
        %v1126 = vld [vmem:[#allocation2 + $0x398] sm:$0xff]
        %v1127 = vld [vmem:[#allocation2 + $0x3a0] sm:$0xff]
        %v1128 = vld [vmem:[#allocation2 + $0x3a8] sm:$0xff]
        %v1129 = vld [vmem:[#allocation2 + $0x3b0] sm:$0xff]
        %v1130 = vld [vmem:[#allocation2 + $0x3b8] sm:$0xff]
        %v1131 = vld [vmem:[#allocation2 + $0x3c0] sm:$0xff]
        %v1132 = vld [vmem:[#allocation2 + $0x3c8] sm:$0xff]
        %v1133 = vld [vmem:[#allocation2 + $0x3d0] sm:$0xff]
        %v1134 = vld [vmem:[#allocation2 + $0x3d8] sm:$0xff]
        %v1135 = vld [vmem:[#allocation2 + $0x3e0] sm:$0xff]
        %v1136 = vld [vmem:[#allocation2 + $0x3e8] sm:$0xff]
        %v1137 = vld [vmem:[#allocation2 + $0x3f0] sm:$0xff]
        %v1138 = vld [vmem:[#allocation2 + $0x3f8] sm:$0xff]
        %v1267 = vunpack.c.l.b16 %v1011
        %v1268 = vunpack.c.h.b16 %v1011
        %v1269 = vunpack.c.l.b16 %v1012
        %v1270 = vunpack.c.h.b16 %v1012
        %v1271 = vunpack.c.l.b16 %v1013
        %v1272 = vunpack.c.h.b16 %v1013
        %v1273 = vunpack.c.l.b16 %v1014
        %v1274 = vunpack.c.h.b16 %v1014
        %v1275 = vunpack.c.l.b16 %v1015
        %v1276 = vunpack.c.h.b16 %v1015
        %v1277 = vunpack.c.l.b16 %v1016
        %v1278 = vunpack.c.h.b16 %v1016
        %v1279 = vunpack.c.l.b16 %v1017
        %v1280 = vunpack.c.h.b16 %v1017
        %v1281 = vunpack.c.l.b16 %v1018
        %v1282 = vunpack.c.h.b16 %v1018
        %v1283 = vunpack.c.l.b16 %v1019
        %v1284 = vunpack.c.h.b16 %v1019
        %v1285 = vunpack.c.l.b16 %v1020
        %v1286 = vunpack.c.h.b16 %v1020
        %v1287 = vunpack.c.l.b16 %v1021
        %v1288 = vunpack.c.h.b16 %v1021
        %v1289 = vunpack.c.l.b16 %v1022
        %v1290 = vunpack.c.h.b16 %v1022
        %v1291 = vunpack.c.l.b16 %v1023
        %v1292 = vunpack.c.h.b16 %v1023
        %v1293 = vunpack.c.l.b16 %v1024
        %v1294 = vunpack.c.h.b16 %v1024
        %v1295 = vunpack.c.l.b16 %v1025
        %v1296 = vunpack.c.h.b16 %v1025
        %v1297 = vunpack.c.l.b16 %v1026
        %v1298 = vunpack.c.h.b16 %v1026
        %v1299 = vunpack.c.l.b16 %v1027
        %v1300 = vunpack.c.h.b16 %v1027
        %v1301 = vunpack.c.l.b16 %v1028
        %v1302 = vunpack.c.h.b16 %v1028
        %v1303 = vunpack.c.l.b16 %v1029
        %v1304 = vunpack.c.h.b16 %v1029
        %v1305 = vunpack.c.l.b16 %v1030
        %v1306 = vunpack.c.h.b16 %v1030
        %v1307 = vunpack.c.l.b16 %v1031
        %v1308 = vunpack.c.h.b16 %v1031
        %v1309 = vunpack.c.l.b16 %v1032
        %v1310 = vunpack.c.h.b16 %v1032
        %v1311 = vunpack.c.l.b16 %v1033
        %v1312 = vunpack.c.h.b16 %v1033
        %v1313 = vunpack.c.l.b16 %v1034
        %v1314 = vunpack.c.h.b16 %v1034
        %v1315 = vunpack.c.l.b16 %v1035
        %v1316 = vunpack.c.h.b16 %v1035
        %v1317 = vunpack.c.l.b16 %v1036
        %v1318 = vunpack.c.h.b16 %v1036
        %v1319 = vunpack.c.l.b16 %v1037
        %v1320 = vunpack.c.h.b16 %v1037
        %v1321 = vunpack.c.l.b16 %v1038
        %v1322 = vunpack.c.h.b16 %v1038
        %v1323 = vunpack.c.l.b16 %v1039
        %v1324 = vunpack.c.h.b16 %v1039
        %v1325 = vunpack.c.l.b16 %v1040
        %v1326 = vunpack.c.h.b16 %v1040
        %v1327 = vunpack.c.l.b16 %v1041
        %v1328 = vunpack.c.h.b16 %v1041
        %v1329 = vunpack.c.l.b16 %v1042
        %v1330 = vunpack.c.h.b16 %v1042
        %v1331 = vunpack.c.l.b16 %v1043
        %v1332 = vunpack.c.h.b16 %v1043
        %v1333 = vunpack.c.l.b16 %v1044
        %v1334 = vunpack.c.h.b16 %v1044
        %v1335 = vunpack.c.l.b16 %v1045
        %v1336 = vunpack.c.h.b16 %v1045
        %v1337 = vunpack.c.l.b16 %v1046
        %v1338 = vunpack.c.h.b16 %v1046
        %v1339 = vunpack.c.l.b16 %v1047
        %v1340 = vunpack.c.h.b16 %v1047
        %v1341 = vunpack.c.l.b16 %v1048
        %v1342 = vunpack.c.h.b16 %v1048
        %v1343 = vunpack.c.l.b16 %v1049
        %v1344 = vunpack.c.h.b16 %v1049
        %v1345 = vunpack.c.l.b16 %v1050
        %v1346 = vunpack.c.h.b16 %v1050
        %v1347 = vunpack.c.l.b16 %v1051
        %v1348 = vunpack.c.h.b16 %v1051
        %v1349 = vunpack.c.l.b16 %v1052
        %v1350 = vunpack.c.h.b16 %v1052
        %v1351 = vunpack.c.l.b16 %v1053
        %v1352 = vunpack.c.h.b16 %v1053
        %v1353 = vunpack.c.l.b16 %v1054
        %v1354 = vunpack.c.h.b16 %v1054
        %v1355 = vunpack.c.l.b16 %v1055
        %v1356 = vunpack.c.h.b16 %v1055
        %v1357 = vunpack.c.l.b16 %v1056
        %v1358 = vunpack.c.h.b16 %v1056
        %v1359 = vunpack.c.l.b16 %v1057
        %v1360 = vunpack.c.h.b16 %v1057
        %v1361 = vunpack.c.l.b16 %v1058
        %v1362 = vunpack.c.h.b16 %v1058
        %v1363 = vunpack.c.l.b16 %v1059
        %v1364 = vunpack.c.h.b16 %v1059
        %v1365 = vunpack.c.l.b16 %v1060
        %v1366 = vunpack.c.h.b16 %v1060
        %v1367 = vunpack.c.l.b16 %v1061
        %v1368 = vunpack.c.h.b16 %v1061
        %v1369 = vunpack.c.l.b16 %v1062
        %v1370 = vunpack.c.h.b16 %v1062
        %v1371 = vunpack.c.l.b16 %v1063
        %v1372 = vunpack.c.h.b16 %v1063
        %v1373 = vunpack.c.l.b16 %v1064
        %v1374 = vunpack.c.h.b16 %v1064
        %v1375 = vunpack.c.l.b16 %v1065
        %v1376 = vunpack.c.h.b16 %v1065
        %v1377 = vunpack.c.l.b16 %v1066
        %v1378 = vunpack.c.h.b16 %v1066
        %v1379 = vunpack.c.l.b16 %v1067
        %v1380 = vunpack.c.h.b16 %v1067
        %v1381 = vunpack.c.l.b16 %v1068
        %v1382 = vunpack.c.h.b16 %v1068
        %v1383 = vunpack.c.l.b16 %v1069
        %v1384 = vunpack.c.h.b16 %v1069
        %v1385 = vunpack.c.l.b16 %v1070
        %v1386 = vunpack.c.h.b16 %v1070
        %v1387 = vunpack.c.l.b16 %v1071
        %v1388 = vunpack.c.h.b16 %v1071
        %v1389 = vunpack.c.l.b16 %v1072
        %v1390 = vunpack.c.h.b16 %v1072
        %v1391 = vunpack.c.l.b16 %v1073
        %v1392 = vunpack.c.h.b16 %v1073
        %v1393 = vunpack.c.l.b16 %v1074
        %v1394 = vunpack.c.h.b16 %v1074
        %v1395 = vunpack.c.l.b16 %v1075
        %v1396 = vunpack.c.h.b16 %v1075
        %v1397 = vunpack.c.l.b16 %v1076
        %v1398 = vunpack.c.h.b16 %v1076
        %v1399 = vunpack.c.l.b16 %v1077
        %v1400 = vunpack.c.h.b16 %v1077
        %v1401 = vunpack.c.l.b16 %v1078
        %v1402 = vunpack.c.h.b16 %v1078
        %v1403 = vunpack.c.l.b16 %v1079
        %v1404 = vunpack.c.h.b16 %v1079
        %v1405 = vunpack.c.l.b16 %v1080
        %v1406 = vunpack.c.h.b16 %v1080
        %v1407 = vunpack.c.l.b16 %v1081
        %v1408 = vunpack.c.h.b16 %v1081
        %v1409 = vunpack.c.l.b16 %v1082
        %v1410 = vunpack.c.h.b16 %v1082
        %v1411 = vunpack.c.l.b16 %v1083
        %v1412 = vunpack.c.h.b16 %v1083
        %v1413 = vunpack.c.l.b16 %v1084
        %v1414 = vunpack.c.h.b16 %v1084
        %v1415 = vunpack.c.l.b16 %v1085
        %v1416 = vunpack.c.h.b16 %v1085
        %v1417 = vunpack.c.l.b16 %v1086
        %v1418 = vunpack.c.h.b16 %v1086
        %v1419 = vunpack.c.l.b16 %v1087
        %v1420 = vunpack.c.h.b16 %v1087
        %v1421 = vunpack.c.l.b16 %v1088
        %v1422 = vunpack.c.h.b16 %v1088
        %v1423 = vunpack.c.l.b16 %v1089
        %v1424 = vunpack.c.h.b16 %v1089
        %v1425 = vunpack.c.l.b16 %v1090
        %v1426 = vunpack.c.h.b16 %v1090
        %v1427 = vunpack.c.l.b16 %v1091
        %v1428 = vunpack.c.h.b16 %v1091
        %v1429 = vunpack.c.l.b16 %v1092
        %v1430 = vunpack.c.h.b16 %v1092
        %v1431 = vunpack.c.l.b16 %v1093
        %v1432 = vunpack.c.h.b16 %v1093
        %v1433 = vunpack.c.l.b16 %v1094
        %v1434 = vunpack.c.h.b16 %v1094
        %v1435 = vunpack.c.l.b16 %v1095
        %v1436 = vunpack.c.h.b16 %v1095
        %v1437 = vunpack.c.l.b16 %v1096
        %v1438 = vunpack.c.h.b16 %v1096
        %v1439 = vunpack.c.l.b16 %v1097
        %v1440 = vunpack.c.h.b16 %v1097
        %v1441 = vunpack.c.l.b16 %v1098
        %v1442 = vunpack.c.h.b16 %v1098
        %v1443 = vunpack.c.l.b16 %v1099
        %v1444 = vunpack.c.h.b16 %v1099
        %v1445 = vunpack.c.l.b16 %v1100
        %v1446 = vunpack.c.h.b16 %v1100
        %v1447 = vunpack.c.l.b16 %v1101
        %v1448 = vunpack.c.h.b16 %v1101
        %v1449 = vunpack.c.l.b16 %v1102
        %v1450 = vunpack.c.h.b16 %v1102
        %v1451 = vunpack.c.l.b16 %v1103
        %v1452 = vunpack.c.h.b16 %v1103
        %v1453 = vunpack.c.l.b16 %v1104
        %v1454 = vunpack.c.h.b16 %v1104
        %v1455 = vunpack.c.l.b16 %v1105
        %v1456 = vunpack.c.h.b16 %v1105
        %v1457 = vunpack.c.l.b16 %v1106
        %v1458 = vunpack.c.h.b16 %v1106
        %v1459 = vunpack.c.l.b16 %v1107
        %v1460 = vunpack.c.h.b16 %v1107
        %v1461 = vunpack.c.l.b16 %v1108
        %v1462 = vunpack.c.h.b16 %v1108
        %v1463 = vunpack.c.l.b16 %v1109
        %v1464 = vunpack.c.h.b16 %v1109
        %v1465 = vunpack.c.l.b16 %v1110
        %v1466 = vunpack.c.h.b16 %v1110
        %v1467 = vunpack.c.l.b16 %v1111
        %v1468 = vunpack.c.h.b16 %v1111
        %v1469 = vunpack.c.l.b16 %v1112
        %v1470 = vunpack.c.h.b16 %v1112
        %v1471 = vunpack.c.l.b16 %v1113
        %v1472 = vunpack.c.h.b16 %v1113
        %v1473 = vunpack.c.l.b16 %v1114
        %v1474 = vunpack.c.h.b16 %v1114
        %v1475 = vunpack.c.l.b16 %v1115
        %v1476 = vunpack.c.h.b16 %v1115
        %v1477 = vunpack.c.l.b16 %v1116
        %v1478 = vunpack.c.h.b16 %v1116
        %v1479 = vunpack.c.l.b16 %v1117
        %v1480 = vunpack.c.h.b16 %v1117
        %v1481 = vunpack.c.l.b16 %v1118
        %v1482 = vunpack.c.h.b16 %v1118
        %v1483 = vunpack.c.l.b16 %v1119
        %v1484 = vunpack.c.h.b16 %v1119
        %v1485 = vunpack.c.l.b16 %v1120
        %v1486 = vunpack.c.h.b16 %v1120
        %v1487 = vunpack.c.l.b16 %v1121
        %v1488 = vunpack.c.h.b16 %v1121
        %v1489 = vunpack.c.l.b16 %v1122
        %v1490 = vunpack.c.h.b16 %v1122
        %v1491 = vunpack.c.l.b16 %v1123
        %v1492 = vunpack.c.h.b16 %v1123
        %v1493 = vunpack.c.l.b16 %v1124
        %v1494 = vunpack.c.h.b16 %v1124
        %v1495 = vunpack.c.l.b16 %v1125
        %v1496 = vunpack.c.h.b16 %v1125
        %v1497 = vunpack.c.l.b16 %v1126
        %v1498 = vunpack.c.h.b16 %v1126
        %v1499 = vunpack.c.l.b16 %v1127
        %v1500 = vunpack.c.h.b16 %v1127
        %v1501 = vunpack.c.l.b16 %v1128
        %v1502 = vunpack.c.h.b16 %v1128
        %v1503 = vunpack.c.l.b16 %v1129
        %v1504 = vunpack.c.h.b16 %v1129
        %v1505 = vunpack.c.l.b16 %v1130
        %v1506 = vunpack.c.h.b16 %v1130
        %v1507 = vunpack.c.l.b16 %v1131
        %v1508 = vunpack.c.h.b16 %v1131
        %v1509 = vunpack.c.l.b16 %v1132
        %v1510 = vunpack.c.h.b16 %v1132
        %v1511 = vunpack.c.l.b16 %v1133
        %v1512 = vunpack.c.h.b16 %v1133
        %v1513 = vunpack.c.l.b16 %v1134
        %v1514 = vunpack.c.h.b16 %v1134
        %v1515 = vunpack.c.l.b16 %v1135
        %v1516 = vunpack.c.h.b16 %v1135
        %v1517 = vunpack.c.l.b16 %v1136
        %v1518 = vunpack.c.h.b16 %v1136
        %v1519 = vunpack.c.l.b16 %v1137
        %v1520 = vunpack.c.h.b16 %v1137
        %v1521 = vunpack.c.l.b16 %v1138
        %v1522 = vunpack.c.h.b16 %v1138
        %v1523 = vpack.c.b16 %v1275, %v1267
        %v1524 = vpack.c.b16 %v1276, %v1268
        %v1525 = vpack.c.b16 %v1277, %v1269
        %v1526 = vpack.c.b16 %v1278, %v1270
        %v1527 = vpack.c.b16 %v1279, %v1271
        %v1528 = vpack.c.b16 %v1280, %v1272
        %v1529 = vpack.c.b16 %v1281, %v1273
        %v1530 = vpack.c.b16 %v1282, %v1274
        %v1531 = vpack.c.b16 %v1291, %v1283
        %v1532 = vpack.c.b16 %v1292, %v1284
        %v1533 = vpack.c.b16 %v1293, %v1285
        %v1534 = vpack.c.b16 %v1294, %v1286
        %v1535 = vpack.c.b16 %v1295, %v1287
        %v1536 = vpack.c.b16 %v1296, %v1288
        %v1537 = vpack.c.b16 %v1297, %v1289
        %v1538 = vpack.c.b16 %v1298, %v1290
        %v1539 = vpack.c.b16 %v1307, %v1299
        %v1540 = vpack.c.b16 %v1308, %v1300
        %v1541 = vpack.c.b16 %v1309, %v1301
        %v1542 = vpack.c.b16 %v1310, %v1302
        %v1543 = vpack.c.b16 %v1311, %v1303
        %v1544 = vpack.c.b16 %v1312, %v1304
        %v1545 = vpack.c.b16 %v1313, %v1305
        %v1546 = vpack.c.b16 %v1314, %v1306
        %v1547 = vpack.c.b16 %v1323, %v1315
        %v1548 = vpack.c.b16 %v1324, %v1316
        %v1549 = vpack.c.b16 %v1325, %v1317
        %v1550 = vpack.c.b16 %v1326, %v1318
        %v1551 = vpack.c.b16 %v1327, %v1319
        %v1552 = vpack.c.b16 %v1328, %v1320
        %v1553 = vpack.c.b16 %v1329, %v1321
        %v1554 = vpack.c.b16 %v1330, %v1322
        %v1555 = vpack.c.b16 %v1339, %v1331
        %v1556 = vpack.c.b16 %v1340, %v1332
        %v1557 = vpack.c.b16 %v1341, %v1333
        %v1558 = vpack.c.b16 %v1342, %v1334
        %v1559 = vpack.c.b16 %v1343, %v1335
        %v1560 = vpack.c.b16 %v1344, %v1336
        %v1561 = vpack.c.b16 %v1345, %v1337
        %v1562 = vpack.c.b16 %v1346, %v1338
        %v1563 = vpack.c.b16 %v1355, %v1347
        %v1564 = vpack.c.b16 %v1356, %v1348
        %v1565 = vpack.c.b16 %v1357, %v1349
        %v1566 = vpack.c.b16 %v1358, %v1350
        %v1567 = vpack.c.b16 %v1359, %v1351
        %v1568 = vpack.c.b16 %v1360, %v1352
        %v1569 = vpack.c.b16 %v1361, %v1353
        %v1570 = vpack.c.b16 %v1362, %v1354
        %v1571 = vpack.c.b16 %v1371, %v1363
        %v1572 = vpack.c.b16 %v1372, %v1364
        %v1573 = vpack.c.b16 %v1373, %v1365
        %v1574 = vpack.c.b16 %v1374, %v1366
        %v1575 = vpack.c.b16 %v1375, %v1367
        %v1576 = vpack.c.b16 %v1376, %v1368
        %v1577 = vpack.c.b16 %v1377, %v1369
        %v1578 = vpack.c.b16 %v1378, %v1370
        %v1579 = vpack.c.b16 %v1387, %v1379
        %v1580 = vpack.c.b16 %v1388, %v1380
        %v1581 = vpack.c.b16 %v1389, %v1381
        %v1582 = vpack.c.b16 %v1390, %v1382
        %v1583 = vpack.c.b16 %v1391, %v1383
        %v1584 = vpack.c.b16 %v1392, %v1384
        %v1585 = vpack.c.b16 %v1393, %v1385
        %v1586 = vpack.c.b16 %v1394, %v1386
        %v1587 = vpack.c.b16 %v1403, %v1395
        %v1588 = vpack.c.b16 %v1404, %v1396
        %v1589 = vpack.c.b16 %v1405, %v1397
        %v1590 = vpack.c.b16 %v1406, %v1398
        %v1591 = vpack.c.b16 %v1407, %v1399
        %v1592 = vpack.c.b16 %v1408, %v1400
        %v1593 = vpack.c.b16 %v1409, %v1401
        %v1594 = vpack.c.b16 %v1410, %v1402
        %v1595 = vpack.c.b16 %v1419, %v1411
        %v1596 = vpack.c.b16 %v1420, %v1412
        %v1597 = vpack.c.b16 %v1421, %v1413
        %v1598 = vpack.c.b16 %v1422, %v1414
        %v1599 = vpack.c.b16 %v1423, %v1415
        %v1600 = vpack.c.b16 %v1424, %v1416
        %v1601 = vpack.c.b16 %v1425, %v1417
        %v1602 = vpack.c.b16 %v1426, %v1418
        %v1603 = vpack.c.b16 %v1435, %v1427
        %v1604 = vpack.c.b16 %v1436, %v1428
        %v1605 = vpack.c.b16 %v1437, %v1429
        %v1606 = vpack.c.b16 %v1438, %v1430
        %v1607 = vpack.c.b16 %v1439, %v1431
        %v1608 = vpack.c.b16 %v1440, %v1432
        %v1609 = vpack.c.b16 %v1441, %v1433
        %v1610 = vpack.c.b16 %v1442, %v1434
        %v1611 = vpack.c.b16 %v1451, %v1443
        %v1612 = vpack.c.b16 %v1452, %v1444
        %v1613 = vpack.c.b16 %v1453, %v1445
        %v1614 = vpack.c.b16 %v1454, %v1446
        %v1615 = vpack.c.b16 %v1455, %v1447
        %v1616 = vpack.c.b16 %v1456, %v1448
        %v1617 = vpack.c.b16 %v1457, %v1449
        %v1618 = vpack.c.b16 %v1458, %v1450
        %v1619 = vpack.c.b16 %v1467, %v1459
        %v1620 = vpack.c.b16 %v1468, %v1460
        %v1621 = vpack.c.b16 %v1469, %v1461
        %v1622 = vpack.c.b16 %v1470, %v1462
        %v1623 = vpack.c.b16 %v1471, %v1463
        %v1624 = vpack.c.b16 %v1472, %v1464
        %v1625 = vpack.c.b16 %v1473, %v1465
        %v1626 = vpack.c.b16 %v1474, %v1466
        %v1627 = vpack.c.b16 %v1483, %v1475
        %v1628 = vpack.c.b16 %v1484, %v1476
        %v1629 = vpack.c.b16 %v1485, %v1477
        %v1630 = vpack.c.b16 %v1486, %v1478
        %v1631 = vpack.c.b16 %v1487, %v1479
        %v1632 = vpack.c.b16 %v1488, %v1480
        %v1633 = vpack.c.b16 %v1489, %v1481
        %v1634 = vpack.c.b16 %v1490, %v1482
        %v1635 = vpack.c.b16 %v1499, %v1491
        %v1636 = vpack.c.b16 %v1500, %v1492
        %v1637 = vpack.c.b16 %v1501, %v1493
        %v1638 = vpack.c.b16 %v1502, %v1494
        %v1639 = vpack.c.b16 %v1503, %v1495
        %v1640 = vpack.c.b16 %v1504, %v1496
        %v1641 = vpack.c.b16 %v1505, %v1497
        %v1642 = vpack.c.b16 %v1506, %v1498
        %v1643 = vpack.c.b16 %v1515, %v1507
        %v1644 = vpack.c.b16 %v1516, %v1508
        %v1645 = vpack.c.b16 %v1517, %v1509
        %v1646 = vpack.c.b16 %v1518, %v1510
        %v1647 = vpack.c.b16 %v1519, %v1511
        %v1648 = vpack.c.b16 %v1520, %v1512
        %v1649 = vpack.c.b16 %v1521, %v1513
        %v1650 = vpack.c.b16 %v1522, %v1514
        %1779 = vmatpush.bf16.msra.mxu0 %v1579
        %1780 = vmatpush.bf16.msra.mxu0 %v1571
        %1781 = vmatpush.bf16.msra.mxu0 %v1563
        %1782 = vmatpush.bf16.msra.mxu0 %v1555
        %1783 = vmatpush.bf16.msra.mxu0 %v1547
        %1784 = vmatpush.bf16.msra.mxu0 %v1539
        %1785 = vmatpush.bf16.msra.mxu0 %v1531
        %1786 = vmatpush.bf16.msra.mxu0 %v1523
        %1787 = vmatmul.bf16.gmra.mxu0 %v979
        %v1788 = vpop.f32.mrf.mxu0
        %v1789 = vadd.f32 0.0, %v1788
        %v1790 = vpop.f32.mrf.mxu0
        %v1791 = vadd.f32 0.0, %v1790
        %1792 = vmatmul.bf16.gmra.mxu0 %v981
        %v1793 = vpop.f32.mrf.mxu0
        %v1794 = vadd.f32 0.0, %v1793
        %v1795 = vpop.f32.mrf.mxu0
        %v1796 = vadd.f32 0.0, %v1795
        %1797 = vmatmul.bf16.gmra.mxu0 %v983
        %v1798 = vpop.f32.mrf.mxu0
        %v1799 = vadd.f32 0.0, %v1798
        %v1800 = vpop.f32.mrf.mxu0
        %v1801 = vadd.f32 0.0, %v1800
        %1802 = vmatmul.bf16.gmra.mxu0 %v985
        %v1803 = vpop.f32.mrf.mxu0
        %v1804 = vadd.f32 0.0, %v1803
        %v1805 = vpop.f32.mrf.mxu0
        %v1806 = vadd.f32 0.0, %v1805
        %1807 = vmatmul.bf16.gmra.mxu0 %v987
        %v1808 = vpop.f32.mrf.mxu0
        %v1809 = vadd.f32 0.0, %v1808
        %v1810 = vpop.f32.mrf.mxu0
        %v1811 = vadd.f32 0.0, %v1810
        %1812 = vmatmul.bf16.gmra.mxu0 %v989
        %v1813 = vpop.f32.mrf.mxu0
        %v1814 = vadd.f32 0.0, %v1813
        %v1815 = vpop.f32.mrf.mxu0
        %v1816 = vadd.f32 0.0, %v1815
        %1817 = vmatmul.bf16.gmra.mxu0 %v991
        %v1818 = vpop.f32.mrf.mxu0
        %v1819 = vadd.f32 0.0, %v1818
        %v1820 = vpop.f32.mrf.mxu0
        %v1821 = vadd.f32 0.0, %v1820
        %1822 = vmatmul.bf16.gmra.mxu0 %v993
        %v1823 = vpop.f32.mrf.mxu0
        %v1824 = vadd.f32 0.0, %v1823
        %v1825 = vpop.f32.mrf.mxu0
        %v1826 = vadd.f32 0.0, %v1825
        %1827 = vmatmul.bf16.gmra.mxu0 %v995
        %v1828 = vpop.f32.mrf.mxu0
        %v1829 = vadd.f32 0.0, %v1828
        %v1830 = vpop.f32.mrf.mxu0
        %v1831 = vadd.f32 0.0, %v1830
        %1832 = vmatmul.bf16.gmra.mxu0 %v997
        %v1833 = vpop.f32.mrf.mxu0
        %v1834 = vadd.f32 0.0, %v1833
        %v1835 = vpop.f32.mrf.mxu0
        %v1836 = vadd.f32 0.0, %v1835
        %1837 = vmatmul.bf16.gmra.mxu0 %v999
        %v1838 = vpop.f32.mrf.mxu0
        %v1839 = vadd.f32 0.0, %v1838
        %v1840 = vpop.f32.mrf.mxu0
        %v1841 = vadd.f32 0.0, %v1840
        %1842 = vmatmul.bf16.gmra.mxu0 %v1001
        %v1843 = vpop.f32.mrf.mxu0
        %v1844 = vadd.f32 0.0, %v1843
        %v1845 = vpop.f32.mrf.mxu0
        %v1846 = vadd.f32 0.0, %v1845
        %1847 = vmatmul.bf16.gmra.mxu0 %v1003
        %v1848 = vpop.f32.mrf.mxu0
        %v1849 = vadd.f32 0.0, %v1848
        %v1850 = vpop.f32.mrf.mxu0
        %v1851 = vadd.f32 0.0, %v1850
        %1852 = vmatmul.bf16.gmra.mxu0 %v1005
        %v1853 = vpop.f32.mrf.mxu0
        %v1854 = vadd.f32 0.0, %v1853
        %v1855 = vpop.f32.mrf.mxu0
        %v1856 = vadd.f32 0.0, %v1855
        %1857 = vmatmul.bf16.gmra.mxu0 %v1007
        %v1858 = vpop.f32.mrf.mxu0
        %v1859 = vadd.f32 0.0, %v1858
        %v1860 = vpop.f32.mrf.mxu0
        %v1861 = vadd.f32 0.0, %v1860
        %1862 = vmatmul.bf16.gmra.mxu0 %v1009
        %v1863 = vpop.f32.mrf.mxu0
        %v1864 = vadd.f32 0.0, %v1863
        %v1865 = vpop.f32.mrf.mxu0
        %v1866 = vadd.f32 0.0, %v1865
        %1867 = vdwg.mxu0
        %1868 = vmatpush.bf16.msra.mxu0 %v1643
        %1869 = vmatpush.bf16.msra.mxu0 %v1635
        %1870 = vmatpush.bf16.msra.mxu0 %v1627
        %1871 = vmatpush.bf16.msra.mxu0 %v1619
        %1872 = vmatpush.bf16.msra.mxu0 %v1611
        %1873 = vmatpush.bf16.msra.mxu0 %v1603
        %1874 = vmatpush.bf16.msra.mxu0 %v1595
        %1875 = vmatpush.bf16.msra.mxu0 %v1587
        %1876 = vmatmul.bf16.gmra.mxu0 %v980
        %v1877 = vpop.f32.mrf.mxu0
        %v1878 = vadd.f32 %v1789, %v1877
        %v1879 = vpop.f32.mrf.mxu0
        %v1880 = vadd.f32 %v1791, %v1879
        %1881 = vmatmul.bf16.gmra.mxu0 %v982
        %v1882 = vpop.f32.mrf.mxu0
        %v1883 = vadd.f32 %v1794, %v1882
        %v1884 = vpop.f32.mrf.mxu0
        %v1885 = vadd.f32 %v1796, %v1884
        %1886 = vmatmul.bf16.gmra.mxu0 %v984
        %v1887 = vpop.f32.mrf.mxu0
        %v1888 = vadd.f32 %v1799, %v1887
        %v1889 = vpop.f32.mrf.mxu0
        %v1890 = vadd.f32 %v1801, %v1889
        %1891 = vmatmul.bf16.gmra.mxu0 %v986
        %v1892 = vpop.f32.mrf.mxu0
        %v1893 = vadd.f32 %v1804, %v1892
        %v1894 = vpop.f32.mrf.mxu0
        %v1895 = vadd.f32 %v1806, %v1894
        %1896 = vmatmul.bf16.gmra.mxu0 %v988
        %v1897 = vpop.f32.mrf.mxu0
        %v1898 = vadd.f32 %v1809, %v1897
        %v1899 = vpop.f32.mrf.mxu0
        %v1900 = vadd.f32 %v1811, %v1899
        %1901 = vmatmul.bf16.gmra.mxu0 %v990
        %v1902 = vpop.f32.mrf.mxu0
        %v1903 = vadd.f32 %v1814, %v1902
        %v1904 = vpop.f32.mrf.mxu0
        %v1905 = vadd.f32 %v1816, %v1904
        %1906 = vmatmul.bf16.gmra.mxu0 %v992
        %v1907 = vpop.f32.mrf.mxu0
        %v1908 = vadd.f32 %v1819, %v1907
        %v1909 = vpop.f32.mrf.mxu0
        %v1910 = vadd.f32 %v1821, %v1909
        %1911 = vmatmul.bf16.gmra.mxu0 %v994
        %v1912 = vpop.f32.mrf.mxu0
        %v1913 = vadd.f32 %v1824, %v1912
        %v1914 = vpop.f32.mrf.mxu0
        %v1915 = vadd.f32 %v1826, %v1914
        %1916 = vmatmul.bf16.gmra.mxu0 %v996
        %v1917 = vpop.f32.mrf.mxu0
        %v1918 = vadd.f32 %v1829, %v1917
        %v1919 = vpop.f32.mrf.mxu0
        %v1920 = vadd.f32 %v1831, %v1919
        %1921 = vmatmul.bf16.gmra.mxu0 %v998
        %v1922 = vpop.f32.mrf.mxu0
        %v1923 = vadd.f32 %v1834, %v1922
        %v1924 = vpop.f32.mrf.mxu0
        %v1925 = vadd.f32 %v1836, %v1924
        %1926 = vmatmul.bf16.gmra.mxu0 %v1000
        %v1927 = vpop.f32.mrf.mxu0
        %v1928 = vadd.f32 %v1839, %v1927
        %v1929 = vpop.f32.mrf.mxu0
        %v1930 = vadd.f32 %v1841, %v1929
        %1931 = vmatmul.bf16.gmra.mxu0 %v1002
        %v1932 = vpop.f32.mrf.mxu0
        %v1933 = vadd.f32 %v1844, %v1932
        %v1934 = vpop.f32.mrf.mxu0
        %v1935 = vadd.f32 %v1846, %v1934
        %1936 = vmatmul.bf16.gmra.mxu0 %v1004
        %v1937 = vpop.f32.mrf.mxu0
        %v1938 = vadd.f32 %v1849, %v1937
        %v1939 = vpop.f32.mrf.mxu0
        %v1940 = vadd.f32 %v1851, %v1939
        %1941 = vmatmul.bf16.gmra.mxu0 %v1006
        %v1942 = vpop.f32.mrf.mxu0
        %v1943 = vadd.f32 %v1854, %v1942
        %v1944 = vpop.f32.mrf.mxu0
        %v1945 = vadd.f32 %v1856, %v1944
        %1946 = vmatmul.bf16.gmra.mxu0 %v1008
        %v1947 = vpop.f32.mrf.mxu0
        %v1948 = vadd.f32 %v1859, %v1947
        %v1949 = vpop.f32.mrf.mxu0
        %v1950 = vadd.f32 %v1861, %v1949
        %1951 = vmatmul.bf16.gmra.mxu0 %v1010
        %v1952 = vpop.f32.mrf.mxu0
        %v1953 = vadd.f32 %v1864, %v1952
        %v1954 = vpop.f32.mrf.mxu0
        %v1955 = vadd.f32 %v1866, %v1954
        %1956 = vdwg.mxu0
        %1957 = vmatpush.bf16.msra.mxu0 %v1580
        %1958 = vmatpush.bf16.msra.mxu0 %v1572
        %1959 = vmatpush.bf16.msra.mxu0 %v1564
        %1960 = vmatpush.bf16.msra.mxu0 %v1556
        %1961 = vmatpush.bf16.msra.mxu0 %v1548
        %1962 = vmatpush.bf16.msra.mxu0 %v1540
        %1963 = vmatpush.bf16.msra.mxu0 %v1532
        %1964 = vmatpush.bf16.msra.mxu0 %v1524
        %1965 = vmatmul.bf16.gmra.mxu0 %v979
        %v1966 = vpop.f32.mrf.mxu0
        %v1967 = vadd.f32 0.0, %v1966
        %v1968 = vpop.f32.mrf.mxu0
        %v1969 = vadd.f32 0.0, %v1968
        %1970 = vmatmul.bf16.gmra.mxu0 %v981
        %v1971 = vpop.f32.mrf.mxu0
        %v1972 = vadd.f32 0.0, %v1971
        %v1973 = vpop.f32.mrf.mxu0
        %v1974 = vadd.f32 0.0, %v1973
        %1975 = vmatmul.bf16.gmra.mxu0 %v983
        %v1976 = vpop.f32.mrf.mxu0
        %v1977 = vadd.f32 0.0, %v1976
        %v1978 = vpop.f32.mrf.mxu0
        %v1979 = vadd.f32 0.0, %v1978
        %1980 = vmatmul.bf16.gmra.mxu0 %v985
        %v1981 = vpop.f32.mrf.mxu0
        %v1982 = vadd.f32 0.0, %v1981
        %v1983 = vpop.f32.mrf.mxu0
        %v1984 = vadd.f32 0.0, %v1983
        %1985 = vmatmul.bf16.gmra.mxu0 %v987
        %v1986 = vpop.f32.mrf.mxu0
        %v1987 = vadd.f32 0.0, %v1986
        %v1988 = vpop.f32.mrf.mxu0
        %v1989 = vadd.f32 0.0, %v1988
        %1990 = vmatmul.bf16.gmra.mxu0 %v989
        %v1991 = vpop.f32.mrf.mxu0
        %v1992 = vadd.f32 0.0, %v1991
        %v1993 = vpop.f32.mrf.mxu0
        %v1994 = vadd.f32 0.0, %v1993
        %1995 = vmatmul.bf16.gmra.mxu0 %v991
        %v1996 = vpop.f32.mrf.mxu0
        %v1997 = vadd.f32 0.0, %v1996
        %v1998 = vpop.f32.mrf.mxu0
        %v1999 = vadd.f32 0.0, %v1998
        %2000 = vmatmul.bf16.gmra.mxu0 %v993
        %v2001 = vpop.f32.mrf.mxu0
        %v2002 = vadd.f32 0.0, %v2001
        %v2003 = vpop.f32.mrf.mxu0
        %v2004 = vadd.f32 0.0, %v2003
        %2005 = vmatmul.bf16.gmra.mxu0 %v995
        %v2006 = vpop.f32.mrf.mxu0
        %v2007 = vadd.f32 0.0, %v2006
        %v2008 = vpop.f32.mrf.mxu0
        %v2009 = vadd.f32 0.0, %v2008
        %2010 = vmatmul.bf16.gmra.mxu0 %v997
        %v2011 = vpop.f32.mrf.mxu0
        %v2012 = vadd.f32 0.0, %v2011
        %v2013 = vpop.f32.mrf.mxu0
        %v2014 = vadd.f32 0.0, %v2013
        %2015 = vmatmul.bf16.gmra.mxu0 %v999
        %v2016 = vpop.f32.mrf.mxu0
        %v2017 = vadd.f32 0.0, %v2016
        %v2018 = vpop.f32.mrf.mxu0
        %v2019 = vadd.f32 0.0, %v2018
        %2020 = vmatmul.bf16.gmra.mxu0 %v1001
        %v2021 = vpop.f32.mrf.mxu0
        %v2022 = vadd.f32 0.0, %v2021
        %v2023 = vpop.f32.mrf.mxu0
        %v2024 = vadd.f32 0.0, %v2023
        %2025 = vmatmul.bf16.gmra.mxu0 %v1003
        %v2026 = vpop.f32.mrf.mxu0
        %v2027 = vadd.f32 0.0, %v2026
        %v2028 = vpop.f32.mrf.mxu0
        %v2029 = vadd.f32 0.0, %v2028
        %2030 = vmatmul.bf16.gmra.mxu0 %v1005
        %v2031 = vpop.f32.mrf.mxu0
        %v2032 = vadd.f32 0.0, %v2031
        %v2033 = vpop.f32.mrf.mxu0
        %v2034 = vadd.f32 0.0, %v2033
        %2035 = vmatmul.bf16.gmra.mxu0 %v1007
        %v2036 = vpop.f32.mrf.mxu0
        %v2037 = vadd.f32 0.0, %v2036
        %v2038 = vpop.f32.mrf.mxu0
        %v2039 = vadd.f32 0.0, %v2038
        %2040 = vmatmul.bf16.gmra.mxu0 %v1009
        %v2041 = vpop.f32.mrf.mxu0
        %v2042 = vadd.f32 0.0, %v2041
        %v2043 = vpop.f32.mrf.mxu0
        %v2044 = vadd.f32 0.0, %v2043
        %2045 = vdwg.mxu0
        %2046 = vmatpush.bf16.msra.mxu0 %v1644
        %2047 = vmatpush.bf16.msra.mxu0 %v1636
        %2048 = vmatpush.bf16.msra.mxu0 %v1628
        %2049 = vmatpush.bf16.msra.mxu0 %v1620
        %2050 = vmatpush.bf16.msra.mxu0 %v1612
        %2051 = vmatpush.bf16.msra.mxu0 %v1604
        %2052 = vmatpush.bf16.msra.mxu0 %v1596
        %2053 = vmatpush.bf16.msra.mxu0 %v1588
        %2054 = vmatmul.bf16.gmra.mxu0 %v980
        %v2055 = vpop.f32.mrf.mxu0
        %v2056 = vadd.f32 %v1967, %v2055
        %v2057 = vpop.f32.mrf.mxu0
        %v2058 = vadd.f32 %v1969, %v2057
        %2059 = vmatmul.bf16.gmra.mxu0 %v982
        %v2060 = vpop.f32.mrf.mxu0
        %v2061 = vadd.f32 %v1972, %v2060
        %v2062 = vpop.f32.mrf.mxu0
        %v2063 = vadd.f32 %v1974, %v2062
        %2064 = vmatmul.bf16.gmra.mxu0 %v984
        %v2065 = vpop.f32.mrf.mxu0
        %v2066 = vadd.f32 %v1977, %v2065
        %v2067 = vpop.f32.mrf.mxu0
        %v2068 = vadd.f32 %v1979, %v2067
        %2069 = vmatmul.bf16.gmra.mxu0 %v986
        %v2070 = vpop.f32.mrf.mxu0
        %v2071 = vadd.f32 %v1982, %v2070
        %v2072 = vpop.f32.mrf.mxu0
        %v2073 = vadd.f32 %v1984, %v2072
        %2074 = vmatmul.bf16.gmra.mxu0 %v988
        %v2075 = vpop.f32.mrf.mxu0
        %v2076 = vadd.f32 %v1987, %v2075
        %v2077 = vpop.f32.mrf.mxu0
        %v2078 = vadd.f32 %v1989, %v2077
        %2079 = vmatmul.bf16.gmra.mxu0 %v990
        %v2080 = vpop.f32.mrf.mxu0
        %v2081 = vadd.f32 %v1992, %v2080
        %v2082 = vpop.f32.mrf.mxu0
        %v2083 = vadd.f32 %v1994, %v2082
        %2084 = vmatmul.bf16.gmra.mxu0 %v992
        %v2085 = vpop.f32.mrf.mxu0
        %v2086 = vadd.f32 %v1997, %v2085
        %v2087 = vpop.f32.mrf.mxu0
        %v2088 = vadd.f32 %v1999, %v2087
        %2089 = vmatmul.bf16.gmra.mxu0 %v994
        %v2090 = vpop.f32.mrf.mxu0
        %v2091 = vadd.f32 %v2002, %v2090
        %v2092 = vpop.f32.mrf.mxu0
        %v2093 = vadd.f32 %v2004, %v2092
        %2094 = vmatmul.bf16.gmra.mxu0 %v996
        %v2095 = vpop.f32.mrf.mxu0
        %v2096 = vadd.f32 %v2007, %v2095
        %v2097 = vpop.f32.mrf.mxu0
        %v2098 = vadd.f32 %v2009, %v2097
        %2099 = vmatmul.bf16.gmra.mxu0 %v998
        %v2100 = vpop.f32.mrf.mxu0
        %v2101 = vadd.f32 %v2012, %v2100
        %v2102 = vpop.f32.mrf.mxu0
        %v2103 = vadd.f32 %v2014, %v2102
        %2104 = vmatmul.bf16.gmra.mxu0 %v1000
        %v2105 = vpop.f32.mrf.mxu0
        %v2106 = vadd.f32 %v2017, %v2105
        %v2107 = vpop.f32.mrf.mxu0
        %v2108 = vadd.f32 %v2019, %v2107
        %2109 = vmatmul.bf16.gmra.mxu0 %v1002
        %v2110 = vpop.f32.mrf.mxu0
        %v2111 = vadd.f32 %v2022, %v2110
        %v2112 = vpop.f32.mrf.mxu0
        %v2113 = vadd.f32 %v2024, %v2112
        %2114 = vmatmul.bf16.gmra.mxu0 %v1004
        %v2115 = vpop.f32.mrf.mxu0
        %v2116 = vadd.f32 %v2027, %v2115
        %v2117 = vpop.f32.mrf.mxu0
        %v2118 = vadd.f32 %v2029, %v2117
        %2119 = vmatmul.bf16.gmra.mxu0 %v1006
        %v2120 = vpop.f32.mrf.mxu0
        %v2121 = vadd.f32 %v2032, %v2120
        %v2122 = vpop.f32.mrf.mxu0
        %v2123 = vadd.f32 %v2034, %v2122
        %2124 = vmatmul.bf16.gmra.mxu0 %v1008
        %v2125 = vpop.f32.mrf.mxu0
        %v2126 = vadd.f32 %v2037, %v2125
        %v2127 = vpop.f32.mrf.mxu0
        %v2128 = vadd.f32 %v2039, %v2127
        %2129 = vmatmul.bf16.gmra.mxu0 %v1010
        %v2130 = vpop.f32.mrf.mxu0
        %v2131 = vadd.f32 %v2042, %v2130
        %v2132 = vpop.f32.mrf.mxu0
        %v2133 = vadd.f32 %v2044, %v2132
        %2134 = vdwg.mxu0
        %2135 = vmatpush.bf16.msra.mxu0 %v1581
        %2136 = vmatpush.bf16.msra.mxu0 %v1573
        %2137 = vmatpush.bf16.msra.mxu0 %v1565
        %2138 = vmatpush.bf16.msra.mxu0 %v1557
        %2139 = vmatpush.bf16.msra.mxu0 %v1549
        %2140 = vmatpush.bf16.msra.mxu0 %v1541
        %2141 = vmatpush.bf16.msra.mxu0 %v1533
        %2142 = vmatpush.bf16.msra.mxu0 %v1525
        %2143 = vmatmul.bf16.gmra.mxu0 %v979
        %v2144 = vpop.f32.mrf.mxu0
        %v2145 = vadd.f32 0.0, %v2144
        %v2146 = vpop.f32.mrf.mxu0
        %v2147 = vadd.f32 0.0, %v2146
        %2148 = vmatmul.bf16.gmra.mxu0 %v981
        %v2149 = vpop.f32.mrf.mxu0
        %v2150 = vadd.f32 0.0, %v2149
        %v2151 = vpop.f32.mrf.mxu0
        %v2152 = vadd.f32 0.0, %v2151
        %2153 = vmatmul.bf16.gmra.mxu0 %v983
        %v2154 = vpop.f32.mrf.mxu0
        %v2155 = vadd.f32 0.0, %v2154
        %v2156 = vpop.f32.mrf.mxu0
        %v2157 = vadd.f32 0.0, %v2156
        %2158 = vmatmul.bf16.gmra.mxu0 %v985
        %v2159 = vpop.f32.mrf.mxu0
        %v2160 = vadd.f32 0.0, %v2159
        %v2161 = vpop.f32.mrf.mxu0
        %v2162 = vadd.f32 0.0, %v2161
        %2163 = vmatmul.bf16.gmra.mxu0 %v987
        %v2164 = vpop.f32.mrf.mxu0
        %v2165 = vadd.f32 0.0, %v2164
        %v2166 = vpop.f32.mrf.mxu0
        %v2167 = vadd.f32 0.0, %v2166
        %2168 = vmatmul.bf16.gmra.mxu0 %v989
        %v2169 = vpop.f32.mrf.mxu0
        %v2170 = vadd.f32 0.0, %v2169
        %v2171 = vpop.f32.mrf.mxu0
        %v2172 = vadd.f32 0.0, %v2171
        %2173 = vmatmul.bf16.gmra.mxu0 %v991
        %v2174 = vpop.f32.mrf.mxu0
        %v2175 = vadd.f32 0.0, %v2174
        %v2176 = vpop.f32.mrf.mxu0
        %v2177 = vadd.f32 0.0, %v2176
        %2178 = vmatmul.bf16.gmra.mxu0 %v993
        %v2179 = vpop.f32.mrf.mxu0
        %v2180 = vadd.f32 0.0, %v2179
        %v2181 = vpop.f32.mrf.mxu0
        %v2182 = vadd.f32 0.0, %v2181
        %2183 = vmatmul.bf16.gmra.mxu0 %v995
        %v2184 = vpop.f32.mrf.mxu0
        %v2185 = vadd.f32 0.0, %v2184
        %v2186 = vpop.f32.mrf.mxu0
        %v2187 = vadd.f32 0.0, %v2186
        %2188 = vmatmul.bf16.gmra.mxu0 %v997
        %v2189 = vpop.f32.mrf.mxu0
        %v2190 = vadd.f32 0.0, %v2189
        %v2191 = vpop.f32.mrf.mxu0
        %v2192 = vadd.f32 0.0, %v2191
        %2193 = vmatmul.bf16.gmra.mxu0 %v999
        %v2194 = vpop.f32.mrf.mxu0
        %v2195 = vadd.f32 0.0, %v2194
        %v2196 = vpop.f32.mrf.mxu0
        %v2197 = vadd.f32 0.0, %v2196
        %2198 = vmatmul.bf16.gmra.mxu0 %v1001
        %v2199 = vpop.f32.mrf.mxu0
        %v2200 = vadd.f32 0.0, %v2199
        %v2201 = vpop.f32.mrf.mxu0
        %v2202 = vadd.f32 0.0, %v2201
        %2203 = vmatmul.bf16.gmra.mxu0 %v1003
        %v2204 = vpop.f32.mrf.mxu0
        %v2205 = vadd.f32 0.0, %v2204
        %v2206 = vpop.f32.mrf.mxu0
        %v2207 = vadd.f32 0.0, %v2206
        %2208 = vmatmul.bf16.gmra.mxu0 %v1005
        %v2209 = vpop.f32.mrf.mxu0
        %v2210 = vadd.f32 0.0, %v2209
        %v2211 = vpop.f32.mrf.mxu0
        %v2212 = vadd.f32 0.0, %v2211
        %2213 = vmatmul.bf16.gmra.mxu0 %v1007
        %v2214 = vpop.f32.mrf.mxu0
        %v2215 = vadd.f32 0.0, %v2214
        %v2216 = vpop.f32.mrf.mxu0
        %v2217 = vadd.f32 0.0, %v2216
        %2218 = vmatmul.bf16.gmra.mxu0 %v1009
        %v2219 = vpop.f32.mrf.mxu0
        %v2220 = vadd.f32 0.0, %v2219
        %v2221 = vpop.f32.mrf.mxu0
        %v2222 = vadd.f32 0.0, %v2221
        %2223 = vdwg.mxu0
        %2224 = vmatpush.bf16.msra.mxu0 %v1645
        %2225 = vmatpush.bf16.msra.mxu0 %v1637
        %2226 = vmatpush.bf16.msra.mxu0 %v1629
        %2227 = vmatpush.bf16.msra.mxu0 %v1621
        %2228 = vmatpush.bf16.msra.mxu0 %v1613
        %2229 = vmatpush.bf16.msra.mxu0 %v1605
        %2230 = vmatpush.bf16.msra.mxu0 %v1597
        %2231 = vmatpush.bf16.msra.mxu0 %v1589
        %2232 = vmatmul.bf16.gmra.mxu0 %v980
        %v2233 = vpop.f32.mrf.mxu0
        %v2234 = vadd.f32 %v2145, %v2233
        %v2235 = vpop.f32.mrf.mxu0
        %v2236 = vadd.f32 %v2147, %v2235
        %2237 = vmatmul.bf16.gmra.mxu0 %v982
        %v2238 = vpop.f32.mrf.mxu0
        %v2239 = vadd.f32 %v2150, %v2238
        %v2240 = vpop.f32.mrf.mxu0
        %v2241 = vadd.f32 %v2152, %v2240
        %2242 = vmatmul.bf16.gmra.mxu0 %v984
        %v2243 = vpop.f32.mrf.mxu0
        %v2244 = vadd.f32 %v2155, %v2243
        %v2245 = vpop.f32.mrf.mxu0
        %v2246 = vadd.f32 %v2157, %v2245
        %2247 = vmatmul.bf16.gmra.mxu0 %v986
        %v2248 = vpop.f32.mrf.mxu0
        %v2249 = vadd.f32 %v2160, %v2248
        %v2250 = vpop.f32.mrf.mxu0
        %v2251 = vadd.f32 %v2162, %v2250
        %2252 = vmatmul.bf16.gmra.mxu0 %v988
        %v2253 = vpop.f32.mrf.mxu0
        %v2254 = vadd.f32 %v2165, %v2253
        %v2255 = vpop.f32.mrf.mxu0
        %v2256 = vadd.f32 %v2167, %v2255
        %2257 = vmatmul.bf16.gmra.mxu0 %v990
        %v2258 = vpop.f32.mrf.mxu0
        %v2259 = vadd.f32 %v2170, %v2258
        %v2260 = vpop.f32.mrf.mxu0
        %v2261 = vadd.f32 %v2172, %v2260
        %2262 = vmatmul.bf16.gmra.mxu0 %v992
        %v2263 = vpop.f32.mrf.mxu0
        %v2264 = vadd.f32 %v2175, %v2263
        %v2265 = vpop.f32.mrf.mxu0
        %v2266 = vadd.f32 %v2177, %v2265
        %2267 = vmatmul.bf16.gmra.mxu0 %v994
        %v2268 = vpop.f32.mrf.mxu0
        %v2269 = vadd.f32 %v2180, %v2268
        %v2270 = vpop.f32.mrf.mxu0
        %v2271 = vadd.f32 %v2182, %v2270
        %2272 = vmatmul.bf16.gmra.mxu0 %v996
        %v2273 = vpop.f32.mrf.mxu0
        %v2274 = vadd.f32 %v2185, %v2273
        %v2275 = vpop.f32.mrf.mxu0
        %v2276 = vadd.f32 %v2187, %v2275
        %2277 = vmatmul.bf16.gmra.mxu0 %v998
        %v2278 = vpop.f32.mrf.mxu0
        %v2279 = vadd.f32 %v2190, %v2278
        %v2280 = vpop.f32.mrf.mxu0
        %v2281 = vadd.f32 %v2192, %v2280
        %2282 = vmatmul.bf16.gmra.mxu0 %v1000
        %v2283 = vpop.f32.mrf.mxu0
        %v2284 = vadd.f32 %v2195, %v2283
        %v2285 = vpop.f32.mrf.mxu0
        %v2286 = vadd.f32 %v2197, %v2285
        %2287 = vmatmul.bf16.gmra.mxu0 %v1002
        %v2288 = vpop.f32.mrf.mxu0
        %v2289 = vadd.f32 %v2200, %v2288
        %v2290 = vpop.f32.mrf.mxu0
        %v2291 = vadd.f32 %v2202, %v2290
        %2292 = vmatmul.bf16.gmra.mxu0 %v1004
        %v2293 = vpop.f32.mrf.mxu0
        %v2294 = vadd.f32 %v2205, %v2293
        %v2295 = vpop.f32.mrf.mxu0
        %v2296 = vadd.f32 %v2207, %v2295
        %2297 = vmatmul.bf16.gmra.mxu0 %v1006
        %v2298 = vpop.f32.mrf.mxu0
        %v2299 = vadd.f32 %v2210, %v2298
        %v2300 = vpop.f32.mrf.mxu0
        %v2301 = vadd.f32 %v2212, %v2300
        %2302 = vmatmul.bf16.gmra.mxu0 %v1008
        %v2303 = vpop.f32.mrf.mxu0
        %v2304 = vadd.f32 %v2215, %v2303
        %v2305 = vpop.f32.mrf.mxu0
        %v2306 = vadd.f32 %v2217, %v2305
        %2307 = vmatmul.bf16.gmra.mxu0 %v1010
        %v2308 = vpop.f32.mrf.mxu0
        %v2309 = vadd.f32 %v2220, %v2308
        %v2310 = vpop.f32.mrf.mxu0
        %v2311 = vadd.f32 %v2222, %v2310
        %2312 = vdwg.mxu0
        %2313 = vmatpush.bf16.msra.mxu0 %v1582
        %2314 = vmatpush.bf16.msra.mxu0 %v1574
        %2315 = vmatpush.bf16.msra.mxu0 %v1566
        %2316 = vmatpush.bf16.msra.mxu0 %v1558
        %2317 = vmatpush.bf16.msra.mxu0 %v1550
        %2318 = vmatpush.bf16.msra.mxu0 %v1542
        %2319 = vmatpush.bf16.msra.mxu0 %v1534
        %2320 = vmatpush.bf16.msra.mxu0 %v1526
        %2321 = vmatmul.bf16.gmra.mxu0 %v979
        %v2322 = vpop.f32.mrf.mxu0
        %v2323 = vadd.f32 0.0, %v2322
        %v2324 = vpop.f32.mrf.mxu0
        %v2325 = vadd.f32 0.0, %v2324
        %2326 = vmatmul.bf16.gmra.mxu0 %v981
        %v2327 = vpop.f32.mrf.mxu0
        %v2328 = vadd.f32 0.0, %v2327
        %v2329 = vpop.f32.mrf.mxu0
        %v2330 = vadd.f32 0.0, %v2329
        %2331 = vmatmul.bf16.gmra.mxu0 %v983
        %v2332 = vpop.f32.mrf.mxu0
        %v2333 = vadd.f32 0.0, %v2332
        %v2334 = vpop.f32.mrf.mxu0
        %v2335 = vadd.f32 0.0, %v2334
        %2336 = vmatmul.bf16.gmra.mxu0 %v985
        %v2337 = vpop.f32.mrf.mxu0
        %v2338 = vadd.f32 0.0, %v2337
        %v2339 = vpop.f32.mrf.mxu0
        %v2340 = vadd.f32 0.0, %v2339
        %2341 = vmatmul.bf16.gmra.mxu0 %v987
        %v2342 = vpop.f32.mrf.mxu0
        %v2343 = vadd.f32 0.0, %v2342
        %v2344 = vpop.f32.mrf.mxu0
        %v2345 = vadd.f32 0.0, %v2344
        %2346 = vmatmul.bf16.gmra.mxu0 %v989
        %v2347 = vpop.f32.mrf.mxu0
        %v2348 = vadd.f32 0.0, %v2347
        %v2349 = vpop.f32.mrf.mxu0
        %v2350 = vadd.f32 0.0, %v2349
        %2351 = vmatmul.bf16.gmra.mxu0 %v991
        %v2352 = vpop.f32.mrf.mxu0
        %v2353 = vadd.f32 0.0, %v2352
        %v2354 = vpop.f32.mrf.mxu0
        %v2355 = vadd.f32 0.0, %v2354
        %2356 = vmatmul.bf16.gmra.mxu0 %v993
        %v2357 = vpop.f32.mrf.mxu0
        %v2358 = vadd.f32 0.0, %v2357
        %v2359 = vpop.f32.mrf.mxu0
        %v2360 = vadd.f32 0.0, %v2359
        %2361 = vmatmul.bf16.gmra.mxu0 %v995
        %v2362 = vpop.f32.mrf.mxu0
        %v2363 = vadd.f32 0.0, %v2362
        %v2364 = vpop.f32.mrf.mxu0
        %v2365 = vadd.f32 0.0, %v2364
        %2366 = vmatmul.bf16.gmra.mxu0 %v997
        %v2367 = vpop.f32.mrf.mxu0
        %v2368 = vadd.f32 0.0, %v2367
        %v2369 = vpop.f32.mrf.mxu0
        %v2370 = vadd.f32 0.0, %v2369
        %2371 = vmatmul.bf16.gmra.mxu0 %v999
        %v2372 = vpop.f32.mrf.mxu0
        %v2373 = vadd.f32 0.0, %v2372
        %v2374 = vpop.f32.mrf.mxu0
        %v2375 = vadd.f32 0.0, %v2374
        %2376 = vmatmul.bf16.gmra.mxu0 %v1001
        %v2377 = vpop.f32.mrf.mxu0
        %v2378 = vadd.f32 0.0, %v2377
        %v2379 = vpop.f32.mrf.mxu0
        %v2380 = vadd.f32 0.0, %v2379
        %2381 = vmatmul.bf16.gmra.mxu0 %v1003
        %v2382 = vpop.f32.mrf.mxu0
        %v2383 = vadd.f32 0.0, %v2382
        %v2384 = vpop.f32.mrf.mxu0
        %v2385 = vadd.f32 0.0, %v2384
        %2386 = vmatmul.bf16.gmra.mxu0 %v1005
        %v2387 = vpop.f32.mrf.mxu0
        %v2388 = vadd.f32 0.0, %v2387
        %v2389 = vpop.f32.mrf.mxu0
        %v2390 = vadd.f32 0.0, %v2389
        %2391 = vmatmul.bf16.gmra.mxu0 %v1007
        %v2392 = vpop.f32.mrf.mxu0
        %v2393 = vadd.f32 0.0, %v2392
        %v2394 = vpop.f32.mrf.mxu0
        %v2395 = vadd.f32 0.0, %v2394
        %2396 = vmatmul.bf16.gmra.mxu0 %v1009
        %v2397 = vpop.f32.mrf.mxu0
        %v2398 = vadd.f32 0.0, %v2397
        %v2399 = vpop.f32.mrf.mxu0
        %v2400 = vadd.f32 0.0, %v2399
        %2401 = vdwg.mxu0
        %2402 = vmatpush.bf16.msra.mxu0 %v1646
        %2403 = vmatpush.bf16.msra.mxu0 %v1638
        %2404 = vmatpush.bf16.msra.mxu0 %v1630
        %2405 = vmatpush.bf16.msra.mxu0 %v1622
        %2406 = vmatpush.bf16.msra.mxu0 %v1614
        %2407 = vmatpush.bf16.msra.mxu0 %v1606
        %2408 = vmatpush.bf16.msra.mxu0 %v1598
        %2409 = vmatpush.bf16.msra.mxu0 %v1590
        %2410 = vmatmul.bf16.gmra.mxu0 %v980
        %v2411 = vpop.f32.mrf.mxu0
        %v2412 = vadd.f32 %v2323, %v2411
        %v2413 = vpop.f32.mrf.mxu0
        %v2414 = vadd.f32 %v2325, %v2413
        %2415 = vmatmul.bf16.gmra.mxu0 %v982
        %v2416 = vpop.f32.mrf.mxu0
        %v2417 = vadd.f32 %v2328, %v2416
        %v2418 = vpop.f32.mrf.mxu0
        %v2419 = vadd.f32 %v2330, %v2418
        %2420 = vmatmul.bf16.gmra.mxu0 %v984
        %v2421 = vpop.f32.mrf.mxu0
        %v2422 = vadd.f32 %v2333, %v2421
        %v2423 = vpop.f32.mrf.mxu0
        %v2424 = vadd.f32 %v2335, %v2423
        %2425 = vmatmul.bf16.gmra.mxu0 %v986
        %v2426 = vpop.f32.mrf.mxu0
        %v2427 = vadd.f32 %v2338, %v2426
        %v2428 = vpop.f32.mrf.mxu0
        %v2429 = vadd.f32 %v2340, %v2428
        %2430 = vmatmul.bf16.gmra.mxu0 %v988
        %v2431 = vpop.f32.mrf.mxu0
        %v2432 = vadd.f32 %v2343, %v2431
        %v2433 = vpop.f32.mrf.mxu0
        %v2434 = vadd.f32 %v2345, %v2433
        %2435 = vmatmul.bf16.gmra.mxu0 %v990
        %v2436 = vpop.f32.mrf.mxu0
        %v2437 = vadd.f32 %v2348, %v2436
        %v2438 = vpop.f32.mrf.mxu0
        %v2439 = vadd.f32 %v2350, %v2438
        %2440 = vmatmul.bf16.gmra.mxu0 %v992
        %v2441 = vpop.f32.mrf.mxu0
        %v2442 = vadd.f32 %v2353, %v2441
        %v2443 = vpop.f32.mrf.mxu0
        %v2444 = vadd.f32 %v2355, %v2443
        %2445 = vmatmul.bf16.gmra.mxu0 %v994
        %v2446 = vpop.f32.mrf.mxu0
        %v2447 = vadd.f32 %v2358, %v2446
        %v2448 = vpop.f32.mrf.mxu0
        %v2449 = vadd.f32 %v2360, %v2448
        %2450 = vmatmul.bf16.gmra.mxu0 %v996
        %v2451 = vpop.f32.mrf.mxu0
        %v2452 = vadd.f32 %v2363, %v2451
        %v2453 = vpop.f32.mrf.mxu0
        %v2454 = vadd.f32 %v2365, %v2453
        %2455 = vmatmul.bf16.gmra.mxu0 %v998
        %v2456 = vpop.f32.mrf.mxu0
        %v2457 = vadd.f32 %v2368, %v2456
        %v2458 = vpop.f32.mrf.mxu0
        %v2459 = vadd.f32 %v2370, %v2458
        %2460 = vmatmul.bf16.gmra.mxu0 %v1000
        %v2461 = vpop.f32.mrf.mxu0
        %v2462 = vadd.f32 %v2373, %v2461
        %v2463 = vpop.f32.mrf.mxu0
        %v2464 = vadd.f32 %v2375, %v2463
        %2465 = vmatmul.bf16.gmra.mxu0 %v1002
        %v2466 = vpop.f32.mrf.mxu0
        %v2467 = vadd.f32 %v2378, %v2466
        %v2468 = vpop.f32.mrf.mxu0
        %v2469 = vadd.f32 %v2380, %v2468
        %2470 = vmatmul.bf16.gmra.mxu0 %v1004
        %v2471 = vpop.f32.mrf.mxu0
        %v2472 = vadd.f32 %v2383, %v2471
        %v2473 = vpop.f32.mrf.mxu0
        %v2474 = vadd.f32 %v2385, %v2473
        %2475 = vmatmul.bf16.gmra.mxu0 %v1006
        %v2476 = vpop.f32.mrf.mxu0
        %v2477 = vadd.f32 %v2388, %v2476
        %v2478 = vpop.f32.mrf.mxu0
        %v2479 = vadd.f32 %v2390, %v2478
        %2480 = vmatmul.bf16.gmra.mxu0 %v1008
        %v2481 = vpop.f32.mrf.mxu0
        %v2482 = vadd.f32 %v2393, %v2481
        %v2483 = vpop.f32.mrf.mxu0
        %v2484 = vadd.f32 %v2395, %v2483
        %2485 = vmatmul.bf16.gmra.mxu0 %v1010
        %v2486 = vpop.f32.mrf.mxu0
        %v2487 = vadd.f32 %v2398, %v2486
        %v2488 = vpop.f32.mrf.mxu0
        %v2489 = vadd.f32 %v2400, %v2488
        %2490 = vdwg.mxu0
        %2491 = vmatpush.bf16.msra.mxu0 %v1583
        %2492 = vmatpush.bf16.msra.mxu0 %v1575
        %2493 = vmatpush.bf16.msra.mxu0 %v1567
        %2494 = vmatpush.bf16.msra.mxu0 %v1559
        %2495 = vmatpush.bf16.msra.mxu0 %v1551
        %2496 = vmatpush.bf16.msra.mxu0 %v1543
        %2497 = vmatpush.bf16.msra.mxu0 %v1535
        %2498 = vmatpush.bf16.msra.mxu0 %v1527
        %2499 = vmatmul.bf16.gmra.mxu0 %v979
        %v2500 = vpop.f32.mrf.mxu0
        %v2501 = vadd.f32 0.0, %v2500
        %v2502 = vpop.f32.mrf.mxu0
        %v2503 = vadd.f32 0.0, %v2502
        %2504 = vmatmul.bf16.gmra.mxu0 %v981
        %v2505 = vpop.f32.mrf.mxu0
        %v2506 = vadd.f32 0.0, %v2505
        %v2507 = vpop.f32.mrf.mxu0
        %v2508 = vadd.f32 0.0, %v2507
        %2509 = vmatmul.bf16.gmra.mxu0 %v983
        %v2510 = vpop.f32.mrf.mxu0
        %v2511 = vadd.f32 0.0, %v2510
        %v2512 = vpop.f32.mrf.mxu0
        %v2513 = vadd.f32 0.0, %v2512
        %2514 = vmatmul.bf16.gmra.mxu0 %v985
        %v2515 = vpop.f32.mrf.mxu0
        %v2516 = vadd.f32 0.0, %v2515
        %v2517 = vpop.f32.mrf.mxu0
        %v2518 = vadd.f32 0.0, %v2517
        %2519 = vmatmul.bf16.gmra.mxu0 %v987
        %v2520 = vpop.f32.mrf.mxu0
        %v2521 = vadd.f32 0.0, %v2520
        %v2522 = vpop.f32.mrf.mxu0
        %v2523 = vadd.f32 0.0, %v2522
        %2524 = vmatmul.bf16.gmra.mxu0 %v989
        %v2525 = vpop.f32.mrf.mxu0
        %v2526 = vadd.f32 0.0, %v2525
        %v2527 = vpop.f32.mrf.mxu0
        %v2528 = vadd.f32 0.0, %v2527
        %2529 = vmatmul.bf16.gmra.mxu0 %v991
        %v2530 = vpop.f32.mrf.mxu0
        %v2531 = vadd.f32 0.0, %v2530
        %v2532 = vpop.f32.mrf.mxu0
        %v2533 = vadd.f32 0.0, %v2532
        %2534 = vmatmul.bf16.gmra.mxu0 %v993
        %v2535 = vpop.f32.mrf.mxu0
        %v2536 = vadd.f32 0.0, %v2535
        %v2537 = vpop.f32.mrf.mxu0
        %v2538 = vadd.f32 0.0, %v2537
        %2539 = vmatmul.bf16.gmra.mxu0 %v995
        %v2540 = vpop.f32.mrf.mxu0
        %v2541 = vadd.f32 0.0, %v2540
        %v2542 = vpop.f32.mrf.mxu0
        %v2543 = vadd.f32 0.0, %v2542
        %2544 = vmatmul.bf16.gmra.mxu0 %v997
        %v2545 = vpop.f32.mrf.mxu0
        %v2546 = vadd.f32 0.0, %v2545
        %v2547 = vpop.f32.mrf.mxu0
        %v2548 = vadd.f32 0.0, %v2547
        %2549 = vmatmul.bf16.gmra.mxu0 %v999
        %v2550 = vpop.f32.mrf.mxu0
        %v2551 = vadd.f32 0.0, %v2550
        %v2552 = vpop.f32.mrf.mxu0
        %v2553 = vadd.f32 0.0, %v2552
        %2554 = vmatmul.bf16.gmra.mxu0 %v1001
        %v2555 = vpop.f32.mrf.mxu0
        %v2556 = vadd.f32 0.0, %v2555
        %v2557 = vpop.f32.mrf.mxu0
        %v2558 = vadd.f32 0.0, %v2557
        %2559 = vmatmul.bf16.gmra.mxu0 %v1003
        %v2560 = vpop.f32.mrf.mxu0
        %v2561 = vadd.f32 0.0, %v2560
        %v2562 = vpop.f32.mrf.mxu0
        %v2563 = vadd.f32 0.0, %v2562
        %2564 = vmatmul.bf16.gmra.mxu0 %v1005
        %v2565 = vpop.f32.mrf.mxu0
        %v2566 = vadd.f32 0.0, %v2565
        %v2567 = vpop.f32.mrf.mxu0
        %v2568 = vadd.f32 0.0, %v2567
        %2569 = vmatmul.bf16.gmra.mxu0 %v1007
        %v2570 = vpop.f32.mrf.mxu0
        %v2571 = vadd.f32 0.0, %v2570
        %v2572 = vpop.f32.mrf.mxu0
        %v2573 = vadd.f32 0.0, %v2572
        %2574 = vmatmul.bf16.gmra.mxu0 %v1009
        %v2575 = vpop.f32.mrf.mxu0
        %v2576 = vadd.f32 0.0, %v2575
        %v2577 = vpop.f32.mrf.mxu0
        %v2578 = vadd.f32 0.0, %v2577
        %2579 = vdwg.mxu0
        %2580 = vmatpush.bf16.msra.mxu0 %v1647
        %2581 = vmatpush.bf16.msra.mxu0 %v1639
        %2582 = vmatpush.bf16.msra.mxu0 %v1631
        %2583 = vmatpush.bf16.msra.mxu0 %v1623
        %2584 = vmatpush.bf16.msra.mxu0 %v1615
        %2585 = vmatpush.bf16.msra.mxu0 %v1607
        %2586 = vmatpush.bf16.msra.mxu0 %v1599
        %2587 = vmatpush.bf16.msra.mxu0 %v1591
        %2588 = vmatmul.bf16.gmra.mxu0 %v980
        %v2589 = vpop.f32.mrf.mxu0
        %v2590 = vadd.f32 %v2501, %v2589
        %v2591 = vpop.f32.mrf.mxu0
        %v2592 = vadd.f32 %v2503, %v2591
        %2593 = vmatmul.bf16.gmra.mxu0 %v982
        %v2594 = vpop.f32.mrf.mxu0
        %v2595 = vadd.f32 %v2506, %v2594
        %v2596 = vpop.f32.mrf.mxu0
        %v2597 = vadd.f32 %v2508, %v2596
        %2598 = vmatmul.bf16.gmra.mxu0 %v984
        %v2599 = vpop.f32.mrf.mxu0
        %v2600 = vadd.f32 %v2511, %v2599
        %v2601 = vpop.f32.mrf.mxu0
        %v2602 = vadd.f32 %v2513, %v2601
        %2603 = vmatmul.bf16.gmra.mxu0 %v986
        %v2604 = vpop.f32.mrf.mxu0
        %v2605 = vadd.f32 %v2516, %v2604
        %v2606 = vpop.f32.mrf.mxu0
        %v2607 = vadd.f32 %v2518, %v2606
        %2608 = vmatmul.bf16.gmra.mxu0 %v988
        %v2609 = vpop.f32.mrf.mxu0
        %v2610 = vadd.f32 %v2521, %v2609
        %v2611 = vpop.f32.mrf.mxu0
        %v2612 = vadd.f32 %v2523, %v2611
        %2613 = vmatmul.bf16.gmra.mxu0 %v990
        %v2614 = vpop.f32.mrf.mxu0
        %v2615 = vadd.f32 %v2526, %v2614
        %v2616 = vpop.f32.mrf.mxu0
        %v2617 = vadd.f32 %v2528, %v2616
        %2618 = vmatmul.bf16.gmra.mxu0 %v992
        %v2619 = vpop.f32.mrf.mxu0
        %v2620 = vadd.f32 %v2531, %v2619
        %v2621 = vpop.f32.mrf.mxu0
        %v2622 = vadd.f32 %v2533, %v2621
        %2623 = vmatmul.bf16.gmra.mxu0 %v994
        %v2624 = vpop.f32.mrf.mxu0
        %v2625 = vadd.f32 %v2536, %v2624
        %v2626 = vpop.f32.mrf.mxu0
        %v2627 = vadd.f32 %v2538, %v2626
        %2628 = vmatmul.bf16.gmra.mxu0 %v996
        %v2629 = vpop.f32.mrf.mxu0
        %v2630 = vadd.f32 %v2541, %v2629
        %v2631 = vpop.f32.mrf.mxu0
        %v2632 = vadd.f32 %v2543, %v2631
        %2633 = vmatmul.bf16.gmra.mxu0 %v998
        %v2634 = vpop.f32.mrf.mxu0
        %v2635 = vadd.f32 %v2546, %v2634
        %v2636 = vpop.f32.mrf.mxu0
        %v2637 = vadd.f32 %v2548, %v2636
        %2638 = vmatmul.bf16.gmra.mxu0 %v1000
        %v2639 = vpop.f32.mrf.mxu0
        %v2640 = vadd.f32 %v2551, %v2639
        %v2641 = vpop.f32.mrf.mxu0
        %v2642 = vadd.f32 %v2553, %v2641
        %2643 = vmatmul.bf16.gmra.mxu0 %v1002
        %v2644 = vpop.f32.mrf.mxu0
        %v2645 = vadd.f32 %v2556, %v2644
        %v2646 = vpop.f32.mrf.mxu0
        %v2647 = vadd.f32 %v2558, %v2646
        %2648 = vmatmul.bf16.gmra.mxu0 %v1004
        %v2649 = vpop.f32.mrf.mxu0
        %v2650 = vadd.f32 %v2561, %v2649
        %v2651 = vpop.f32.mrf.mxu0
        %v2652 = vadd.f32 %v2563, %v2651
        %2653 = vmatmul.bf16.gmra.mxu0 %v1006
        %v2654 = vpop.f32.mrf.mxu0
        %v2655 = vadd.f32 %v2566, %v2654
        %v2656 = vpop.f32.mrf.mxu0
        %v2657 = vadd.f32 %v2568, %v2656
        %2658 = vmatmul.bf16.gmra.mxu0 %v1008
        %v2659 = vpop.f32.mrf.mxu0
        %v2660 = vadd.f32 %v2571, %v2659
        %v2661 = vpop.f32.mrf.mxu0
        %v2662 = vadd.f32 %v2573, %v2661
        %2663 = vmatmul.bf16.gmra.mxu0 %v1010
        %v2664 = vpop.f32.mrf.mxu0
        %v2665 = vadd.f32 %v2576, %v2664
        %v2666 = vpop.f32.mrf.mxu0
        %v2667 = vadd.f32 %v2578, %v2666
        %2668 = vdwg.mxu0
        %2669 = vmatpush.bf16.msra.mxu0 %v1584
        %2670 = vmatpush.bf16.msra.mxu0 %v1576
        %2671 = vmatpush.bf16.msra.mxu0 %v1568
        %2672 = vmatpush.bf16.msra.mxu0 %v1560
        %2673 = vmatpush.bf16.msra.mxu0 %v1552
        %2674 = vmatpush.bf16.msra.mxu0 %v1544
        %2675 = vmatpush.bf16.msra.mxu0 %v1536
        %2676 = vmatpush.bf16.msra.mxu0 %v1528
        %2677 = vmatmul.bf16.gmra.mxu0 %v979
        %v2678 = vpop.f32.mrf.mxu0
        %v2679 = vadd.f32 0.0, %v2678
        %v2680 = vpop.f32.mrf.mxu0
        %v2681 = vadd.f32 0.0, %v2680
        %2682 = vmatmul.bf16.gmra.mxu0 %v981
        %v2683 = vpop.f32.mrf.mxu0
        %v2684 = vadd.f32 0.0, %v2683
        %v2685 = vpop.f32.mrf.mxu0
        %v2686 = vadd.f32 0.0, %v2685
        %2687 = vmatmul.bf16.gmra.mxu0 %v983
        %v2688 = vpop.f32.mrf.mxu0
        %v2689 = vadd.f32 0.0, %v2688
        %v2690 = vpop.f32.mrf.mxu0
        %v2691 = vadd.f32 0.0, %v2690
        %2692 = vmatmul.bf16.gmra.mxu0 %v985
        %v2693 = vpop.f32.mrf.mxu0
        %v2694 = vadd.f32 0.0, %v2693
        %v2695 = vpop.f32.mrf.mxu0
        %v2696 = vadd.f32 0.0, %v2695
        %2697 = vmatmul.bf16.gmra.mxu0 %v987
        %v2698 = vpop.f32.mrf.mxu0
        %v2699 = vadd.f32 0.0, %v2698
        %v2700 = vpop.f32.mrf.mxu0
        %v2701 = vadd.f32 0.0, %v2700
        %2702 = vmatmul.bf16.gmra.mxu0 %v989
        %v2703 = vpop.f32.mrf.mxu0
        %v2704 = vadd.f32 0.0, %v2703
        %v2705 = vpop.f32.mrf.mxu0
        %v2706 = vadd.f32 0.0, %v2705
        %2707 = vmatmul.bf16.gmra.mxu0 %v991
        %v2708 = vpop.f32.mrf.mxu0
        %v2709 = vadd.f32 0.0, %v2708
        %v2710 = vpop.f32.mrf.mxu0
        %v2711 = vadd.f32 0.0, %v2710
        %2712 = vmatmul.bf16.gmra.mxu0 %v993
        %v2713 = vpop.f32.mrf.mxu0
        %v2714 = vadd.f32 0.0, %v2713
        %v2715 = vpop.f32.mrf.mxu0
        %v2716 = vadd.f32 0.0, %v2715
        %2717 = vmatmul.bf16.gmra.mxu0 %v995
        %v2718 = vpop.f32.mrf.mxu0
        %v2719 = vadd.f32 0.0, %v2718
        %v2720 = vpop.f32.mrf.mxu0
        %v2721 = vadd.f32 0.0, %v2720
        %2722 = vmatmul.bf16.gmra.mxu0 %v997
        %v2723 = vpop.f32.mrf.mxu0
        %v2724 = vadd.f32 0.0, %v2723
        %v2725 = vpop.f32.mrf.mxu0
        %v2726 = vadd.f32 0.0, %v2725
        %2727 = vmatmul.bf16.gmra.mxu0 %v999
        %v2728 = vpop.f32.mrf.mxu0
        %v2729 = vadd.f32 0.0, %v2728
        %v2730 = vpop.f32.mrf.mxu0
        %v2731 = vadd.f32 0.0, %v2730
        %2732 = vmatmul.bf16.gmra.mxu0 %v1001
        %v2733 = vpop.f32.mrf.mxu0
        %v2734 = vadd.f32 0.0, %v2733
        %v2735 = vpop.f32.mrf.mxu0
        %v2736 = vadd.f32 0.0, %v2735
        %2737 = vmatmul.bf16.gmra.mxu0 %v1003
        %v2738 = vpop.f32.mrf.mxu0
        %v2739 = vadd.f32 0.0, %v2738
        %v2740 = vpop.f32.mrf.mxu0
        %v2741 = vadd.f32 0.0, %v2740
        %2742 = vmatmul.bf16.gmra.mxu0 %v1005
        %v2743 = vpop.f32.mrf.mxu0
        %v2744 = vadd.f32 0.0, %v2743
        %v2745 = vpop.f32.mrf.mxu0
        %v2746 = vadd.f32 0.0, %v2745
        %2747 = vmatmul.bf16.gmra.mxu0 %v1007
        %v2748 = vpop.f32.mrf.mxu0
        %v2749 = vadd.f32 0.0, %v2748
        %v2750 = vpop.f32.mrf.mxu0
        %v2751 = vadd.f32 0.0, %v2750
        %2752 = vmatmul.bf16.gmra.mxu0 %v1009
        %v2753 = vpop.f32.mrf.mxu0
        %v2754 = vadd.f32 0.0, %v2753
        %v2755 = vpop.f32.mrf.mxu0
        %v2756 = vadd.f32 0.0, %v2755
        %2757 = vdwg.mxu0
        %2758 = vmatpush.bf16.msra.mxu0 %v1648
        %2759 = vmatpush.bf16.msra.mxu0 %v1640
        %2760 = vmatpush.bf16.msra.mxu0 %v1632
        %2761 = vmatpush.bf16.msra.mxu0 %v1624
        %2762 = vmatpush.bf16.msra.mxu0 %v1616
        %2763 = vmatpush.bf16.msra.mxu0 %v1608
        %2764 = vmatpush.bf16.msra.mxu0 %v1600
        %2765 = vmatpush.bf16.msra.mxu0 %v1592
        %2766 = vmatmul.bf16.gmra.mxu0 %v980
        %v2767 = vpop.f32.mrf.mxu0
        %v2768 = vadd.f32 %v2679, %v2767
        %v2769 = vpop.f32.mrf.mxu0
        %v2770 = vadd.f32 %v2681, %v2769
        %2771 = vmatmul.bf16.gmra.mxu0 %v982
        %v2772 = vpop.f32.mrf.mxu0
        %v2773 = vadd.f32 %v2684, %v2772
        %v2774 = vpop.f32.mrf.mxu0
        %v2775 = vadd.f32 %v2686, %v2774
        %2776 = vmatmul.bf16.gmra.mxu0 %v984
        %v2777 = vpop.f32.mrf.mxu0
        %v2778 = vadd.f32 %v2689, %v2777
        %v2779 = vpop.f32.mrf.mxu0
        %v2780 = vadd.f32 %v2691, %v2779
        %2781 = vmatmul.bf16.gmra.mxu0 %v986
        %v2782 = vpop.f32.mrf.mxu0
        %v2783 = vadd.f32 %v2694, %v2782
        %v2784 = vpop.f32.mrf.mxu0
        %v2785 = vadd.f32 %v2696, %v2784
        %2786 = vmatmul.bf16.gmra.mxu0 %v988
        %v2787 = vpop.f32.mrf.mxu0
        %v2788 = vadd.f32 %v2699, %v2787
        %v2789 = vpop.f32.mrf.mxu0
        %v2790 = vadd.f32 %v2701, %v2789
        %2791 = vmatmul.bf16.gmra.mxu0 %v990
        %v2792 = vpop.f32.mrf.mxu0
        %v2793 = vadd.f32 %v2704, %v2792
        %v2794 = vpop.f32.mrf.mxu0
        %v2795 = vadd.f32 %v2706, %v2794
        %2796 = vmatmul.bf16.gmra.mxu0 %v992
        %v2797 = vpop.f32.mrf.mxu0
        %v2798 = vadd.f32 %v2709, %v2797
        %v2799 = vpop.f32.mrf.mxu0
        %v2800 = vadd.f32 %v2711, %v2799
        %2801 = vmatmul.bf16.gmra.mxu0 %v994
        %v2802 = vpop.f32.mrf.mxu0
        %v2803 = vadd.f32 %v2714, %v2802
        %v2804 = vpop.f32.mrf.mxu0
        %v2805 = vadd.f32 %v2716, %v2804
        %2806 = vmatmul.bf16.gmra.mxu0 %v996
        %v2807 = vpop.f32.mrf.mxu0
        %v2808 = vadd.f32 %v2719, %v2807
        %v2809 = vpop.f32.mrf.mxu0
        %v2810 = vadd.f32 %v2721, %v2809
        %2811 = vmatmul.bf16.gmra.mxu0 %v998
        %v2812 = vpop.f32.mrf.mxu0
        %v2813 = vadd.f32 %v2724, %v2812
        %v2814 = vpop.f32.mrf.mxu0
        %v2815 = vadd.f32 %v2726, %v2814
        %2816 = vmatmul.bf16.gmra.mxu0 %v1000
        %v2817 = vpop.f32.mrf.mxu0
        %v2818 = vadd.f32 %v2729, %v2817
        %v2819 = vpop.f32.mrf.mxu0
        %v2820 = vadd.f32 %v2731, %v2819
        %2821 = vmatmul.bf16.gmra.mxu0 %v1002
        %v2822 = vpop.f32.mrf.mxu0
        %v2823 = vadd.f32 %v2734, %v2822
        %v2824 = vpop.f32.mrf.mxu0
        %v2825 = vadd.f32 %v2736, %v2824
        %2826 = vmatmul.bf16.gmra.mxu0 %v1004
        %v2827 = vpop.f32.mrf.mxu0
        %v2828 = vadd.f32 %v2739, %v2827
        %v2829 = vpop.f32.mrf.mxu0
        %v2830 = vadd.f32 %v2741, %v2829
        %2831 = vmatmul.bf16.gmra.mxu0 %v1006
        %v2832 = vpop.f32.mrf.mxu0
        %v2833 = vadd.f32 %v2744, %v2832
        %v2834 = vpop.f32.mrf.mxu0
        %v2835 = vadd.f32 %v2746, %v2834
        %2836 = vmatmul.bf16.gmra.mxu0 %v1008
        %v2837 = vpop.f32.mrf.mxu0
        %v2838 = vadd.f32 %v2749, %v2837
        %v2839 = vpop.f32.mrf.mxu0
        %v2840 = vadd.f32 %v2751, %v2839
        %2841 = vmatmul.bf16.gmra.mxu0 %v1010
        %v2842 = vpop.f32.mrf.mxu0
        %v2843 = vadd.f32 %v2754, %v2842
        %v2844 = vpop.f32.mrf.mxu0
        %v2845 = vadd.f32 %v2756, %v2844
        %2846 = vdwg.mxu0
        %2847 = vmatpush.bf16.msra.mxu0 %v1585
        %2848 = vmatpush.bf16.msra.mxu0 %v1577
        %2849 = vmatpush.bf16.msra.mxu0 %v1569
        %2850 = vmatpush.bf16.msra.mxu0 %v1561
        %2851 = vmatpush.bf16.msra.mxu0 %v1553
        %2852 = vmatpush.bf16.msra.mxu0 %v1545
        %2853 = vmatpush.bf16.msra.mxu0 %v1537
        %2854 = vmatpush.bf16.msra.mxu0 %v1529
        %2855 = vmatmul.bf16.gmra.mxu0 %v979
        %v2856 = vpop.f32.mrf.mxu0
        %v2857 = vadd.f32 0.0, %v2856
        %v2858 = vpop.f32.mrf.mxu0
        %v2859 = vadd.f32 0.0, %v2858
        %2860 = vmatmul.bf16.gmra.mxu0 %v981
        %v2861 = vpop.f32.mrf.mxu0
        %v2862 = vadd.f32 0.0, %v2861
        %v2863 = vpop.f32.mrf.mxu0
        %v2864 = vadd.f32 0.0, %v2863
        %2865 = vmatmul.bf16.gmra.mxu0 %v983
        %v2866 = vpop.f32.mrf.mxu0
        %v2867 = vadd.f32 0.0, %v2866
        %v2868 = vpop.f32.mrf.mxu0
        %v2869 = vadd.f32 0.0, %v2868
        %2870 = vmatmul.bf16.gmra.mxu0 %v985
        %v2871 = vpop.f32.mrf.mxu0
        %v2872 = vadd.f32 0.0, %v2871
        %v2873 = vpop.f32.mrf.mxu0
        %v2874 = vadd.f32 0.0, %v2873
        %2875 = vmatmul.bf16.gmra.mxu0 %v987
        %v2876 = vpop.f32.mrf.mxu0
        %v2877 = vadd.f32 0.0, %v2876
        %v2878 = vpop.f32.mrf.mxu0
        %v2879 = vadd.f32 0.0, %v2878
        %2880 = vmatmul.bf16.gmra.mxu0 %v989
        %v2881 = vpop.f32.mrf.mxu0
        %v2882 = vadd.f32 0.0, %v2881
        %v2883 = vpop.f32.mrf.mxu0
        %v2884 = vadd.f32 0.0, %v2883
        %2885 = vmatmul.bf16.gmra.mxu0 %v991
        %v2886 = vpop.f32.mrf.mxu0
        %v2887 = vadd.f32 0.0, %v2886
        %v2888 = vpop.f32.mrf.mxu0
        %v2889 = vadd.f32 0.0, %v2888
        %2890 = vmatmul.bf16.gmra.mxu0 %v993
        %v2891 = vpop.f32.mrf.mxu0
        %v2892 = vadd.f32 0.0, %v2891
        %v2893 = vpop.f32.mrf.mxu0
        %v2894 = vadd.f32 0.0, %v2893
        %2895 = vmatmul.bf16.gmra.mxu0 %v995
        %v2896 = vpop.f32.mrf.mxu0
        %v2897 = vadd.f32 0.0, %v2896
        %v2898 = vpop.f32.mrf.mxu0
        %v2899 = vadd.f32 0.0, %v2898
        %2900 = vmatmul.bf16.gmra.mxu0 %v997
        %v2901 = vpop.f32.mrf.mxu0
        %v2902 = vadd.f32 0.0, %v2901
        %v2903 = vpop.f32.mrf.mxu0
        %v2904 = vadd.f32 0.0, %v2903
        %2905 = vmatmul.bf16.gmra.mxu0 %v999
        %v2906 = vpop.f32.mrf.mxu0
        %v2907 = vadd.f32 0.0, %v2906
        %v2908 = vpop.f32.mrf.mxu0
        %v2909 = vadd.f32 0.0, %v2908
        %2910 = vmatmul.bf16.gmra.mxu0 %v1001
        %v2911 = vpop.f32.mrf.mxu0
        %v2912 = vadd.f32 0.0, %v2911
        %v2913 = vpop.f32.mrf.mxu0
        %v2914 = vadd.f32 0.0, %v2913
        %2915 = vmatmul.bf16.gmra.mxu0 %v1003
        %v2916 = vpop.f32.mrf.mxu0
        %v2917 = vadd.f32 0.0, %v2916
        %v2918 = vpop.f32.mrf.mxu0
        %v2919 = vadd.f32 0.0, %v2918
        %2920 = vmatmul.bf16.gmra.mxu0 %v1005
        %v2921 = vpop.f32.mrf.mxu0
        %v2922 = vadd.f32 0.0, %v2921
        %v2923 = vpop.f32.mrf.mxu0
        %v2924 = vadd.f32 0.0, %v2923
        %2925 = vmatmul.bf16.gmra.mxu0 %v1007
        %v2926 = vpop.f32.mrf.mxu0
        %v2927 = vadd.f32 0.0, %v2926
        %v2928 = vpop.f32.mrf.mxu0
        %v2929 = vadd.f32 0.0, %v2928
        %2930 = vmatmul.bf16.gmra.mxu0 %v1009
        %v2931 = vpop.f32.mrf.mxu0
        %v2932 = vadd.f32 0.0, %v2931
        %v2933 = vpop.f32.mrf.mxu0
        %v2934 = vadd.f32 0.0, %v2933
        %2935 = vdwg.mxu0
        %2936 = vmatpush.bf16.msra.mxu0 %v1649
        %2937 = vmatpush.bf16.msra.mxu0 %v1641
        %2938 = vmatpush.bf16.msra.mxu0 %v1633
        %2939 = vmatpush.bf16.msra.mxu0 %v1625
        %2940 = vmatpush.bf16.msra.mxu0 %v1617
        %2941 = vmatpush.bf16.msra.mxu0 %v1609
        %2942 = vmatpush.bf16.msra.mxu0 %v1601
        %2943 = vmatpush.bf16.msra.mxu0 %v1593
        %2944 = vmatmul.bf16.gmra.mxu0 %v980
        %v2945 = vpop.f32.mrf.mxu0
        %v2946 = vadd.f32 %v2857, %v2945
        %v2947 = vpop.f32.mrf.mxu0
        %v2948 = vadd.f32 %v2859, %v2947
        %2949 = vmatmul.bf16.gmra.mxu0 %v982
        %v2950 = vpop.f32.mrf.mxu0
        %v2951 = vadd.f32 %v2862, %v2950
        %v2952 = vpop.f32.mrf.mxu0
        %v2953 = vadd.f32 %v2864, %v2952
        %2954 = vmatmul.bf16.gmra.mxu0 %v984
        %v2955 = vpop.f32.mrf.mxu0
        %v2956 = vadd.f32 %v2867, %v2955
        %v2957 = vpop.f32.mrf.mxu0
        %v2958 = vadd.f32 %v2869, %v2957
        %2959 = vmatmul.bf16.gmra.mxu0 %v986
        %v2960 = vpop.f32.mrf.mxu0
        %v2961 = vadd.f32 %v2872, %v2960
        %v2962 = vpop.f32.mrf.mxu0
        %v2963 = vadd.f32 %v2874, %v2962
        %2964 = vmatmul.bf16.gmra.mxu0 %v988
        %v2965 = vpop.f32.mrf.mxu0
        %v2966 = vadd.f32 %v2877, %v2965
        %v2967 = vpop.f32.mrf.mxu0
        %v2968 = vadd.f32 %v2879, %v2967
        %2969 = vmatmul.bf16.gmra.mxu0 %v990
        %v2970 = vpop.f32.mrf.mxu0
        %v2971 = vadd.f32 %v2882, %v2970
        %v2972 = vpop.f32.mrf.mxu0
        %v2973 = vadd.f32 %v2884, %v2972
        %2974 = vmatmul.bf16.gmra.mxu0 %v992
        %v2975 = vpop.f32.mrf.mxu0
        %v2976 = vadd.f32 %v2887, %v2975
        %v2977 = vpop.f32.mrf.mxu0
        %v2978 = vadd.f32 %v2889, %v2977
        %2979 = vmatmul.bf16.gmra.mxu0 %v994
        %v2980 = vpop.f32.mrf.mxu0
        %v2981 = vadd.f32 %v2892, %v2980
        %v2982 = vpop.f32.mrf.mxu0
        %v2983 = vadd.f32 %v2894, %v2982
        %2984 = vmatmul.bf16.gmra.mxu0 %v996
        %v2985 = vpop.f32.mrf.mxu0
        %v2986 = vadd.f32 %v2897, %v2985
        %v2987 = vpop.f32.mrf.mxu0
        %v2988 = vadd.f32 %v2899, %v2987
        %2989 = vmatmul.bf16.gmra.mxu0 %v998
        %v2990 = vpop.f32.mrf.mxu0
        %v2991 = vadd.f32 %v2902, %v2990
        %v2992 = vpop.f32.mrf.mxu0
        %v2993 = vadd.f32 %v2904, %v2992
        %2994 = vmatmul.bf16.gmra.mxu0 %v1000
        %v2995 = vpop.f32.mrf.mxu0
        %v2996 = vadd.f32 %v2907, %v2995
        %v2997 = vpop.f32.mrf.mxu0
        %v2998 = vadd.f32 %v2909, %v2997
        %2999 = vmatmul.bf16.gmra.mxu0 %v1002
        %v3000 = vpop.f32.mrf.mxu0
        %v3001 = vadd.f32 %v2912, %v3000
        %v3002 = vpop.f32.mrf.mxu0
        %v3003 = vadd.f32 %v2914, %v3002
        %3004 = vmatmul.bf16.gmra.mxu0 %v1004
        %v3005 = vpop.f32.mrf.mxu0
        %v3006 = vadd.f32 %v2917, %v3005
        %v3007 = vpop.f32.mrf.mxu0
        %v3008 = vadd.f32 %v2919, %v3007
        %3009 = vmatmul.bf16.gmra.mxu0 %v1006
        %v3010 = vpop.f32.mrf.mxu0
        %v3011 = vadd.f32 %v2922, %v3010
        %v3012 = vpop.f32.mrf.mxu0
        %v3013 = vadd.f32 %v2924, %v3012
        %3014 = vmatmul.bf16.gmra.mxu0 %v1008
        %v3015 = vpop.f32.mrf.mxu0
        %v3016 = vadd.f32 %v2927, %v3015
        %v3017 = vpop.f32.mrf.mxu0
        %v3018 = vadd.f32 %v2929, %v3017
        %3019 = vmatmul.bf16.gmra.mxu0 %v1010
        %v3020 = vpop.f32.mrf.mxu0
        %v3021 = vadd.f32 %v2932, %v3020
        %v3022 = vpop.f32.mrf.mxu0
        %v3023 = vadd.f32 %v2934, %v3022
        %3024 = vdwg.mxu0
        %3025 = vmatpush.bf16.msra.mxu0 %v1586
        %3026 = vmatpush.bf16.msra.mxu0 %v1578
        %3027 = vmatpush.bf16.msra.mxu0 %v1570
        %3028 = vmatpush.bf16.msra.mxu0 %v1562
        %3029 = vmatpush.bf16.msra.mxu0 %v1554
        %3030 = vmatpush.bf16.msra.mxu0 %v1546
        %3031 = vmatpush.bf16.msra.mxu0 %v1538
        %3032 = vmatpush.bf16.msra.mxu0 %v1530
        %3033 = vmatmul.bf16.gmra.mxu0 %v979
        %v3034 = vpop.f32.mrf.mxu0
        %v3035 = vadd.f32 0.0, %v3034
        %v3036 = vpop.f32.mrf.mxu0
        %v3037 = vadd.f32 0.0, %v3036
        %3038 = vmatmul.bf16.gmra.mxu0 %v981
        %v3039 = vpop.f32.mrf.mxu0
        %v3040 = vadd.f32 0.0, %v3039
        %v3041 = vpop.f32.mrf.mxu0
        %v3042 = vadd.f32 0.0, %v3041
        %3043 = vmatmul.bf16.gmra.mxu0 %v983
        %v3044 = vpop.f32.mrf.mxu0
        %v3045 = vadd.f32 0.0, %v3044
        %v3046 = vpop.f32.mrf.mxu0
        %v3047 = vadd.f32 0.0, %v3046
        %3048 = vmatmul.bf16.gmra.mxu0 %v985
        %v3049 = vpop.f32.mrf.mxu0
        %v3050 = vadd.f32 0.0, %v3049
        %v3051 = vpop.f32.mrf.mxu0
        %v3052 = vadd.f32 0.0, %v3051
        %3053 = vmatmul.bf16.gmra.mxu0 %v987
        %v3054 = vpop.f32.mrf.mxu0
        %v3055 = vadd.f32 0.0, %v3054
        %v3056 = vpop.f32.mrf.mxu0
        %v3057 = vadd.f32 0.0, %v3056
        %3058 = vmatmul.bf16.gmra.mxu0 %v989
        %v3059 = vpop.f32.mrf.mxu0
        %v3060 = vadd.f32 0.0, %v3059
        %v3061 = vpop.f32.mrf.mxu0
        %v3062 = vadd.f32 0.0, %v3061
        %3063 = vmatmul.bf16.gmra.mxu0 %v991
        %v3064 = vpop.f32.mrf.mxu0
        %v3065 = vadd.f32 0.0, %v3064
        %v3066 = vpop.f32.mrf.mxu0
        %v3067 = vadd.f32 0.0, %v3066
        %3068 = vmatmul.bf16.gmra.mxu0 %v993
        %v3069 = vpop.f32.mrf.mxu0
        %v3070 = vadd.f32 0.0, %v3069
        %v3071 = vpop.f32.mrf.mxu0
        %v3072 = vadd.f32 0.0, %v3071
        %3073 = vmatmul.bf16.gmra.mxu0 %v995
        %v3074 = vpop.f32.mrf.mxu0
        %v3075 = vadd.f32 0.0, %v3074
        %v3076 = vpop.f32.mrf.mxu0
        %v3077 = vadd.f32 0.0, %v3076
        %3078 = vmatmul.bf16.gmra.mxu0 %v997
        %v3079 = vpop.f32.mrf.mxu0
        %v3080 = vadd.f32 0.0, %v3079
        %v3081 = vpop.f32.mrf.mxu0
        %v3082 = vadd.f32 0.0, %v3081
        %3083 = vmatmul.bf16.gmra.mxu0 %v999
        %v3084 = vpop.f32.mrf.mxu0
        %v3085 = vadd.f32 0.0, %v3084
        %v3086 = vpop.f32.mrf.mxu0
        %v3087 = vadd.f32 0.0, %v3086
        %3088 = vmatmul.bf16.gmra.mxu0 %v1001
        %v3089 = vpop.f32.mrf.mxu0
        %v3090 = vadd.f32 0.0, %v3089
        %v3091 = vpop.f32.mrf.mxu0
        %v3092 = vadd.f32 0.0, %v3091
        %3093 = vmatmul.bf16.gmra.mxu0 %v1003
        %v3094 = vpop.f32.mrf.mxu0
        %v3095 = vadd.f32 0.0, %v3094
        %v3096 = vpop.f32.mrf.mxu0
        %v3097 = vadd.f32 0.0, %v3096
        %3098 = vmatmul.bf16.gmra.mxu0 %v1005
        %v3099 = vpop.f32.mrf.mxu0
        %v3100 = vadd.f32 0.0, %v3099
        %v3101 = vpop.f32.mrf.mxu0
        %v3102 = vadd.f32 0.0, %v3101
        %3103 = vmatmul.bf16.gmra.mxu0 %v1007
        %v3104 = vpop.f32.mrf.mxu0
        %v3105 = vadd.f32 0.0, %v3104
        %v3106 = vpop.f32.mrf.mxu0
        %v3107 = vadd.f32 0.0, %v3106
        %3108 = vmatmul.bf16.gmra.mxu0 %v1009
        %v3109 = vpop.f32.mrf.mxu0
        %v3110 = vadd.f32 0.0, %v3109
        %v3111 = vpop.f32.mrf.mxu0
        %v3112 = vadd.f32 0.0, %v3111
        %3113 = vdwg.mxu0
        %3114 = vmatpush.bf16.msra.mxu0 %v1650
        %3115 = vmatpush.bf16.msra.mxu0 %v1642
        %3116 = vmatpush.bf16.msra.mxu0 %v1634
        %3117 = vmatpush.bf16.msra.mxu0 %v1626
        %3118 = vmatpush.bf16.msra.mxu0 %v1618
        %3119 = vmatpush.bf16.msra.mxu0 %v1610
        %3120 = vmatpush.bf16.msra.mxu0 %v1602
        %3121 = vmatpush.bf16.msra.mxu0 %v1594
        %3122 = vmatmul.bf16.gmra.mxu0 %v980
        %v3123 = vpop.f32.mrf.mxu0
        %v3124 = vadd.f32 %v3035, %v3123
        %v3125 = vpop.f32.mrf.mxu0
        %v3126 = vadd.f32 %v3037, %v3125
        %3127 = vmatmul.bf16.gmra.mxu0 %v982
        %v3128 = vpop.f32.mrf.mxu0
        %v3129 = vadd.f32 %v3040, %v3128
        %v3130 = vpop.f32.mrf.mxu0
        %v3131 = vadd.f32 %v3042, %v3130
        %3132 = vmatmul.bf16.gmra.mxu0 %v984
        %v3133 = vpop.f32.mrf.mxu0
        %v3134 = vadd.f32 %v3045, %v3133
        %v3135 = vpop.f32.mrf.mxu0
        %v3136 = vadd.f32 %v3047, %v3135
        %3137 = vmatmul.bf16.gmra.mxu0 %v986
        %v3138 = vpop.f32.mrf.mxu0
        %v3139 = vadd.f32 %v3050, %v3138
        %v3140 = vpop.f32.mrf.mxu0
        %v3141 = vadd.f32 %v3052, %v3140
        %3142 = vmatmul.bf16.gmra.mxu0 %v988
        %v3143 = vpop.f32.mrf.mxu0
        %v3144 = vadd.f32 %v3055, %v3143
        %v3145 = vpop.f32.mrf.mxu0
        %v3146 = vadd.f32 %v3057, %v3145
        %3147 = vmatmul.bf16.gmra.mxu0 %v990
        %v3148 = vpop.f32.mrf.mxu0
        %v3149 = vadd.f32 %v3060, %v3148
        %v3150 = vpop.f32.mrf.mxu0
        %v3151 = vadd.f32 %v3062, %v3150
        %3152 = vmatmul.bf16.gmra.mxu0 %v992
        %v3153 = vpop.f32.mrf.mxu0
        %v3154 = vadd.f32 %v3065, %v3153
        %v3155 = vpop.f32.mrf.mxu0
        %v3156 = vadd.f32 %v3067, %v3155
        %3157 = vmatmul.bf16.gmra.mxu0 %v994
        %v3158 = vpop.f32.mrf.mxu0
        %v3159 = vadd.f32 %v3070, %v3158
        %v3160 = vpop.f32.mrf.mxu0
        %v3161 = vadd.f32 %v3072, %v3160
        %3162 = vmatmul.bf16.gmra.mxu0 %v996
        %v3163 = vpop.f32.mrf.mxu0
        %v3164 = vadd.f32 %v3075, %v3163
        %v3165 = vpop.f32.mrf.mxu0
        %v3166 = vadd.f32 %v3077, %v3165
        %3167 = vmatmul.bf16.gmra.mxu0 %v998
        %v3168 = vpop.f32.mrf.mxu0
        %v3169 = vadd.f32 %v3080, %v3168
        %v3170 = vpop.f32.mrf.mxu0
        %v3171 = vadd.f32 %v3082, %v3170
        %3172 = vmatmul.bf16.gmra.mxu0 %v1000
        %v3173 = vpop.f32.mrf.mxu0
        %v3174 = vadd.f32 %v3085, %v3173
        %v3175 = vpop.f32.mrf.mxu0
        %v3176 = vadd.f32 %v3087, %v3175
        %3177 = vmatmul.bf16.gmra.mxu0 %v1002
        %v3178 = vpop.f32.mrf.mxu0
        %v3179 = vadd.f32 %v3090, %v3178
        %v3180 = vpop.f32.mrf.mxu0
        %v3181 = vadd.f32 %v3092, %v3180
        %3182 = vmatmul.bf16.gmra.mxu0 %v1004
        %v3183 = vpop.f32.mrf.mxu0
        %v3184 = vadd.f32 %v3095, %v3183
        %v3185 = vpop.f32.mrf.mxu0
        %v3186 = vadd.f32 %v3097, %v3185
        %3187 = vmatmul.bf16.gmra.mxu0 %v1006
        %v3188 = vpop.f32.mrf.mxu0
        %v3189 = vadd.f32 %v3100, %v3188
        %v3190 = vpop.f32.mrf.mxu0
        %v3191 = vadd.f32 %v3102, %v3190
        %3192 = vmatmul.bf16.gmra.mxu0 %v1008
        %v3193 = vpop.f32.mrf.mxu0
        %v3194 = vadd.f32 %v3105, %v3193
        %v3195 = vpop.f32.mrf.mxu0
        %v3196 = vadd.f32 %v3107, %v3195
        %3197 = vmatmul.bf16.gmra.mxu0 %v1010
        %v3198 = vpop.f32.mrf.mxu0
        %v3199 = vadd.f32 %v3110, %v3198
        %v3200 = vpop.f32.mrf.mxu0
        %v3201 = vadd.f32 %v3112, %v3200
        %3202 = vdwg.mxu0
        %v3203 = vmax.f32 %v1878, %v1880
        %v3204 = vmax.f32 %v3203, %v1883
        %v3205 = vmax.f32 %v3204, %v1885
        %v3206 = vmax.f32 %v3205, %v1888
        %v3207 = vmax.f32 %v3206, %v1890
        %v3208 = vmax.f32 %v3207, %v1893
        %v3209 = vmax.f32 %v3208, %v1895
        %v3210 = vmax.f32 %v3209, %v1898
        %v3211 = vmax.f32 %v3210, %v1900
        %v3212 = vmax.f32 %v3211, %v1903
        %v3213 = vmax.f32 %v3212, %v1905
        %v3214 = vmax.f32 %v3213, %v1908
        %v3215 = vmax.f32 %v3214, %v1910
        %v3216 = vmax.f32 %v3215, %v1913
        %v3217 = vmax.f32 %v3216, %v1915
        %v3218 = vmax.f32 %v3217, %v1918
        %v3219 = vmax.f32 %v3218, %v1920
        %v3220 = vmax.f32 %v3219, %v1923
        %v3221 = vmax.f32 %v3220, %v1925
        %v3222 = vmax.f32 %v3221, %v1928
        %v3223 = vmax.f32 %v3222, %v1930
        %v3224 = vmax.f32 %v3223, %v1933
        %v3225 = vmax.f32 %v3224, %v1935
        %v3226 = vmax.f32 %v3225, %v1938
        %v3227 = vmax.f32 %v3226, %v1940
        %v3228 = vmax.f32 %v3227, %v1943
        %v3229 = vmax.f32 %v3228, %v1945
        %v3230 = vmax.f32 %v3229, %v1948
        %v3231 = vmax.f32 %v3230, %v1950
        %v3232 = vmax.f32 %v3231, %v1953
        %v3233 = vmax.f32 %v3232, %v1955
        %v3234 = vrot.slane %v3233, 4
        %v3235 = vmax.f32 %v3233, %v3234
        %v3236 = vrot.slane %v3235, 2
        %v3237 = vmax.f32 %v3235, %v3236
        %v3238 = vrot.slane %v3237, 1
        %v3239 = vmax.f32 %v3237, %v3238
        %v3240 = vmax.f32 %v2056, %v2058
        %v3241 = vmax.f32 %v3240, %v2061
        %v3242 = vmax.f32 %v3241, %v2063
        %v3243 = vmax.f32 %v3242, %v2066
        %v3244 = vmax.f32 %v3243, %v2068
        %v3245 = vmax.f32 %v3244, %v2071
        %v3246 = vmax.f32 %v3245, %v2073
        %v3247 = vmax.f32 %v3246, %v2076
        %v3248 = vmax.f32 %v3247, %v2078
        %v3249 = vmax.f32 %v3248, %v2081
        %v3250 = vmax.f32 %v3249, %v2083
        %v3251 = vmax.f32 %v3250, %v2086
        %v3252 = vmax.f32 %v3251, %v2088
        %v3253 = vmax.f32 %v3252, %v2091
        %v3254 = vmax.f32 %v3253, %v2093
        %v3255 = vmax.f32 %v3254, %v2096
        %v3256 = vmax.f32 %v3255, %v2098
        %v3257 = vmax.f32 %v3256, %v2101
        %v3258 = vmax.f32 %v3257, %v2103
        %v3259 = vmax.f32 %v3258, %v2106
        %v3260 = vmax.f32 %v3259, %v2108
        %v3261 = vmax.f32 %v3260, %v2111
        %v3262 = vmax.f32 %v3261, %v2113
        %v3263 = vmax.f32 %v3262, %v2116
        %v3264 = vmax.f32 %v3263, %v2118
        %v3265 = vmax.f32 %v3264, %v2121
        %v3266 = vmax.f32 %v3265, %v2123
        %v3267 = vmax.f32 %v3266, %v2126
        %v3268 = vmax.f32 %v3267, %v2128
        %v3269 = vmax.f32 %v3268, %v2131
        %v3270 = vmax.f32 %v3269, %v2133
        %v3271 = vrot.slane %v3270, 4
        %v3272 = vmax.f32 %v3270, %v3271
        %v3273 = vrot.slane %v3272, 2
        %v3274 = vmax.f32 %v3272, %v3273
        %v3275 = vrot.slane %v3274, 1
        %v3276 = vmax.f32 %v3274, %v3275
        %v3277 = vmax.f32 %v2234, %v2236
        %v3278 = vmax.f32 %v3277, %v2239
        %v3279 = vmax.f32 %v3278, %v2241
        %v3280 = vmax.f32 %v3279, %v2244
        %v3281 = vmax.f32 %v3280, %v2246
        %v3282 = vmax.f32 %v3281, %v2249
        %v3283 = vmax.f32 %v3282, %v2251
        %v3284 = vmax.f32 %v3283, %v2254
        %v3285 = vmax.f32 %v3284, %v2256
        %v3286 = vmax.f32 %v3285, %v2259
        %v3287 = vmax.f32 %v3286, %v2261
        %v3288 = vmax.f32 %v3287, %v2264
        %v3289 = vmax.f32 %v3288, %v2266
        %v3290 = vmax.f32 %v3289, %v2269
        %v3291 = vmax.f32 %v3290, %v2271
        %v3292 = vmax.f32 %v3291, %v2274
        %v3293 = vmax.f32 %v3292, %v2276
        %v3294 = vmax.f32 %v3293, %v2279
        %v3295 = vmax.f32 %v3294, %v2281
        %v3296 = vmax.f32 %v3295, %v2284
        %v3297 = vmax.f32 %v3296, %v2286
        %v3298 = vmax.f32 %v3297, %v2289
        %v3299 = vmax.f32 %v3298, %v2291
        %v3300 = vmax.f32 %v3299, %v2294
        %v3301 = vmax.f32 %v3300, %v2296
        %v3302 = vmax.f32 %v3301, %v2299
        %v3303 = vmax.f32 %v3302, %v2301
        %v3304 = vmax.f32 %v3303, %v2304
        %v3305 = vmax.f32 %v3304, %v2306
        %v3306 = vmax.f32 %v3305, %v2309
        %v3307 = vmax.f32 %v3306, %v2311
        %v3308 = vrot.slane %v3307, 4
        %v3309 = vmax.f32 %v3307, %v3308
        %v3310 = vrot.slane %v3309, 2
        %v3311 = vmax.f32 %v3309, %v3310
        %v3312 = vrot.slane %v3311, 1
        %v3313 = vmax.f32 %v3311, %v3312
        %v3314 = vmax.f32 %v2412, %v2414
        %v3315 = vmax.f32 %v3314, %v2417
        %v3316 = vmax.f32 %v3315, %v2419
        %v3317 = vmax.f32 %v3316, %v2422
        %v3318 = vmax.f32 %v3317, %v2424
        %v3319 = vmax.f32 %v3318, %v2427
        %v3320 = vmax.f32 %v3319, %v2429
        %v3321 = vmax.f32 %v3320, %v2432
        %v3322 = vmax.f32 %v3321, %v2434
        %v3323 = vmax.f32 %v3322, %v2437
        %v3324 = vmax.f32 %v3323, %v2439
        %v3325 = vmax.f32 %v3324, %v2442
        %v3326 = vmax.f32 %v3325, %v2444
        %v3327 = vmax.f32 %v3326, %v2447
        %v3328 = vmax.f32 %v3327, %v2449
        %v3329 = vmax.f32 %v3328, %v2452
        %v3330 = vmax.f32 %v3329, %v2454
        %v3331 = vmax.f32 %v3330, %v2457
        %v3332 = vmax.f32 %v3331, %v2459
        %v3333 = vmax.f32 %v3332, %v2462
        %v3334 = vmax.f32 %v3333, %v2464
        %v3335 = vmax.f32 %v3334, %v2467
        %v3336 = vmax.f32 %v3335, %v2469
        %v3337 = vmax.f32 %v3336, %v2472
        %v3338 = vmax.f32 %v3337, %v2474
        %v3339 = vmax.f32 %v3338, %v2477
        %v3340 = vmax.f32 %v3339, %v2479
        %v3341 = vmax.f32 %v3340, %v2482
        %v3342 = vmax.f32 %v3341, %v2484
        %v3343 = vmax.f32 %v3342, %v2487
        %v3344 = vmax.f32 %v3343, %v2489
        %v3345 = vrot.slane %v3344, 4
        %v3346 = vmax.f32 %v3344, %v3345
        %v3347 = vrot.slane %v3346, 2
        %v3348 = vmax.f32 %v3346, %v3347
        %v3349 = vrot.slane %v3348, 1
        %v3350 = vmax.f32 %v3348, %v3349
        %v3351 = vmax.f32 %v2590, %v2592
        %v3352 = vmax.f32 %v3351, %v2595
        %v3353 = vmax.f32 %v3352, %v2597
        %v3354 = vmax.f32 %v3353, %v2600
        %v3355 = vmax.f32 %v3354, %v2602
        %v3356 = vmax.f32 %v3355, %v2605
        %v3357 = vmax.f32 %v3356, %v2607
        %v3358 = vmax.f32 %v3357, %v2610
        %v3359 = vmax.f32 %v3358, %v2612
        %v3360 = vmax.f32 %v3359, %v2615
        %v3361 = vmax.f32 %v3360, %v2617
        %v3362 = vmax.f32 %v3361, %v2620
        %v3363 = vmax.f32 %v3362, %v2622
        %v3364 = vmax.f32 %v3363, %v2625
        %v3365 = vmax.f32 %v3364, %v2627
        %v3366 = vmax.f32 %v3365, %v2630
        %v3367 = vmax.f32 %v3366, %v2632
        %v3368 = vmax.f32 %v3367, %v2635
        %v3369 = vmax.f32 %v3368, %v2637
        %v3370 = vmax.f32 %v3369, %v2640
        %v3371 = vmax.f32 %v3370, %v2642
        %v3372 = vmax.f32 %v3371, %v2645
        %v3373 = vmax.f32 %v3372, %v2647
        %v3374 = vmax.f32 %v3373, %v2650
        %v3375 = vmax.f32 %v3374, %v2652
        %v3376 = vmax.f32 %v3375, %v2655
        %v3377 = vmax.f32 %v3376, %v2657
        %v3378 = vmax.f32 %v3377, %v2660
        %v3379 = vmax.f32 %v3378, %v2662
        %v3380 = vmax.f32 %v3379, %v2665
        %v3381 = vmax.f32 %v3380, %v2667
        %v3382 = vrot.slane %v3381, 4
        %v3383 = vmax.f32 %v3381, %v3382
        %v3384 = vrot.slane %v3383, 2
        %v3385 = vmax.f32 %v3383, %v3384
        %v3386 = vrot.slane %v3385, 1
        %v3387 = vmax.f32 %v3385, %v3386
        %v3388 = vmax.f32 %v2768, %v2770
        %v3389 = vmax.f32 %v3388, %v2773
        %v3390 = vmax.f32 %v3389, %v2775
        %v3391 = vmax.f32 %v3390, %v2778
        %v3392 = vmax.f32 %v3391, %v2780
        %v3393 = vmax.f32 %v3392, %v2783
        %v3394 = vmax.f32 %v3393, %v2785
        %v3395 = vmax.f32 %v3394, %v2788
        %v3396 = vmax.f32 %v3395, %v2790
        %v3397 = vmax.f32 %v3396, %v2793
        %v3398 = vmax.f32 %v3397, %v2795
        %v3399 = vmax.f32 %v3398, %v2798
        %v3400 = vmax.f32 %v3399, %v2800
        %v3401 = vmax.f32 %v3400, %v2803
        %v3402 = vmax.f32 %v3401, %v2805
        %v3403 = vmax.f32 %v3402, %v2808
        %v3404 = vmax.f32 %v3403, %v2810
        %v3405 = vmax.f32 %v3404, %v2813
        %v3406 = vmax.f32 %v3405, %v2815
        %v3407 = vmax.f32 %v3406, %v2818
        %v3408 = vmax.f32 %v3407, %v2820
        %v3409 = vmax.f32 %v3408, %v2823
        %v3410 = vmax.f32 %v3409, %v2825
        %v3411 = vmax.f32 %v3410, %v2828
        %v3412 = vmax.f32 %v3411, %v2830
        %v3413 = vmax.f32 %v3412, %v2833
        %v3414 = vmax.f32 %v3413, %v2835
        %v3415 = vmax.f32 %v3414, %v2838
        %v3416 = vmax.f32 %v3415, %v2840
        %v3417 = vmax.f32 %v3416, %v2843
        %v3418 = vmax.f32 %v3417, %v2845
        %v3419 = vrot.slane %v3418, 4
        %v3420 = vmax.f32 %v3418, %v3419
        %v3421 = vrot.slane %v3420, 2
        %v3422 = vmax.f32 %v3420, %v3421
        %v3423 = vrot.slane %v3422, 1
        %v3424 = vmax.f32 %v3422, %v3423
        %v3425 = vmax.f32 %v2946, %v2948
        %v3426 = vmax.f32 %v3425, %v2951
        %v3427 = vmax.f32 %v3426, %v2953
        %v3428 = vmax.f32 %v3427, %v2956
        %v3429 = vmax.f32 %v3428, %v2958
        %v3430 = vmax.f32 %v3429, %v2961
        %v3431 = vmax.f32 %v3430, %v2963
        %v3432 = vmax.f32 %v3431, %v2966
        %v3433 = vmax.f32 %v3432, %v2968
        %v3434 = vmax.f32 %v3433, %v2971
        %v3435 = vmax.f32 %v3434, %v2973
        %v3436 = vmax.f32 %v3435, %v2976
        %v3437 = vmax.f32 %v3436, %v2978
        %v3438 = vmax.f32 %v3437, %v2981
        %v3439 = vmax.f32 %v3438, %v2983
        %v3440 = vmax.f32 %v3439, %v2986
        %v3441 = vmax.f32 %v3440, %v2988
        %v3442 = vmax.f32 %v3441, %v2991
        %v3443 = vmax.f32 %v3442, %v2993
        %v3444 = vmax.f32 %v3443, %v2996
        %v3445 = vmax.f32 %v3444, %v2998
        %v3446 = vmax.f32 %v3445, %v3001
        %v3447 = vmax.f32 %v3446, %v3003
        %v3448 = vmax.f32 %v3447, %v3006
        %v3449 = vmax.f32 %v3448, %v3008
        %v3450 = vmax.f32 %v3449, %v3011
        %v3451 = vmax.f32 %v3450, %v3013
        %v3452 = vmax.f32 %v3451, %v3016
        %v3453 = vmax.f32 %v3452, %v3018
        %v3454 = vmax.f32 %v3453, %v3021
        %v3455 = vmax.f32 %v3454, %v3023
        %v3456 = vrot.slane %v3455, 4
        %v3457 = vmax.f32 %v3455, %v3456
        %v3458 = vrot.slane %v3457, 2
        %v3459 = vmax.f32 %v3457, %v3458
        %v3460 = vrot.slane %v3459, 1
        %v3461 = vmax.f32 %v3459, %v3460
        %v3462 = vmax.f32 %v3124, %v3126
        %v3463 = vmax.f32 %v3462, %v3129
        %v3464 = vmax.f32 %v3463, %v3131
        %v3465 = vmax.f32 %v3464, %v3134
        %v3466 = vmax.f32 %v3465, %v3136
        %v3467 = vmax.f32 %v3466, %v3139
        %v3468 = vmax.f32 %v3467, %v3141
        %v3469 = vmax.f32 %v3468, %v3144
        %v3470 = vmax.f32 %v3469, %v3146
        %v3471 = vmax.f32 %v3470, %v3149
        %v3472 = vmax.f32 %v3471, %v3151
        %v3473 = vmax.f32 %v3472, %v3154
        %v3474 = vmax.f32 %v3473, %v3156
        %v3475 = vmax.f32 %v3474, %v3159
        %v3476 = vmax.f32 %v3475, %v3161
        %v3477 = vmax.f32 %v3476, %v3164
        %v3478 = vmax.f32 %v3477, %v3166
        %v3479 = vmax.f32 %v3478, %v3169
        %v3480 = vmax.f32 %v3479, %v3171
        %v3481 = vmax.f32 %v3480, %v3174
        %v3482 = vmax.f32 %v3481, %v3176
        %v3483 = vmax.f32 %v3482, %v3179
        %v3484 = vmax.f32 %v3483, %v3181
        %v3485 = vmax.f32 %v3484, %v3184
        %v3486 = vmax.f32 %v3485, %v3186
        %v3487 = vmax.f32 %v3486, %v3189
        %v3488 = vmax.f32 %v3487, %v3191
        %v3489 = vmax.f32 %v3488, %v3194
        %v3490 = vmax.f32 %v3489, %v3196
        %v3491 = vmax.f32 %v3490, %v3199
        %v3492 = vmax.f32 %v3491, %v3201
        %v3493 = vrot.slane %v3492, 4
        %v3494 = vmax.f32 %v3492, %v3493
        %v3495 = vrot.slane %v3494, 2
        %v3496 = vmax.f32 %v3494, %v3495
        %v3497 = vrot.slane %v3496, 1
        %v3498 = vmax.f32 %v3496, %v3497
        %v3499 = vld [vmem:[%s311] sm:$0xff]
        %v3508 = vrot.slane %v3276, 7
        %v3509 = vrot.slane %v3313, 6
        %v3510 = vrot.slane %v3350, 5
        %v3511 = vrot.slane %v3387, 4
        %v3512 = vrot.slane %v3424, 3
        %v3513 = vrot.slane %v3461, 2
        %v3514 = vrot.slane %v3498, 1
        %vm3515 = vcmask 1040384
        %v3516 = vsel %vm3515, %v3239, %v3508
        %vm3517 = vcmask 1042434
        %v3518 = vsel %vm3517, %v3509, %v3510
        %vm3519 = vcmask 1041408
        %v3520 = vsel %vm3519, %v3516, %v3518
        %vm3521 = vcmask 1044484
        %v3522 = vsel %vm3521, %v3511, %v3512
        %vm3523 = vcmask 1046534
        %v3524 = vsel %vm3523, %v3513, %v3514
        %vm3525 = vcmask 1045508
        %v3526 = vsel %vm3525, %v3522, %v3524
        %v3527 = vsel %vm494, %v3520, %v3526
        %v3529 = vmax.f32 %v3499, %v3527
        %3530 = vst [vmem:[%s311] sm:$0xff] %v3529
        // Predicated region
        $region57: #{tpu_custom_call.1} parent=47 // pred_check
          %p3531 = pneg %p323
        $region58: #{tpu_custom_call.1} parent=47 // pred_check_branch
          %3533 = sbr.rel (%p3531) target = $region60
        $region59: #{tpu_custom_call.1} parent=47 // pred_region
          %v3534 = vld [vmem:[%s311] sm:$0xff]
          %v3535 = vld [vmem:[%s6] sm:$0xff]
          %v3536 = vadd.f32 %v3534, %v3535
          %3537 = vst [vmem:[%s311] sm:$0xff] %v3536
        $region60: #{tpu_custom_call.1} parent=47 // pred_fallthru
          _
        %s3538 = sand.u32 %s196, 1
        %s3539 = scalar_lea.sflag [#allocation4], %s3538
        %s3540 = sand.u32 %s196, 1
        %s3541 = smul.addr %s3540, 8
        %s3542 = scalar_lea.vmem [#allocation5], %s3541
        // Predicated region
        $region61: #{tpu_custom_call.1} parent=47 // pred_check
          %p3543 = pneg %p206
        $region62: #{tpu_custom_call.1} parent=47 // pred_check_branch
          %3545 = sbr.rel (%p3543) target = $region64
        $region63: #{tpu_custom_call.1} parent=47 // pred_region
          %3547 = vsyncadd %s3539, 0
          %s3548 = smul.addr %s26, 8
          %s3549 = scalar_lea.hbm %s7, %s3548
          %s3551 = sshll.u32 %s3542, 4
          %s3552 = int_to_ptr.vmem [resolvable:$true] %s3551
          %s3553 = sshll.u32 %s3549, 4
          %s3554 = int_to_ptr.hbm [resolvable:$true] %s3553
          %3556 = dma.vmem_to_hbm [thread:$0]  %s3552, 128, %s3554, %s3539
        $region64: #{tpu_custom_call.1} parent=47 // pred_fallthru
          _
      $region48: #{tpu_custom_call.1} parent=5 // pred_fallthru
        _
      %p3557 = scmp.le.s32.totalorder 2, %s17
      // Predicated region
      $region65: #{tpu_custom_call.1} parent=5 // pred_check
        %p3558 = pneg %p3557
      $region66: #{tpu_custom_call.1} parent=5 // pred_check_branch
        %3560 = sbr.rel (%p3558) target = $region68
      $region67: #{tpu_custom_call.1} parent=5 // pred_region
        %s3561 = ssub.s32 %s17, 2
        // Predicated region
        $region69: #{tpu_custom_call.1} parent=67 // pred_check
          %p3562 = pneg %p212
        $region70: #{tpu_custom_call.1} parent=67 // pred_check_branch
          %3564 = sbr.rel (%p3562) target = $region72
        $region71: #{tpu_custom_call.1} parent=67 // pred_region
          %s3565 = sand.u32 %s197, 1
          %s3566 = scalar_lea.sflag [#allocation4], %s3565
          %s3567 = sand.u32 %s197, 1
          %s3568 = smul.addr %s3567, 8
          %s3569 = scalar_lea.vmem [#allocation5], %s3568
          %3571 = dma.done %s3566, 128
        $region72: #{tpu_custom_call.1} parent=67 // pred_fallthru
          _
      $region68: #{tpu_custom_call.1} parent=5 // pred_fallthru
        _
    $region6: #{tpu_custom_call.1} parent=1 // loop_footer
      %s21 = sadd.s32 1, %s17
    $region7: #{tpu_custom_call.1} parent=1 // loop_footer_branch
      %16 = sbr.rel target = $region3
    $region8: #{tpu_custom_call.1} parent=1 // loop_exit
      _
    %3572 = vsyncpa [#allocation3], 1
    %s3573 = scalar_lea.sflag [#allocation3], 1
    %3574 = vsyncpa %s3573, 1
    %3575 = vsyncpa [#allocation4], 1
    %s3576 = scalar_lea.sflag [#allocation4], 1
    %3577 = vsyncpa %s3576, 1

</llo_original>
